<compile_context>
chip_gen: v6e
topology: v6e:2x2x1
jax: 0.10.0
libtpu: 0.0.40
codegen_flags: <defaults>
</compile_context>

<pallas_src>
import functools
import math

import jax
import jax.numpy as jnp
import numpy as np
from jax.experimental import pallas as pl
from jax.experimental.pallas import tpu as pltpu

# ---- scaled-down config (same structure as swin_base_patch4_window12_384) ----
IMG = 24            # 384 in the real model
PATCH = 4
IN_CHANS = 3
EMBED_DIM = 16      # 128 in the real model
DEPTHS = (2, 2)     # (2, 2, 18, 2) in the real model
NUM_HEADS = (2, 4)  # (4, 8, 16, 32) in the real model
WINDOW = 3          # 12 in the real model
MLP_RATIO = 4.0
NUM_CLASSES = 18
FINAL_DIM = EMBED_DIM * 2 ** (len(DEPTHS) - 1)
LN_EPS = 1e-5

# TODO(synk): pretrained timm checkpoint loading has no Pallas equivalent;
# parameters are initialized deterministically in-script instead.

# --------------------------- tiling / compiler params ------------------------
_VMEM_LIMIT = 32 * 1024 * 1024        # explicit scoped-VMEM budget (safe on v5e/v6e/v7x)
_TM_BYTE_BUDGET = 2 * 1024 * 1024     # per-block activation bytes; keeps double-buffered
                                      # blocks well inside v7x's 64 MiB VMEM


def _cparams(ndims):
    return pltpu.CompilerParams(
        dimension_semantics=("parallel",) * ndims,
        vmem_limit_bytes=_VMEM_LIMIT)


def _choose_tm(M, row_bytes):
    """Pick a row-tile: multiple of 8, bounded by a per-block byte budget."""
    tm = _TM_BYTE_BUDGET // max(row_bytes, 1)
    tm = max(8, min(1024, (tm // 8) * 8))
    return M if M <= tm else tm


# ------------------------------ in-kernel helpers ----------------------------
def _gelu(x):
    # exact erf-based GELU (matches torch.nn.GELU default)
    return 0.5 * x * (1.0 + jax.lax.erf(x * 0.7071067811865476))


def _ln(x, g, b):
    mean = jnp.mean(x, axis=-1, keepdims=True)
    var = jnp.mean((x - mean) ** 2, axis=-1, keepdims=True)
    return (x - mean) * jax.lax.rsqrt(var + LN_EPS) * g + b


def _matmul(x_f32, w_ref, b_ref):
    # bf16 MXU operands, f32 accumulation
    y = jnp.dot(x_f32.astype(jnp.bfloat16), w_ref[...].astype(jnp.bfloat16),
                preferred_element_type=jnp.float32)
    return y + b_ref[...].astype(jnp.float32)


# ----------------------------- Pallas kernels --------------------------------
def _linear_kernel(x_ref, w_ref, b_ref, o_ref):
    o_ref[...] = _matmul(x_ref[...].astype(jnp.float32), w_ref, b_ref).astype(o_ref.dtype)


def _linear_ln_kernel(x_ref, w_ref, b_ref, g_ref, bln_ref, o_ref):
    y = _matmul(x_ref[...].astype(jnp.float32), w_ref, b_ref)
    o_ref[...] = _ln(y, g_ref[...].astype(jnp.float32),
                     bln_ref[...].astype(jnp.float32)).astype(o_ref.dtype)


def _ln_linear_kernel(x_ref, g_ref, bln_ref, w_ref, b_ref, o_ref):
    xn = _ln(x_ref[...].astype(jnp.float32), g_ref[...].astype(jnp.float32),
             bln_ref[...].astype(jnp.float32))
    o_ref[...] = _matmul(xn, w_ref, b_ref).astype(o_ref.dtype)


def _linear_residual_kernel(x_ref, w_ref, b_ref, res_ref, o_ref):
    y = _matmul(x_ref[...].astype(jnp.float32), w_ref, b_ref)
    o_ref[...] = (res_ref[...].astype(jnp.float32) + y).astype(o_ref.dtype)


def _mlp_kernel(x_ref, g_ref, bln_ref, w1_ref, b1_ref, w2_ref, b2_ref, o_ref):
    # LN2 -> FC1 -> GELU -> FC2 -> +residual, all in one VMEM pass
    x = x_ref[...].astype(jnp.float32)
    h = _matmul(_ln(x, g_ref[...].astype(jnp.float32), bln_ref[...].astype(jnp.float32)),
                w1_ref, b1_ref)
    h = _gelu(h)
    y = _matmul(h, w2_ref, b2_ref)
    o_ref[...] = (x + y).astype(o_ref.dtype)


def _layernorm_kernel(x_ref, g_ref, b_ref, o_ref):
    o_ref[...] = _ln(x_ref[...].astype(jnp.float32), g_ref[...].astype(jnp.float32),
                     b_ref[...].astype(jnp.float32)).astype(o_ref.dtype)


def _window_attn_kernel(qkv_ref, bias_ref, mask_ref, o_ref, *, num_heads, scale):
    # qkv_ref : (WB, N, 3C) packed [q | k | v], head-major channels inside each
    # bias_ref: (heads, N, N) precomputed relative-position bias
    # mask_ref: (WB, N, N) shift mask (zeros when no shift)
    # o_ref   : (WB, N, C) lane-dense output, heads interleaved on channels
    C = o_ref.shape[-1]
    D = C // num_heads
    mask = mask_ref[...].astype(jnp.float32)
    outs = []
    for h in range(num_heads):                          # static unroll over heads
        q = qkv_ref[:, :, h * D:(h + 1) * D].astype(jnp.float32) * scale
        k = qkv_ref[:, :, C + h * D:C + (h + 1) * D]
        v = qkv_ref[:, :, 2 * C + h * D:2 * C + (h + 1) * D]
        # window-batched score matmul (bf16 MXU, f32 accumulate)
        attn = jnp.einsum("wnd,wmd->wnm", q.astype(jnp.bfloat16), k.astype(jnp.bfloat16),
                          preferred_element_type=jnp.float32)
        attn = attn + bias_ref[h][None].astype(jnp.float32) + mask
        attn = attn - jnp.max(attn, axis=-1, keepdims=True)
        p = jnp.exp(attn)
        p = p * pl.reciprocal(jnp.sum(p, axis=-1, keepdims=True), approx=True)
        out_h = jnp.einsum("wnm,wmd->wnd", p.astype(jnp.bfloat16), v.astype(jnp.bfloat16),
                           preferred_element_type=jnp.float32)
        outs.append(out_h)
    o_ref[...] = jnp.concatenate(outs, axis=-1).astype(o_ref.dtype)


# ----------------------------- kernel wrappers --------------------------------
def pallas_linear(x, w, b):
    M, K = x.shape
    N = w.shape[1]
    tm = _choose_tm(M, 4 * (K + N))
    return pl.pallas_call(
        _linear_kernel,
        out_shape=jax.ShapeDtypeStruct((M, N), jnp.float32),
        grid=(pl.cdiv(M, tm),),
        in_specs=[pl.BlockSpec((tm, K), lambda i: (i, 0)),
                  pl.BlockSpec((K, N), lambda i: (0, 0)),
                  pl.BlockSpec((1, N), lambda i: (0, 0))],
        out_specs=pl.BlockSpec((tm, N), lambda i: (i, 0)),
        compiler_params=_cparams(1),
    )(x, w, b.reshape(1, N))


def pallas_linear_ln(x, w, b, g, bln):
    M, K = x.shape
    N = w.shape[1]
    tm = _choose_tm(M, 4 * (K + N))
    return pl.pallas_call(
        _linear_ln_kernel,
        out_shape=jax.ShapeDtypeStruct((M, N), jnp.float32),
        grid=(pl.cdiv(M, tm),),
        in_specs=[pl.BlockSpec((tm, K), lambda i: (i, 0)),
                  pl.BlockSpec((K, N), lambda i: (0, 0)),
                  pl.BlockSpec((1, N), lambda i: (0, 0)),
                  pl.BlockSpec((1, N), lambda i: (0, 0)),
                  pl.BlockSpec((1, N), lambda i: (0, 0))],
        out_specs=pl.BlockSpec((tm, N), lambda i: (i, 0)),
        compiler_params=_cparams(1),
    )(x, w, b.reshape(1, N), g.reshape(1, N), bln.reshape(1, N))


def pallas_ln_linear(x, g, bln, w, b):
    M, K = x.shape
    N = w.shape[1]
    tm = _choose_tm(M, 4 * (K + N))
    return pl.pallas_call(
        _ln_linear_kernel,
        out_shape=jax.ShapeDtypeStruct((M, N), jnp.float32),
        grid=(pl.cdiv(M, tm),),
        in_specs=[pl.BlockSpec((tm, K), lambda i: (i, 0)),
                  pl.BlockSpec((1, K), lambda i: (0, 0)),
                  pl.BlockSpec((1, K), lambda i: (0, 0)),
                  pl.BlockSpec((K, N), lambda i: (0, 0)),
                  pl.BlockSpec((1, N), lambda i: (0, 0))],
        out_specs=pl.BlockSpec((tm, N), lambda i: (i, 0)),
        compiler_params=_cparams(1),
    )(x, g.reshape(1, K), bln.reshape(1, K), w, b.reshape(1, N))


def pallas_linear_residual(x, w, b, res):
    M, K = x.shape
    N = w.shape[1]
    tm = _choose_tm(M, 4 * (K + 2 * N))
    return pl.pallas_call(
        _linear_residual_kernel,
        out_shape=jax.ShapeDtypeStruct((M, N), jnp.float32),
        grid=(pl.cdiv(M, tm),),
        in_specs=[pl.BlockSpec((tm, K), lambda i: (i, 0)),
                  pl.BlockSpec((K, N), lambda i: (0, 0)),
                  pl.BlockSpec((1, N), lambda i: (0, 0)),
                  pl.BlockSpec((tm, N), lambda i: (i, 0))],
        out_specs=pl.BlockSpec((tm, N), lambda i: (i, 0)),
        compiler_params=_cparams(1),
    )(x, w, b.reshape(1, N), res)


def pallas_mlp(x, g, bln, w1, b1, w2, b2):
    M, C = x.shape
    Hd = w1.shape[1]
    tm = _choose_tm(M, 4 * (2 * C + Hd + C))
    return pl.pallas_call(
        _mlp_kernel,
        out_shape=jax.ShapeDtypeStruct((M, C), jnp.float32),
        grid=(pl.cdiv(M, tm),),
        in_specs=[pl.BlockSpec((tm, C), lambda i: (i, 0)),
                  pl.BlockSpec((1, C), lambda i: (0, 0)),
                  pl.BlockSpec((1, C), lambda i: (0, 0)),
                  pl.BlockSpec((C, Hd), lambda i: (0, 0)),
                  pl.BlockSpec((1, Hd), lambda i: (0, 0)),
                  pl.BlockSpec((Hd, C), lambda i: (0, 0)),
                  pl.BlockSpec((1, C), lambda i: (0, 0))],
        out_specs=pl.BlockSpec((tm, C), lambda i: (i, 0)),
        compiler_params=_cparams(1),
    )(x, g.reshape(1, C), bln.reshape(1, C), w1, b1.reshape(1, Hd), w2, b2.reshape(1, C))


def pallas_layernorm(x, g, b):
    M, C = x.shape
    tm = _choose_tm(M, 8 * C)
    return pl.pallas_call(
        _layernorm_kernel,
        out_shape=jax.ShapeDtypeStruct((M, C), jnp.float32),
        grid=(pl.cdiv(M, tm),),
        in_specs=[pl.BlockSpec((tm, C), lambda i: (i, 0)),
                  pl.BlockSpec((1, C), lambda i: (0, 0)),
                  pl.BlockSpec((1, C), lambda i: (0, 0))],
        out_specs=pl.BlockSpec((tm, C), lambda i: (i, 0)),
        compiler_params=_cparams(1),
    )(x, g.reshape(1, C), b.reshape(1, C))


def pallas_window_attention(qkv, rel_bias, mask, scale, num_heads):
    BW, N, C3 = qkv.shape
    C = C3 // 3
    nW = mask.shape[0]
    B = BW // nW
    # batch several windows per grid step; keep alignment with the per-image mask
    WB = nW
    if nW > 16:
        for cand in range(16, 0, -1):
            if nW % cand == 0:
                WB = cand
                break
    ng = nW // WB
    kernel = functools.partial(_window_attn_kernel, num_heads=num_heads, scale=scale)
    return pl.pallas_call(
        kernel,
        out_shape=jax.ShapeDtypeStruct((BW, N, C), jnp.float32),
        grid=(B, ng),
        in_specs=[pl.BlockSpec((WB, N, C3), lambda b, g: (b * ng + g, 0, 0)),
                  pl.BlockSpec((num_heads, N, N), lambda b, g: (0, 0, 0)),
                  pl.BlockSpec((WB, N, N), lambda b, g: (g, 0, 0))],
        out_specs=pl.BlockSpec((WB, N, C), lambda b, g: (b * ng + g, 0, 0)),
        compiler_params=_cparams(2),
    )(qkv, rel_bias, mask)


# ------------------------------- static glue ----------------------------------
def window_partition(x, ws):  # (B, H, W, C) -> (B*nW, ws*ws, C)
    B, H, W, C = x.shape
    x = x.reshape(B, H // ws, ws, W // ws, ws, C)
    return x.transpose(0, 1, 3, 2, 4, 5).reshape(-1, ws * ws, C)


def window_reverse(w, ws, H, W):  # (B*nW, ws*ws, C) -> (B, H, W, C)
    C = w.shape[-1]
    B = w.shape[0] // ((H // ws) * (W // ws))
    x = w.reshape(B, H // ws, W // ws, ws, ws, C)
    return x.transpose(0, 1, 3, 2, 4, 5).reshape(B, H, W, C)


def build_rel_index(ws):
    coords = np.stack(np.meshgrid(np.arange(ws), np.arange(ws), indexing="ij"))
    cf = coords.reshape(2, -1)
    rel = (cf[:, :, None] - cf[:, None, :]).transpose(1, 2, 0).astype(np.int64)
    rel[:, :, 0] += ws - 1
    rel[:, :, 1] += ws - 1
    rel[:, :, 0] *= 2 * ws - 1
    return rel.sum(-1)  # (ws*ws, ws*ws)


def build_attn_mask(H, W, ws, shift):  # (nW, N, N) additive mask
    img_mask = np.zeros((1, H, W, 1), np.float32)
    cnt = 0
    for hs in (slice(0, -ws), slice(-ws, -shift), slice(-shift, None)):
        for wsl in (slice(0, -ws), slice(-ws, -shift), slice(-shift, None)):
            img_mask[:, hs, wsl, :] = cnt
            cnt += 1
    m = img_mask.reshape(1, H // ws, ws, W // ws, ws, 1)
    m = m.transpose(0, 1, 3, 2, 4, 5).reshape(-1, ws * ws)
    diff = m[:, None, :] - m[:, :, None]
    return jnp.asarray(np.where(diff != 0, -100.0, 0.0).astype(np.float32))


# ------------------------------- model pieces ----------------------------------
def patch_embed(x, p):
    B, Cin, H, W = x.shape
    Hp, Wp = H // PATCH, W // PATCH
    xp = x.reshape(B, Cin, Hp, PATCH, Wp, PATCH)
    xp = xp.transpose(0, 2, 4, 1, 3, 5).reshape(B * Hp * Wp, Cin * PATCH * PATCH)
    # conv4x4/4 as matmul, fused with the embedding LayerNorm
    y = pallas_linear_ln(xp, p["proj_w"], p["proj_b"], p["norm_g"], p["norm_b"])
    return y.reshape(B, Hp * Wp, EMBED_DIM), Hp, Wp


def swin_block(x, p, H, W, num_heads, ws, shift, mask):
    B, L, C = x.shape
    head_dim = C // num_heads
    shortcut = x

    # LN1 is per-token, so it commutes with the roll/window permutation:
    # partition raw tokens first (C channels), then run fused LN1+QKV once.
    xf = x.reshape(B, H, W, C)
    if shift > 0:
        # TODO(synk): cyclic shift could be folded into the window gather / DMA
        # index map; kept as an XLA roll (fused with the partition transpose).
        xf = jnp.roll(xf, shift=(-shift, -shift), axis=(1, 2))
    xw = window_partition(xf, ws)                               # (BW, N, C)
    BW, N, _ = xw.shape

    qkv = pallas_ln_linear(xw.reshape(BW * N, C),
                           p["norm1_g"], p["norm1_b"],
                           p["qkv_w"], p["qkv_b"]).reshape(BW, N, 3 * C)

    attn = pallas_window_attention(qkv, p["rel_bias"], mask, head_dim ** -0.5, num_heads)

    xr = window_reverse(attn, ws, H, W)
    if shift > 0:
        xr = jnp.roll(xr, shift=(shift, shift), axis=(1, 2))

    # fused attention-proj + residual add
    x = pallas_linear_residual(xr.reshape(B * L, C), p["proj_w"], p["proj_b"],
                               shortcut.reshape(B * L, C)).reshape(B, L, C)

    # fused LN2 + MLP + residual
    x = pallas_mlp(x.reshape(B * L, C),
                   p["norm2_g"], p["norm2_b"],
                   p["fc1_w"], p["fc1_b"],
                   p["fc2_w"], p["fc2_b"]).reshape(B, L, C)
    return x


def patch_merging(x, stage, H, W):
    B, L, C = x.shape
    x = x.reshape(B, H, W, C)
    x0 = x[:, 0::2, 0::2, :]
    x1 = x[:, 1::2, 0::2, :]
    x2 = x[:, 0::2, 1::2, :]
    x3 = x[:, 1::2, 1::2, :]
    xc = jnp.concatenate([x0, x1, x2, x3], -1).reshape(B * (H // 2) * (W // 2), 4 * C)
    # fused merge-norm + channel reduction (no bias, as in timm)
    y = pallas_ln_linear(xc, stage["down_norm_g"], stage["down_norm_b"],
                         stage["down_red_w"], jnp.zeros((2 * C,), jnp.float32))
    return y.reshape(B, (H // 2) * (W // 2), 2 * C)


def forward(params, x):
    x, H, W = patch_embed(x, params["patch_embed"])
    for si, stage in enumerate(params["stages"]):
        heads = NUM_HEADS[si]
        ws = min(WINDOW, H, W)
        nW = (H // ws) * (W // ws)
        zero_mask = jnp.zeros((nW, ws * ws, ws * ws), jnp.float32)
        for bi, blk in enumerate(stage["blocks"]):
            shift = 0 if (bi % 2 == 0 or min(H, W) <= ws) else ws // 2
            mask = build_attn_mask(H, W, ws, shift) if shift > 0 else zero_mask
            x = swin_block(x, blk, H, W, heads, ws, shift, mask)
        if "down_red_w" in stage:
            x = patch_merging(x, stage, H, W)
            H, W = H // 2, W // 2
    B, L, C = x.shape
    x = pallas_layernorm(x.reshape(B * L, C), params["norm_g"], params["norm_b"])
    x = x.reshape(B, L, C).mean(axis=1)                          # global avg pool
    return pallas_linear(x, params["head_w"], params["head_b"])  # (B, 18)


# ------------------------------- parameters ------------------------------------
def init_params(key):
    keys = iter(jax.random.split(key, 512))
    BF = jnp.bfloat16

    def nrm(shape, std=0.02, dtype=jnp.float32):
        return (std * jax.random.normal(next(keys), shape, jnp.float32)).astype(dtype)

    params = {
        "patch_embed": {
            "proj_w": nrm((IN_CHANS * PATCH * PATCH, EMBED_DIM), dtype=BF),
            "proj_b": jnp.zeros((EMBED_DIM,), jnp.float32),
            "norm_g": jnp.ones((EMBED_DIM,), jnp.float32),
            "norm_b": jnp.zeros((EMBED_DIM,), jnp.float32),
        },
        "stages": [],
    }
    H0 = IMG // PATCH
    for si, (depth, heads) in enumerate(zip(DEPTHS, NUM_HEADS)):
        dim = EMBED_DIM * (2 ** si)
        hidden = int(dim * MLP_RATIO)
        Hs = H0 // (2 ** si)
        ws = min(WINDOW, Hs)
        N = ws * ws
        rel_index = jnp.asarray(build_rel_index(ws).reshape(-1))
        blocks = []
        for _ in range(depth):
            table = nrm(((2 * WINDOW - 1) ** 2, heads))          # learnable table, f32
            # precompute the (heads, N, N) bias once instead of gathering every forward
            rel_bias = table[rel_index].reshape(N, N, heads).transpose(2, 0, 1)
            blocks.append({
                "norm1_g": jnp.ones((dim,), jnp.float32),
                "norm1_b": jnp.zeros((dim,), jnp.float32),
                "qkv_w": nrm((dim, 3 * dim), dtype=BF),
                "qkv_b": jnp.zeros((3 * dim,), jnp.float32),
                "rel_bias": rel_bias,
                "proj_w": nrm((dim, dim), dtype=BF),
                "proj_b": jnp.zeros((dim,), jnp.float32),
                "norm2_g": jnp.ones((dim,), jnp.float32),
                "norm2_b": jnp.zeros((dim,), jnp.float32),
                "fc1_w": nrm((dim, hidden), dtype=BF),
                "fc1_b": jnp.zeros((hidden,), jnp.float32),
                "fc2_w": nrm((hidden, dim), dtype=BF),
                "fc2_b": jnp.zeros((dim,), jnp.float32),
            })
        stage = {"blocks": blocks}
        if si < len(DEPTHS) - 1:
            stage["down_norm_g"] = jnp.ones((4 * dim,), jnp.float32)
            stage["down_norm_b"] = jnp.zeros((4 * dim,), jnp.float32)
            stage["down_red_w"] = nrm((4 * dim, 2 * dim), dtype=BF)
        params["stages"].append(stage)

    params["norm_g"] = jnp.ones((FINAL_DIM,), jnp.float32)
    params["norm_b"] = jnp.zeros((FINAL_DIM,), jnp.float32)
    # head: xavier_uniform weight, uniform(-stdv, stdv) bias (as in the module)
    limit = math.sqrt(6.0 / (FINAL_DIM + NUM_CLASSES))
    params["head_w"] = jax.random.uniform(
        next(keys), (FINAL_DIM, NUM_CLASSES), jnp.float32, -limit, limit).astype(BF)
    stdv = 1.0 / math.sqrt(FINAL_DIM)
    params["head_b"] = jax.random.uniform(
        next(keys), (NUM_CLASSES,), jnp.float32, -stdv, stdv)
    return params


if __name__ == "__main__":
    key = jax.random.PRNGKey(0)
    pkey, xkey = jax.random.split(key)
    params = init_params(pkey)
    x = jax.random.normal(xkey, (2, IN_CHANS, IMG, IMG), jnp.float32)  # NCHW like PyTorch

    fwd = jax.jit(forward)
    out = jax.block_until_ready(fwd(params, x))
    assert out.shape == (2, NUM_CLASSES) and out.dtype == jnp.float32
    print("KERNEL_OK")
</pallas_src>

<mosaic_0001>
module attributes {stable_mosaic.version = 11 : i64} {
  func.func @_linear_ln_kernel(%arg0: i32, %arg1: memref<72x48xf32, #tpu.memory_space<vmem>>, %arg2: memref<48x16xbf16, #tpu.memory_space<vmem>>, %arg3: memref<1x16xf32, #tpu.memory_space<vmem>>, %arg4: memref<1x16xf32, #tpu.memory_space<vmem>>, %arg5: memref<1x16xf32, #tpu.memory_space<vmem>>, %arg6: memref<72x16xf32, #tpu.memory_space<vmem>>) attributes {dimension_semantics = [#tpu.dimension_semantics<parallel>], iteration_bounds = array<i64: 1>, scalar_prefetch = 0 : i64, scratch_operands = 0 : i64, tpu.core_type = #tpu.core_type<tc>, window_params = [{transform_indices = @transform_0, window_bounds = array<i64: 72, 48>}, {pipeline_mode = #tpu.pipeline_mode<synchronous>, transform_indices = @transform_1, window_bounds = array<i64: 48, 16>}, {pipeline_mode = #tpu.pipeline_mode<synchronous>, transform_indices = @transform_2, window_bounds = array<i64: 1, 16>}, {pipeline_mode = #tpu.pipeline_mode<synchronous>, transform_indices = @transform_3, window_bounds = array<i64: 1, 16>}, {pipeline_mode = #tpu.pipeline_mode<synchronous>, transform_indices = @transform_4, window_bounds = array<i64: 1, 16>}, {transform_indices = @transform_5, window_bounds = array<i64: 72, 16>}]} {
    %c0 = arith.constant 0 : index
    %c0_0 = arith.constant 0 : index
    %0 = vector.load %arg1[%c0, %c0_0] : memref<72x48xf32, #tpu.memory_space<vmem>>, vector<72x48xf32>
    %1 = arith.truncf %0 : vector<72x48xf32> to vector<72x48xbf16>
    %c0_1 = arith.constant 0 : index
    %c0_2 = arith.constant 0 : index
    %2 = vector.load %arg2[%c0_1, %c0_2] : memref<48x16xbf16, #tpu.memory_space<vmem>>, vector<48x16xbf16>
    %cst = arith.constant dense<0.000000e+00> : vector<72x16xf32>
    %3 = tpu.matmul %1, %2, %cst {dimension_numbers = #tpu.dot_dimension_numbers<[1], [0], [0], [1], [0, 0, 1, 1], [], []>} : vector<72x48xbf16>, vector<48x16xbf16>, vector<72x16xf32> -> vector<72x16xf32>
    %c0_3 = arith.constant 0 : index
    %c0_4 = arith.constant 0 : index
    %4 = vector.load %arg3[%c0_3, %c0_4] : memref<1x16xf32, #tpu.memory_space<vmem>>, vector<1x16xf32>
    %5 = vector.broadcast %4 : vector<1x16xf32> to vector<72x16xf32>
    %6 = arith.addf %3, %5 : vector<72x16xf32>
    %c0_5 = arith.constant 0 : index
    %c0_6 = arith.constant 0 : index
    %7 = vector.load %arg4[%c0_5, %c0_6] : memref<1x16xf32, #tpu.memory_space<vmem>>, vector<1x16xf32>
    %c0_7 = arith.constant 0 : index
    %c0_8 = arith.constant 0 : index
    %8 = vector.load %arg5[%c0_7, %c0_8] : memref<1x16xf32, #tpu.memory_space<vmem>>, vector<1x16xf32>
    %cst_9 = arith.constant dense<0.000000e+00> : vector<72xf32>
    %9 = vector.multi_reduction <add>, %6, %cst_9 [1] : vector<72x16xf32> to vector<72xf32>
    %10 = vector.shape_cast %9 : vector<72xf32> to vector<72x1xf32>
    %cst_10 = arith.constant 1.600000e+01 : f32
    %11 = vector.broadcast %cst_10 : f32 to vector<72x1xf32>
    %12 = arith.divf %10, %11 : vector<72x1xf32>
    %13 = vector.broadcast %12 : vector<72x1xf32> to vector<72x16xf32>
    %14 = arith.subf %6, %13 : vector<72x16xf32>
    %15 = arith.mulf %14, %14 : vector<72x16xf32>
    %cst_11 = arith.constant dense<0.000000e+00> : vector<72xf32>
    %16 = vector.multi_reduction <add>, %15, %cst_11 [1] : vector<72x16xf32> to vector<72xf32>
    %17 = vector.shape_cast %16 : vector<72xf32> to vector<72x1xf32>
    %cst_12 = arith.constant 1.600000e+01 : f32
    %18 = vector.broadcast %cst_12 : f32 to vector<72x1xf32>
    %19 = arith.divf %17, %18 : vector<72x1xf32>
    %20 = vector.broadcast %12 : vector<72x1xf32> to vector<72x16xf32>
    %21 = arith.subf %6, %20 : vector<72x16xf32>
    %cst_13 = arith.constant 9.99999974E-6 : f32
    %22 = vector.broadcast %cst_13 : f32 to vector<72x1xf32>
    %23 = arith.addf %19, %22 : vector<72x1xf32>
    %24 = math.rsqrt %23 : vector<72x1xf32>
    %25 = vector.broadcast %24 : vector<72x1xf32> to vector<72x16xf32>
    %26 = arith.mulf %21, %25 : vector<72x16xf32>
    %27 = vector.broadcast %7 : vector<1x16xf32> to vector<72x16xf32>
    %28 = arith.mulf %26, %27 : vector<72x16xf32>
    %29 = vector.broadcast %8 : vector<1x16xf32> to vector<72x16xf32>
    %30 = arith.addf %28, %29 : vector<72x16xf32>
    %c0_14 = arith.constant 0 : index
    %c0_15 = arith.constant 0 : index
    %31 = vector.load %arg6[%c0_14, %c0_15] : memref<72x16xf32, #tpu.memory_space<vmem>>, vector<72x16xf32>
    tpu.vector_store %arg6[%c0_14, %c0_15], %30 {strides = array<i32>} : memref<72x16xf32, #tpu.memory_space<vmem>>, vector<72x16xf32>,
    return
  }
  func.func @transform_0(%arg0: i32) -> (i32, i32) {
    %c0_i32 = arith.constant 0 : i32
    %c0_i32_0 = arith.constant 0 : i32
    return %arg0, %c0_i32 : i32, i32
  }
  func.func @transform_1(%arg0: i32) -> (i32, i32) {
    %c0_i32 = arith.constant 0 : i32
    %c0_i32_0 = arith.constant 0 : i32
    %c0_i32_1 = arith.constant 0 : i32
    return %c0_i32, %c0_i32_0 : i32, i32
  }
  func.func @transform_2(%arg0: i32) -> (i32, i32) {
    %c0_i32 = arith.constant 0 : i32
    %c0_i32_0 = arith.constant 0 : i32
    %c0_i32_1 = arith.constant 0 : i32
    return %c0_i32, %c0_i32_0 : i32, i32
  }
  func.func @transform_3(%arg0: i32) -> (i32, i32) {
    %c0_i32 = arith.constant 0 : i32
    %c0_i32_0 = arith.constant 0 : i32
    %c0_i32_1 = arith.constant 0 : i32
    return %c0_i32, %c0_i32_0 : i32, i32
  }
  func.func @transform_4(%arg0: i32) -> (i32, i32) {
    %c0_i32 = arith.constant 0 : i32
    %c0_i32_0 = arith.constant 0 : i32
    %c0_i32_1 = arith.constant 0 : i32
    return %c0_i32, %c0_i32_0 : i32, i32
  }
  func.func @transform_5(%arg0: i32) -> (i32, i32) {
    %c0_i32 = arith.constant 0 : i32
    %c0_i32_0 = arith.constant 0 : i32
    return %arg0, %c0_i32 : i32, i32
  }
}

module attributes {stable_mosaic.version = 11 : i64} {
  func.func @_ln_linear_kernel(%arg0: i32, %arg1: memref<72x16xf32, #tpu.memory_space<vmem>>, %arg2: memref<1x16xf32, #tpu.memory_space<vmem>>, %arg3: memref<1x16xf32, #tpu.memory_space<vmem>>, %arg4: memref<16x48xbf16, #tpu.memory_space<vmem>>, %arg5: memref<1x48xf32, #tpu.memory_space<vmem>>, %arg6: memref<72x48xf32, #tpu.memory_space<vmem>>) attributes {dimension_semantics = [#tpu.dimension_semantics<parallel>], iteration_bounds = array<i64: 1>, scalar_prefetch = 0 : i64, scratch_operands = 0 : i64, tpu.core_type = #tpu.core_type<tc>, window_params = [{transform_indices = @transform_0, window_bounds = array<i64: 72, 16>}, {pipeline_mode = #tpu.pipeline_mode<synchronous>, transform_indices = @transform_1, window_bounds = array<i64: 1, 16>}, {pipeline_mode = #tpu.pipeline_mode<synchronous>, transform_indices = @transform_2, window_bounds = array<i64: 1, 16>}, {pipeline_mode = #tpu.pipeline_mode<synchronous>, transform_indices = @transform_3, window_bounds = array<i64: 16, 48>}, {pipeline_mode = #tpu.pipeline_mode<synchronous>, transform_indices = @transform_4, window_bounds = array<i64: 1, 48>}, {transform_indices = @transform_5, window_bounds = array<i64: 72, 48>}]} {
    %c0 = arith.constant 0 : index
    %c0_0 = arith.constant 0 : index
    %0 = vector.load %arg1[%c0, %c0_0] : memref<72x16xf32, #tpu.memory_space<vmem>>, vector<72x16xf32>
    %c0_1 = arith.constant 0 : index
    %c0_2 = arith.constant 0 : index
    %1 = vector.load %arg2[%c0_1, %c0_2] : memref<1x16xf32, #tpu.memory_space<vmem>>, vector<1x16xf32>
    %c0_3 = arith.constant 0 : index
    %c0_4 = arith.constant 0 : index
    %2 = vector.load %arg3[%c0_3, %c0_4] : memref<1x16xf32, #tpu.memory_space<vmem>>, vector<1x16xf32>
    %cst = arith.constant dense<0.000000e+00> : vector<72xf32>
    %3 = vector.multi_reduction <add>, %0, %cst [1] : vector<72x16xf32> to vector<72xf32>
    %4 = vector.shape_cast %3 : vector<72xf32> to vector<72x1xf32>
    %cst_5 = arith.constant 1.600000e+01 : f32
    %5 = vector.broadcast %cst_5 : f32 to vector<72x1xf32>
    %6 = arith.divf %4, %5 : vector<72x1xf32>
    %7 = vector.broadcast %6 : vector<72x1xf32> to vector<72x16xf32>
    %8 = arith.subf %0, %7 : vector<72x16xf32>
    %9 = arith.mulf %8, %8 : vector<72x16xf32>
    %cst_6 = arith.constant dense<0.000000e+00> : vector<72xf32>
    %10 = vector.multi_reduction <add>, %9, %cst_6 [1] : vector<72x16xf32> to vector<72xf32>
    %11 = vector.shape_cast %10 : vector<72xf32> to vector<72x1xf32>
    %cst_7 = arith.constant 1.600000e+01 : f32
    %12 = vector.broadcast %cst_7 : f32 to vector<72x1xf32>
    %13 = arith.divf %11, %12 : vector<72x1xf32>
    %14 = vector.broadcast %6 : vector<72x1xf32> to vector<72x16xf32>
    %15 = arith.subf %0, %14 : vector<72x16xf32>
    %cst_8 = arith.constant 9.99999974E-6 : f32
    %16 = vector.broadcast %cst_8 : f32 to vector<72x1xf32>
    %17 = arith.addf %13, %16 : vector<72x1xf32>
    %18 = math.rsqrt %17 : vector<72x1xf32>
    %19 = vector.broadcast %18 : vector<72x1xf32> to vector<72x16xf32>
    %20 = arith.mulf %15, %19 : vector<72x16xf32>
    %21 = vector.broadcast %1 : vector<1x16xf32> to vector<72x16xf32>
    %22 = arith.mulf %20, %21 : vector<72x16xf32>
    %23 = vector.broadcast %2 : vector<1x16xf32> to vector<72x16xf32>
    %24 = arith.addf %22, %23 : vector<72x16xf32>
    %25 = arith.truncf %24 : vector<72x16xf32> to vector<72x16xbf16>
    %c0_9 = arith.constant 0 : index
    %c0_10 = arith.constant 0 : index
    %26 = vector.load %arg4[%c0_9, %c0_10] : memref<16x48xbf16, #tpu.memory_space<vmem>>, vector<16x48xbf16>
    %cst_11 = arith.constant dense<0.000000e+00> : vector<72x48xf32>
    %27 = tpu.matmul %25, %26, %cst_11 {dimension_numbers = #tpu.dot_dimension_numbers<[1], [0], [0], [1], [0, 0, 1, 1], [], []>} : vector<72x16xbf16>, vector<16x48xbf16>, vector<72x48xf32> -> vector<72x48xf32>
    %c0_12 = arith.constant 0 : index
    %c0_13 = arith.constant 0 : index
    %28 = vector.load %arg5[%c0_12, %c0_13] : memref<1x48xf32, #tpu.memory_space<vmem>>, vector<1x48xf32>
    %29 = vector.broadcast %28 : vector<1x48xf32> to vector<72x48xf32>
    %30 = arith.addf %27, %29 : vector<72x48xf32>
    %c0_14 = arith.constant 0 : index
    %c0_15 = arith.constant 0 : index
    %31 = vector.load %arg6[%c0_14, %c0_15] : memref<72x48xf32, #tpu.memory_space<vmem>>, vector<72x48xf32>
    tpu.vector_store %arg6[%c0_14, %c0_15], %30 {strides = array<i32>} : memref<72x48xf32, #tpu.memory_space<vmem>>, vector<72x48xf32>,
    return
  }
  func.func @transform_0(%arg0: i32) -> (i32, i32) {
    %c0_i32 = arith.constant 0 : i32
    %c0_i32_0 = arith.constant 0 : i32
    return %arg0, %c0_i32 : i32, i32
  }
  func.func @transform_1(%arg0: i32) -> (i32, i32) {
    %c0_i32 = arith.constant 0 : i32
    %c0_i32_0 = arith.constant 0 : i32
    %c0_i32_1 = arith.constant 0 : i32
    return %c0_i32, %c0_i32_0 : i32, i32
  }
  func.func @transform_2(%arg0: i32) -> (i32, i32) {
    %c0_i32 = arith.constant 0 : i32
    %c0_i32_0 = arith.constant 0 : i32
    %c0_i32_1 = arith.constant 0 : i32
    return %c0_i32, %c0_i32_0 : i32, i32
  }
  func.func @transform_3(%arg0: i32) -> (i32, i32) {
    %c0_i32 = arith.constant 0 : i32
    %c0_i32_0 = arith.constant 0 : i32
    %c0_i32_1 = arith.constant 0 : i32
    return %c0_i32, %c0_i32_0 : i32, i32
  }
  func.func @transform_4(%arg0: i32) -> (i32, i32) {
    %c0_i32 = arith.constant 0 : i32
    %c0_i32_0 = arith.constant 0 : i32
    %c0_i32_1 = arith.constant 0 : i32
    return %c0_i32, %c0_i32_0 : i32, i32
  }
  func.func @transform_5(%arg0: i32) -> (i32, i32) {
    %c0_i32 = arith.constant 0 : i32
    %c0_i32_0 = arith.constant 0 : i32
    return %arg0, %c0_i32 : i32, i32
  }
}

module attributes {stable_mosaic.version = 11 : i64} {
  func.func @_window_attn_kernel(%arg0: i32, %arg1: i32, %arg2: memref<4x9x48xf32, #tpu.memory_space<vmem>>, %arg3: memref<2x9x9xf32, #tpu.memory_space<vmem>>, %arg4: memref<4x9x9xf32, #tpu.memory_space<vmem>>, %arg5: memref<4x9x16xf32, #tpu.memory_space<vmem>>) attributes {dimension_semantics = [#tpu.dimension_semantics<parallel>, #tpu.dimension_semantics<parallel>], iteration_bounds = array<i64: 2, 1>, scalar_prefetch = 0 : i64, scratch_operands = 0 : i64, tpu.core_type = #tpu.core_type<tc>, window_params = [{transform_indices = @transform_0, window_bounds = array<i64: 4, 9, 48>}, {pipeline_mode = #tpu.pipeline_mode<synchronous>, transform_indices = @transform_1, window_bounds = array<i64: 2, 9, 9>}, {transform_indices = @transform_2, window_bounds = array<i64: 4, 9, 9>}, {transform_indices = @transform_3, window_bounds = array<i64: 4, 9, 16>}]} {
    %c0 = arith.constant 0 : index
    %c0_0 = arith.constant 0 : index
    %c0_1 = arith.constant 0 : index
    %0 = vector.load %arg4[%c0, %c0_0, %c0_1] : memref<4x9x9xf32, #tpu.memory_space<vmem>>, vector<4x9x9xf32>
    %c0_2 = arith.constant 0 : index
    %c0_3 = arith.constant 0 : index
    %c0_4 = arith.constant 0 : index
    %1 = vector.load %arg2[%c0_2, %c0_3, %c0_4] : memref<4x9x48xf32, #tpu.memory_space<vmem>>, vector<4x9x8xf32>
    %cst = arith.constant 0.353553385 : f32
    %2 = vector.broadcast %cst : f32 to vector<4x9x8xf32>
    %3 = arith.mulf %1, %2 : vector<4x9x8xf32>
    %c0_5 = arith.constant 0 : index
    %c0_6 = arith.constant 0 : index
    %c16 = arith.constant 16 : index
    %4 = vector.load %arg2[%c0_5, %c0_6, %c16] : memref<4x9x48xf32, #tpu.memory_space<vmem>>, vector<4x9x8xf32>
    %c0_7 = arith.constant 0 : index
    %c0_8 = arith.constant 0 : index
    %c32 = arith.constant 32 : index
    %5 = vector.load %arg2[%c0_7, %c0_8, %c32] : memref<4x9x48xf32, #tpu.memory_space<vmem>>, vector<4x9x8xf32>
    %6 = arith.truncf %3 : vector<4x9x8xf32> to vector<4x9x8xbf16>
    %7 = arith.truncf %4 : vector<4x9x8xf32> to vector<4x9x8xbf16>
    "tpu.trace_start"() <{level = 10 : i32, message = "wnd,wmd->wnm"}> : () -> ()
    %cst_9 = arith.constant dense<0.000000e+00> : vector<4x9x9xf32>
    %8 = tpu.matmul %6, %7, %cst_9 {dimension_numbers = #tpu.dot_dimension_numbers<[2], [2], [1], [1], [0, 0, 0, 1, 1, 1], [0], [0]>} : vector<4x9x8xbf16>, vector<4x9x8xbf16>, vector<4x9x9xf32> -> vector<4x9x9xf32>
    "tpu.trace_stop"() : () -> ()
    %c0_10 = arith.constant 0 : index
    %c0_11 = arith.constant 0 : index
    %c0_12 = arith.constant 0 : index
    %9 = vector.load %arg3[%c0_10, %c0_11, %c0_12] : memref<2x9x9xf32, #tpu.memory_space<vmem>>, vector<1x9x9xf32>
    %10 = vector.shape_cast %9 : vector<1x9x9xf32> to vector<9x9xf32>
    %11 = vector.shape_cast %10 : vector<9x9xf32> to vector<1x9x9xf32>
    %12 = vector.broadcast %11 : vector<1x9x9xf32> to vector<4x9x9xf32>
    %13 = arith.addf %8, %12 : vector<4x9x9xf32>
    %14 = arith.addf %13, %0 : vector<4x9x9xf32>
    %cst_13 = arith.constant dense<0xFF800000> : vector<4x9xf32>
    %15 = vector.multi_reduction <maximumf>, %14, %cst_13 [2] : vector<4x9x9xf32> to vector<4x9xf32>
    %16 = vector.shape_cast %15 : vector<4x9xf32> to vector<4x9x1xf32>
    %17 = vector.broadcast %16 : vector<4x9x1xf32> to vector<4x9x9xf32>
    %18 = arith.subf %14, %17 : vector<4x9x9xf32>
    %19 = math.exp %18 : vector<4x9x9xf32>
    %cst_14 = arith.constant dense<0.000000e+00> : vector<4x9xf32>
    %20 = vector.multi_reduction <add>, %19, %cst_14 [2] : vector<4x9x9xf32> to vector<4x9xf32>
    %21 = vector.shape_cast %20 : vector<4x9xf32> to vector<4x9x1xf32>
    %22 = tpu.reciprocal %21 {approx = true} : vector<4x9x1xf32> -> vector<4x9x1xf32>
    %23 = vector.broadcast %22 : vector<4x9x1xf32> to vector<4x9x9xf32>
    %24 = arith.mulf %19, %23 : vector<4x9x9xf32>
    %25 = arith.truncf %24 : vector<4x9x9xf32> to vector<4x9x9xbf16>
    %26 = arith.truncf %5 : vector<4x9x8xf32> to vector<4x9x8xbf16>
    "tpu.trace_start"() <{level = 10 : i32, message = "wnm,wmd->wnd"}> : () -> ()
    %cst_15 = arith.constant dense<0.000000e+00> : vector<4x9x8xf32>
    %27 = tpu.matmul %25, %26, %cst_15 {dimension_numbers = #tpu.dot_dimension_numbers<[2], [1], [1], [2], [0, 0, 0, 1, 1, 2], [0], [0]>} : vector<4x9x9xbf16>, vector<4x9x8xbf16>, vector<4x9x8xf32> -> vector<4x9x8xf32>
    "tpu.trace_stop"() : () -> ()
    %c0_16 = arith.constant 0 : index
    %c0_17 = arith.constant 0 : index
    %c8 = arith.constant 8 : index
    %28 = vector.load %arg2[%c0_16, %c0_17, %c8] : memref<4x9x48xf32, #tpu.memory_space<vmem>>, vector<4x9x8xf32>
    %cst_18 = arith.constant 0.353553385 : f32
    %29 = vector.broadcast %cst_18 : f32 to vector<4x9x8xf32>
    %30 = arith.mulf %28, %29 : vector<4x9x8xf32>
    %c0_19 = arith.constant 0 : index
    %c0_20 = arith.constant 0 : index
    %c24 = arith.constant 24 : index
    %31 = vector.load %arg2[%c0_19, %c0_20, %c24] : memref<4x9x48xf32, #tpu.memory_space<vmem>>, vector<4x9x8xf32>
    %c0_21 = arith.constant 0 : index
    %c0_22 = arith.constant 0 : index
    %c40 = arith.constant 40 : index
    %32 = vector.load %arg2[%c0_21, %c0_22, %c40] : memref<4x9x48xf32, #tpu.memory_space<vmem>>, vector<4x9x8xf32>
    %33 = arith.truncf %30 : vector<4x9x8xf32> to vector<4x9x8xbf16>
    %34 = arith.truncf %31 : vector<4x9x8xf32> to vector<4x9x8xbf16>
    "tpu.trace_start"() <{level = 10 : i32, message = "wnd,wmd->wnm"}> : () -> ()
    %cst_23 = arith.constant dense<0.000000e+00> : vector<4x9x9xf32>
    %35 = tpu.matmul %33, %34, %cst_23 {dimension_numbers = #tpu.dot_dimension_numbers<[2], [2], [1], [1], [0, 0, 0, 1, 1, 1], [0], [0]>} : vector<4x9x8xbf16>, vector<4x9x8xbf16>, vector<4x9x9xf32> -> vector<4x9x9xf32>
    "tpu.trace_stop"() : () -> ()
    %c1 = arith.constant 1 : index
    %c0_24 = arith.constant 0 : index
    %c0_25 = arith.constant 0 : index
    %36 = vector.load %arg3[%c1, %c0_24, %c0_25] : memref<2x9x9xf32, #tpu.memory_space<vmem>>, vector<1x9x9xf32>
    %37 = vector.shape_cast %36 : vector<1x9x9xf32> to vector<9x9xf32>
    %38 = vector.shape_cast %37 : vector<9x9xf32> to vector<1x9x9xf32>
    %39 = vector.broadcast %38 : vector<1x9x9xf32> to vector<4x9x9xf32>
    %40 = arith.addf %35, %39 : vector<4x9x9xf32>
    %41 = arith.addf %40, %0 : vector<4x9x9xf32>
    %cst_26 = arith.constant dense<0xFF800000> : vector<4x9xf32>
    %42 = vector.multi_reduction <maximumf>, %41, %cst_26 [2] : vector<4x9x9xf32> to vector<4x9xf32>
    %43 = vector.shape_cast %42 : vector<4x9xf32> to vector<4x9x1xf32>
    %44 = vector.broadcast %43 : vector<4x9x1xf32> to vector<4x9x9xf32>
    %45 = arith.subf %41, %44 : vector<4x9x9xf32>
    %46 = math.exp %45 : vector<4x9x9xf32>
    %cst_27 = arith.constant dense<0.000000e+00> : vector<4x9xf32>
    %47 = vector.multi_reduction <add>, %46, %cst_27 [2] : vector<4x9x9xf32> to vector<4x9xf32>
    %48 = vector.shape_cast %47 : vector<4x9xf32> to vector<4x9x1xf32>
    %49 = tpu.reciprocal %48 {approx = true} : vector<4x9x1xf32> -> vector<4x9x1xf32>
    %50 = vector.broadcast %49 : vector<4x9x1xf32> to vector<4x9x9xf32>
    %51 = arith.mulf %46, %50 : vector<4x9x9xf32>
    %52 = arith.truncf %51 : vector<4x9x9xf32> to vector<4x9x9xbf16>
    %53 = arith.truncf %32 : vector<4x9x8xf32> to vector<4x9x8xbf16>
    "tpu.trace_start"() <{level = 10 : i32, message = "wnm,wmd->wnd"}> : () -> ()
    %cst_28 = arith.constant dense<0.000000e+00> : vector<4x9x8xf32>
    %54 = tpu.matmul %52, %53, %cst_28 {dimension_numbers = #tpu.dot_dimension_numbers<[2], [1], [1], [2], [0, 0, 0, 1, 1, 2], [0], [0]>} : vector<4x9x9xbf16>, vector<4x9x8xbf16>, vector<4x9x8xf32> -> vector<4x9x8xf32>
    "tpu.trace_stop"() : () -> ()
    %55 = tpu.concatenate %27, %54 in 2 : vector<4x9x8xf32>, vector<4x9x8xf32> -> vector<4x9x16xf32>
    %c0_29 = arith.constant 0 : index
    %c0_30 = arith.constant 0 : index
    %c0_31 = arith.constant 0 : index
    %56 = vector.load %arg5[%c0_29, %c0_30, %c0_31] : memref<4x9x16xf32, #tpu.memory_space<vmem>>, vector<4x9x16xf32>
    tpu.vector_store %arg5[%c0_29, %c0_30, %c0_31], %55 {strides = array<i32>} : memref<4x9x16xf32, #tpu.memory_space<vmem>>, vector<4x9x16xf32>,
    return
  }
  func.func @transform_0(%arg0: i32, %arg1: i32) -> (i32, i32, i32) {
    %c1_i32 = arith.constant 1 : i32
    %0 = arith.muli %arg0, %c1_i32 : i32
    %1 = arith.addi %0, %arg1 : i32
    %c0_i32 = arith.constant 0 : i32
    %c0_i32_0 = arith.constant 0 : i32
    %c0_i32_1 = arith.constant 0 : i32
    return %1, %c0_i32, %c0_i32_0 : i32, i32, i32
  }
  func.func @transform_1(%arg0: i32, %arg1: i32) -> (i32, i32, i32) {
    %c0_i32 = arith.constant 0 : i32
    %c0_i32_0 = arith.constant 0 : i32
    %c0_i32_1 = arith.constant 0 : i32
    %c0_i32_2 = arith.constant 0 : i32
    return %c0_i32, %c0_i32_0, %c0_i32_1 : i32, i32, i32
  }
  func.func @transform_2(%arg0: i32, %arg1: i32) -> (i32, i32, i32) {
    %c0_i32 = arith.constant 0 : i32
    %c0_i32_0 = arith.constant 0 : i32
    %c0_i32_1 = arith.constant 0 : i32
    return %arg1, %c0_i32, %c0_i32_0 : i32, i32, i32
  }
  func.func @transform_3(%arg0: i32, %arg1: i32) -> (i32, i32, i32) {
    %c1_i32 = arith.constant 1 : i32
    %0 = arith.muli %arg0, %c1_i32 : i32
    %1 = arith.addi %0, %arg1 : i32
    %c0_i32 = arith.constant 0 : i32
    %c0_i32_0 = arith.constant 0 : i32
    %c0_i32_1 = arith.constant 0 : i32
    return %1, %c0_i32, %c0_i32_0 : i32, i32, i32
  }
}

module attributes {stable_mosaic.version = 11 : i64} {
  func.func @_linear_residual_kernel(%arg0: i32, %arg1: memref<72x16xf32, #tpu.memory_space<vmem>>, %arg2: memref<16x16xbf16, #tpu.memory_space<vmem>>, %arg3: memref<1x16xf32, #tpu.memory_space<vmem>>, %arg4: memref<72x16xf32, #tpu.memory_space<vmem>>, %arg5: memref<72x16xf32, #tpu.memory_space<vmem>>) attributes {dimension_semantics = [#tpu.dimension_semantics<parallel>], iteration_bounds = array<i64: 1>, scalar_prefetch = 0 : i64, scratch_operands = 0 : i64, tpu.core_type = #tpu.core_type<tc>, window_params = [{transform_indices = @transform_0, window_bounds = array<i64: 72, 16>}, {pipeline_mode = #tpu.pipeline_mode<synchronous>, transform_indices = @transform_1, window_bounds = array<i64: 16, 16>}, {pipeline_mode = #tpu.pipeline_mode<synchronous>, transform_indices = @transform_2, window_bounds = array<i64: 1, 16>}, {transform_indices = @transform_3, window_bounds = array<i64: 72, 16>}, {transform_indices = @transform_4, window_bounds = array<i64: 72, 16>}]} {
    %c0 = arith.constant 0 : index
    %c0_0 = arith.constant 0 : index
    %0 = vector.load %arg1[%c0, %c0_0] : memref<72x16xf32, #tpu.memory_space<vmem>>, vector<72x16xf32>
    %1 = arith.truncf %0 : vector<72x16xf32> to vector<72x16xbf16>
    %c0_1 = arith.constant 0 : index
    %c0_2 = arith.constant 0 : index
    %2 = vector.load %arg2[%c0_1, %c0_2] : memref<16x16xbf16, #tpu.memory_space<vmem>>, vector<16x16xbf16>
    %cst = arith.constant dense<0.000000e+00> : vector<72x16xf32>
    %3 = tpu.matmul %1, %2, %cst {dimension_numbers = #tpu.dot_dimension_numbers<[1], [0], [0], [1], [0, 0, 1, 1], [], []>} : vector<72x16xbf16>, vector<16x16xbf16>, vector<72x16xf32> -> vector<72x16xf32>
    %c0_3 = arith.constant 0 : index
    %c0_4 = arith.constant 0 : index
    %4 = vector.load %arg3[%c0_3, %c0_4] : memref<1x16xf32, #tpu.memory_space<vmem>>, vector<1x16xf32>
    %5 = vector.broadcast %4 : vector<1x16xf32> to vector<72x16xf32>
    %6 = arith.addf %3, %5 : vector<72x16xf32>
    %c0_5 = arith.constant 0 : index
    %c0_6 = arith.constant 0 : index
    %7 = vector.load %arg4[%c0_5, %c0_6] : memref<72x16xf32, #tpu.memory_space<vmem>>, vector<72x16xf32>
    %8 = arith.addf %7, %6 : vector<72x16xf32>
    %c0_7 = arith.constant 0 : index
    %c0_8 = arith.constant 0 : index
    %9 = vector.load %arg5[%c0_7, %c0_8] : memref<72x16xf32, #tpu.memory_space<vmem>>, vector<72x16xf32>
    tpu.vector_store %arg5[%c0_7, %c0_8], %8 {strides = array<i32>} : memref<72x16xf32, #tpu.memory_space<vmem>>, vector<72x16xf32>,
    return
  }
  func.func @transform_0(%arg0: i32) -> (i32, i32) {
    %c0_i32 = arith.constant 0 : i32
    %c0_i32_0 = arith.constant 0 : i32
    return %arg0, %c0_i32 : i32, i32
  }
  func.func @transform_1(%arg0: i32) -> (i32, i32) {
    %c0_i32 = arith.constant 0 : i32
    %c0_i32_0 = arith.constant 0 : i32
    %c0_i32_1 = arith.constant 0 : i32
    return %c0_i32, %c0_i32_0 : i32, i32
  }
  func.func @transform_2(%arg0: i32) -> (i32, i32) {
    %c0_i32 = arith.constant 0 : i32
    %c0_i32_0 = arith.constant 0 : i32
    %c0_i32_1 = arith.constant 0 : i32
    return %c0_i32, %c0_i32_0 : i32, i32
  }
  func.func @transform_3(%arg0: i32) -> (i32, i32) {
    %c0_i32 = arith.constant 0 : i32
    %c0_i32_0 = arith.constant 0 : i32
    return %arg0, %c0_i32 : i32, i32
  }
  func.func @transform_4(%arg0: i32) -> (i32, i32) {
    %c0_i32 = arith.constant 0 : i32
    %c0_i32_0 = arith.constant 0 : i32
    return %arg0, %c0_i32 : i32, i32
  }
}

module attributes {stable_mosaic.version = 11 : i64} {
  func.func @_mlp_kernel(%arg0: i32, %arg1: memref<72x16xf32, #tpu.memory_space<vmem>>, %arg2: memref<1x16xf32, #tpu.memory_space<vmem>>, %arg3: memref<1x16xf32, #tpu.memory_space<vmem>>, %arg4: memref<16x64xbf16, #tpu.memory_space<vmem>>, %arg5: memref<1x64xf32, #tpu.memory_space<vmem>>, %arg6: memref<64x16xbf16, #tpu.memory_space<vmem>>, %arg7: memref<1x16xf32, #tpu.memory_space<vmem>>, %arg8: memref<72x16xf32, #tpu.memory_space<vmem>>) attributes {dimension_semantics = [#tpu.dimension_semantics<parallel>], iteration_bounds = array<i64: 1>, scalar_prefetch = 0 : i64, scratch_operands = 0 : i64, tpu.core_type = #tpu.core_type<tc>, window_params = [{transform_indices = @transform_0, window_bounds = array<i64: 72, 16>}, {pipeline_mode = #tpu.pipeline_mode<synchronous>, transform_indices = @transform_1, window_bounds = array<i64: 1, 16>}, {pipeline_mode = #tpu.pipeline_mode<synchronous>, transform_indices = @transform_2, window_bounds = array<i64: 1, 16>}, {pipeline_mode = #tpu.pipeline_mode<synchronous>, transform_indices = @transform_3, window_bounds = array<i64: 16, 64>}, {pipeline_mode = #tpu.pipeline_mode<synchronous>, transform_indices = @transform_4, window_bounds = array<i64: 1, 64>}, {pipeline_mode = #tpu.pipeline_mode<synchronous>, transform_indices = @transform_5, window_bounds = array<i64: 64, 16>}, {pipeline_mode = #tpu.pipeline_mode<synchronous>, transform_indices = @transform_6, window_bounds = array<i64: 1, 16>}, {transform_indices = @transform_7, window_bounds = array<i64: 72, 16>}]} {
    %c0 = arith.constant 0 : index
    %c0_0 = arith.constant 0 : index
    %0 = vector.load %arg1[%c0, %c0_0] : memref<72x16xf32, #tpu.memory_space<vmem>>, vector<72x16xf32>
    %c0_1 = arith.constant 0 : index
    %c0_2 = arith.constant 0 : index
    %1 = vector.load %arg2[%c0_1, %c0_2] : memref<1x16xf32, #tpu.memory_space<vmem>>, vector<1x16xf32>
    %c0_3 = arith.constant 0 : index
    %c0_4 = arith.constant 0 : index
    %2 = vector.load %arg3[%c0_3, %c0_4] : memref<1x16xf32, #tpu.memory_space<vmem>>, vector<1x16xf32>
    %cst = arith.constant dense<0.000000e+00> : vector<72xf32>
    %3 = vector.multi_reduction <add>, %0, %cst [1] : vector<72x16xf32> to vector<72xf32>
    %4 = vector.shape_cast %3 : vector<72xf32> to vector<72x1xf32>
    %cst_5 = arith.constant 1.600000e+01 : f32
    %5 = vector.broadcast %cst_5 : f32 to vector<72x1xf32>
    %6 = arith.divf %4, %5 : vector<72x1xf32>
    %7 = vector.broadcast %6 : vector<72x1xf32> to vector<72x16xf32>
    %8 = arith.subf %0, %7 : vector<72x16xf32>
    %9 = arith.mulf %8, %8 : vector<72x16xf32>
    %cst_6 = arith.constant dense<0.000000e+00> : vector<72xf32>
    %10 = vector.multi_reduction <add>, %9, %cst_6 [1] : vector<72x16xf32> to vector<72xf32>
    %11 = vector.shape_cast %10 : vector<72xf32> to vector<72x1xf32>
    %cst_7 = arith.constant 1.600000e+01 : f32
    %12 = vector.broadcast %cst_7 : f32 to vector<72x1xf32>
    %13 = arith.divf %11, %12 : vector<72x1xf32>
    %14 = vector.broadcast %6 : vector<72x1xf32> to vector<72x16xf32>
    %15 = arith.subf %0, %14 : vector<72x16xf32>
    %cst_8 = arith.constant 9.99999974E-6 : f32
    %16 = vector.broadcast %cst_8 : f32 to vector<72x1xf32>
    %17 = arith.addf %13, %16 : vector<72x1xf32>
    %18 = math.rsqrt %17 : vector<72x1xf32>
    %19 = vector.broadcast %18 : vector<72x1xf32> to vector<72x16xf32>
    %20 = arith.mulf %15, %19 : vector<72x16xf32>
    %21 = vector.broadcast %1 : vector<1x16xf32> to vector<72x16xf32>
    %22 = arith.mulf %20, %21 : vector<72x16xf32>
    %23 = vector.broadcast %2 : vector<1x16xf32> to vector<72x16xf32>
    %24 = arith.addf %22, %23 : vector<72x16xf32>
    %25 = arith.truncf %24 : vector<72x16xf32> to vector<72x16xbf16>
    %c0_9 = arith.constant 0 : index
    %c0_10 = arith.constant 0 : index
    %26 = vector.load %arg4[%c0_9, %c0_10] : memref<16x64xbf16, #tpu.memory_space<vmem>>, vector<16x64xbf16>
    %cst_11 = arith.constant dense<0.000000e+00> : vector<72x64xf32>
    %27 = tpu.matmul %25, %26, %cst_11 {dimension_numbers = #tpu.dot_dimension_numbers<[1], [0], [0], [1], [0, 0, 1, 1], [], []>} : vector<72x16xbf16>, vector<16x64xbf16>, vector<72x64xf32> -> vector<72x64xf32>
    %c0_12 = arith.constant 0 : index
    %c0_13 = arith.constant 0 : index
    %28 = vector.load %arg5[%c0_12, %c0_13] : memref<1x64xf32, #tpu.memory_space<vmem>>, vector<1x64xf32>
    %29 = vector.broadcast %28 : vector<1x64xf32> to vector<72x64xf32>
    %30 = arith.addf %27, %29 : vector<72x64xf32>
    %cst_14 = arith.constant 5.000000e-01 : f32
    %31 = vector.broadcast %cst_14 : f32 to vector<72x64xf32>
    %32 = arith.mulf %31, %30 : vector<72x64xf32>
    %cst_15 = arith.constant 0.707106769 : f32
    %33 = vector.broadcast %cst_15 : f32 to vector<72x64xf32>
    %34 = arith.mulf %30, %33 : vector<72x64xf32>
    %35 = math.erf %34 : vector<72x64xf32>
    %cst_16 = arith.constant 1.000000e+00 : f32
    %36 = vector.broadcast %cst_16 : f32 to vector<72x64xf32>
    %37 = arith.addf %36, %35 : vector<72x64xf32>
    %38 = arith.mulf %32, %37 : vector<72x64xf32>
    %39 = arith.truncf %38 : vector<72x64xf32> to vector<72x64xbf16>
    %c0_17 = arith.constant 0 : index
    %c0_18 = arith.constant 0 : index
    %40 = vector.load %arg6[%c0_17, %c0_18] : memref<64x16xbf16, #tpu.memory_space<vmem>>, vector<64x16xbf16>
    %cst_19 = arith.constant dense<0.000000e+00> : vector<72x16xf32>
    %41 = tpu.matmul %39, %40, %cst_19 {dimension_numbers = #tpu.dot_dimension_numbers<[1], [0], [0], [1], [0, 0, 1, 1], [], []>} : vector<72x64xbf16>, vector<64x16xbf16>, vector<72x16xf32> -> vector<72x16xf32>
    %c0_20 = arith.constant 0 : index
    %c0_21 = arith.constant 0 : index
    %42 = vector.load %arg7[%c0_20, %c0_21] : memref<1x16xf32, #tpu.memory_space<vmem>>, vector<1x16xf32>
    %43 = vector.broadcast %42 : vector<1x16xf32> to vector<72x16xf32>
    %44 = arith.addf %41, %43 : vector<72x16xf32>
    %45 = arith.addf %0, %44 : vector<72x16xf32>
    %c0_22 = arith.constant 0 : index
    %c0_23 = arith.constant 0 : index
    %46 = vector.load %arg8[%c0_22, %c0_23] : memref<72x16xf32, #tpu.memory_space<vmem>>, vector<72x16xf32>
    tpu.vector_store %arg8[%c0_22, %c0_23], %45 {strides = array<i32>} : memref<72x16xf32, #tpu.memory_space<vmem>>, vector<72x16xf32>,
    return
  }
  func.func @transform_0(%arg0: i32) -> (i32, i32) {
    %c0_i32 = arith.constant 0 : i32
    %c0_i32_0 = arith.constant 0 : i32
    return %arg0, %c0_i32 : i32, i32
  }
  func.func @transform_1(%arg0: i32) -> (i32, i32) {
    %c0_i32 = arith.constant 0 : i32
    %c0_i32_0 = arith.constant 0 : i32
    %c0_i32_1 = arith.constant 0 : i32
    return %c0_i32, %c0_i32_0 : i32, i32
  }
  func.func @transform_2(%arg0: i32) -> (i32, i32) {
    %c0_i32 = arith.constant 0 : i32
    %c0_i32_0 = arith.constant 0 : i32
    %c0_i32_1 = arith.constant 0 : i32
    return %c0_i32, %c0_i32_0 : i32, i32
  }
  func.func @transform_3(%arg0: i32) -> (i32, i32) {
    %c0_i32 = arith.constant 0 : i32
    %c0_i32_0 = arith.constant 0 : i32
    %c0_i32_1 = arith.constant 0 : i32
    return %c0_i32, %c0_i32_0 : i32, i32
  }
  func.func @transform_4(%arg0: i32) -> (i32, i32) {
    %c0_i32 = arith.constant 0 : i32
    %c0_i32_0 = arith.constant 0 : i32
    %c0_i32_1 = arith.constant 0 : i32
    return %c0_i32, %c0_i32_0 : i32, i32
  }
  func.func @transform_5(%arg0: i32) -> (i32, i32) {
    %c0_i32 = arith.constant 0 : i32
    %c0_i32_0 = arith.constant 0 : i32
    %c0_i32_1 = arith.constant 0 : i32
    return %c0_i32, %c0_i32_0 : i32, i32
  }
  func.func @transform_6(%arg0: i32) -> (i32, i32) {
    %c0_i32 = arith.constant 0 : i32
    %c0_i32_0 = arith.constant 0 : i32
    %c0_i32_1 = arith.constant 0 : i32
    return %c0_i32, %c0_i32_0 : i32, i32
  }
  func.func @transform_7(%arg0: i32) -> (i32, i32) {
    %c0_i32 = arith.constant 0 : i32
    %c0_i32_0 = arith.constant 0 : i32
    return %arg0, %c0_i32 : i32, i32
  }
}

module attributes {stable_mosaic.version = 11 : i64} {
  func.func @_ln_linear_kernel(%arg0: i32, %arg1: memref<18x32xf32, #tpu.memory_space<vmem>>, %arg2: memref<1x32xf32, #tpu.memory_space<vmem>>, %arg3: memref<1x32xf32, #tpu.memory_space<vmem>>, %arg4: memref<32x96xbf16, #tpu.memory_space<vmem>>, %arg5: memref<1x96xf32, #tpu.memory_space<vmem>>, %arg6: memref<18x96xf32, #tpu.memory_space<vmem>>) attributes {dimension_semantics = [#tpu.dimension_semantics<parallel>], iteration_bounds = array<i64: 1>, scalar_prefetch = 0 : i64, scratch_operands = 0 : i64, tpu.core_type = #tpu.core_type<tc>, window_params = [{transform_indices = @transform_0, window_bounds = array<i64: 18, 32>}, {pipeline_mode = #tpu.pipeline_mode<synchronous>, transform_indices = @transform_1, window_bounds = array<i64: 1, 32>}, {pipeline_mode = #tpu.pipeline_mode<synchronous>, transform_indices = @transform_2, window_bounds = array<i64: 1, 32>}, {pipeline_mode = #tpu.pipeline_mode<synchronous>, transform_indices = @transform_3, window_bounds = array<i64: 32, 96>}, {pipeline_mode = #tpu.pipeline_mode<synchronous>, transform_indices = @transform_4, window_bounds = array<i64: 1, 96>}, {transform_indices = @transform_5, window_bounds = array<i64: 18, 96>}]} {
    %c0 = arith.constant 0 : index
    %c0_0 = arith.constant 0 : index
    %0 = vector.load %arg1[%c0, %c0_0] : memref<18x32xf32, #tpu.memory_space<vmem>>, vector<18x32xf32>
    %c0_1 = arith.constant 0 : index
    %c0_2 = arith.constant 0 : index
    %1 = vector.load %arg2[%c0_1, %c0_2] : memref<1x32xf32, #tpu.memory_space<vmem>>, vector<1x32xf32>
    %c0_3 = arith.constant 0 : index
    %c0_4 = arith.constant 0 : index
    %2 = vector.load %arg3[%c0_3, %c0_4] : memref<1x32xf32, #tpu.memory_space<vmem>>, vector<1x32xf32>
    %cst = arith.constant dense<0.000000e+00> : vector<18xf32>
    %3 = vector.multi_reduction <add>, %0, %cst [1] : vector<18x32xf32> to vector<18xf32>
    %4 = vector.shape_cast %3 : vector<18xf32> to vector<18x1xf32>
    %cst_5 = arith.constant 3.200000e+01 : f32
    %5 = vector.broadcast %cst_5 : f32 to vector<18x1xf32>
    %6 = arith.divf %4, %5 : vector<18x1xf32>
    %7 = vector.broadcast %6 : vector<18x1xf32> to vector<18x32xf32>
    %8 = arith.subf %0, %7 : vector<18x32xf32>
    %9 = arith.mulf %8, %8 : vector<18x32xf32>
    %cst_6 = arith.constant dense<0.000000e+00> : vector<18xf32>
    %10 = vector.multi_reduction <add>, %9, %cst_6 [1] : vector<18x32xf32> to vector<18xf32>
    %11 = vector.shape_cast %10 : vector<18xf32> to vector<18x1xf32>
    %cst_7 = arith.constant 3.200000e+01 : f32
    %12 = vector.broadcast %cst_7 : f32 to vector<18x1xf32>
    %13 = arith.divf %11, %12 : vector<18x1xf32>
    %14 = vector.broadcast %6 : vector<18x1xf32> to vector<18x32xf32>
    %15 = arith.subf %0, %14 : vector<18x32xf32>
    %cst_8 = arith.constant 9.99999974E-6 : f32
    %16 = vector.broadcast %cst_8 : f32 to vector<18x1xf32>
    %17 = arith.addf %13, %16 : vector<18x1xf32>
    %18 = math.rsqrt %17 : vector<18x1xf32>
    %19 = vector.broadcast %18 : vector<18x1xf32> to vector<18x32xf32>
    %20 = arith.mulf %15, %19 : vector<18x32xf32>
    %21 = vector.broadcast %1 : vector<1x32xf32> to vector<18x32xf32>
    %22 = arith.mulf %20, %21 : vector<18x32xf32>
    %23 = vector.broadcast %2 : vector<1x32xf32> to vector<18x32xf32>
    %24 = arith.addf %22, %23 : vector<18x32xf32>
    %25 = arith.truncf %24 : vector<18x32xf32> to vector<18x32xbf16>
    %c0_9 = arith.constant 0 : index
    %c0_10 = arith.constant 0 : index
    %26 = vector.load %arg4[%c0_9, %c0_10] : memref<32x96xbf16, #tpu.memory_space<vmem>>, vector<32x96xbf16>
    %cst_11 = arith.constant dense<0.000000e+00> : vector<18x96xf32>
    %27 = tpu.matmul %25, %26, %cst_11 {dimension_numbers = #tpu.dot_dimension_numbers<[1], [0], [0], [1], [0, 0, 1, 1], [], []>} : vector<18x32xbf16>, vector<32x96xbf16>, vector<18x96xf32> -> vector<18x96xf32>
    %c0_12 = arith.constant 0 : index
    %c0_13 = arith.constant 0 : index
    %28 = vector.load %arg5[%c0_12, %c0_13] : memref<1x96xf32, #tpu.memory_space<vmem>>, vector<1x96xf32>
    %29 = vector.broadcast %28 : vector<1x96xf32> to vector<18x96xf32>
    %30 = arith.addf %27, %29 : vector<18x96xf32>
    %c0_14 = arith.constant 0 : index
    %c0_15 = arith.constant 0 : index
    %31 = vector.load %arg6[%c0_14, %c0_15] : memref<18x96xf32, #tpu.memory_space<vmem>>, vector<18x96xf32>
    tpu.vector_store %arg6[%c0_14, %c0_15], %30 {strides = array<i32>} : memref<18x96xf32, #tpu.memory_space<vmem>>, vector<18x96xf32>,
    return
  }
  func.func @transform_0(%arg0: i32) -> (i32, i32) {
    %c0_i32 = arith.constant 0 : i32
    %c0_i32_0 = arith.constant 0 : i32
    return %arg0, %c0_i32 : i32, i32
  }
  func.func @transform_1(%arg0: i32) -> (i32, i32) {
    %c0_i32 = arith.constant 0 : i32
    %c0_i32_0 = arith.constant 0 : i32
    %c0_i32_1 = arith.constant 0 : i32
    return %c0_i32, %c0_i32_0 : i32, i32
  }
  func.func @transform_2(%arg0: i32) -> (i32, i32) {
    %c0_i32 = arith.constant 0 : i32
    %c0_i32_0 = arith.constant 0 : i32
    %c0_i32_1 = arith.constant 0 : i32
    return %c0_i32, %c0_i32_0 : i32, i32
  }
  func.func @transform_3(%arg0: i32) -> (i32, i32) {
    %c0_i32 = arith.constant 0 : i32
    %c0_i32_0 = arith.constant 0 : i32
    %c0_i32_1 = arith.constant 0 : i32
    return %c0_i32, %c0_i32_0 : i32, i32
  }
  func.func @transform_4(%arg0: i32) -> (i32, i32) {
    %c0_i32 = arith.constant 0 : i32
    %c0_i32_0 = arith.constant 0 : i32
    %c0_i32_1 = arith.constant 0 : i32
    return %c0_i32, %c0_i32_0 : i32, i32
  }
  func.func @transform_5(%arg0: i32) -> (i32, i32) {
    %c0_i32 = arith.constant 0 : i32
    %c0_i32_0 = arith.constant 0 : i32
    return %arg0, %c0_i32 : i32, i32
  }
}

module attributes {stable_mosaic.version = 11 : i64} {
  func.func @_window_attn_kernel(%arg0: i32, %arg1: i32, %arg2: memref<1x9x96xf32, #tpu.memory_space<vmem>>, %arg3: memref<4x9x9xf32, #tpu.memory_space<vmem>>, %arg4: memref<1x9x9xf32, #tpu.memory_space<vmem>>, %arg5: memref<1x9x32xf32, #tpu.memory_space<vmem>>) attributes {dimension_semantics = [#tpu.dimension_semantics<parallel>, #tpu.dimension_semantics<parallel>], iteration_bounds = array<i64: 2, 1>, scalar_prefetch = 0 : i64, scratch_operands = 0 : i64, tpu.core_type = #tpu.core_type<tc>, window_params = [{transform_indices = @transform_0, window_bounds = array<i64: 1, 9, 96>}, {pipeline_mode = #tpu.pipeline_mode<synchronous>, transform_indices = @transform_1, window_bounds = array<i64: 4, 9, 9>}, {transform_indices = @transform_2, window_bounds = array<i64: 1, 9, 9>}, {transform_indices = @transform_3, window_bounds = array<i64: 1, 9, 32>}]} {
    %c0 = arith.constant 0 : index
    %c0_0 = arith.constant 0 : index
    %c0_1 = arith.constant 0 : index
    %0 = vector.load %arg4[%c0, %c0_0, %c0_1] : memref<1x9x9xf32, #tpu.memory_space<vmem>>, vector<1x9x9xf32>
    %c0_2 = arith.constant 0 : index
    %c0_3 = arith.constant 0 : index
    %c0_4 = arith.constant 0 : index
    %1 = vector.load %arg2[%c0_2, %c0_3, %c0_4] : memref<1x9x96xf32, #tpu.memory_space<vmem>>, vector<1x9x8xf32>
    %cst = arith.constant 0.353553385 : f32
    %2 = vector.broadcast %cst : f32 to vector<1x9x8xf32>
    %3 = arith.mulf %1, %2 : vector<1x9x8xf32>
    %c0_5 = arith.constant 0 : index
    %c0_6 = arith.constant 0 : index
    %c32 = arith.constant 32 : index
    %4 = vector.load %arg2[%c0_5, %c0_6, %c32] : memref<1x9x96xf32, #tpu.memory_space<vmem>>, vector<1x9x8xf32>
    %c0_7 = arith.constant 0 : index
    %c0_8 = arith.constant 0 : index
    %c64 = arith.constant 64 : index
    %5 = vector.load %arg2[%c0_7, %c0_8, %c64] : memref<1x9x96xf32, #tpu.memory_space<vmem>>, vector<1x9x8xf32>
    %6 = arith.truncf %3 : vector<1x9x8xf32> to vector<1x9x8xbf16>
    %7 = arith.truncf %4 : vector<1x9x8xf32> to vector<1x9x8xbf16>
    "tpu.trace_start"() <{level = 10 : i32, message = "wnd,wmd->wnm"}> : () -> ()
    %cst_9 = arith.constant dense<0.000000e+00> : vector<1x9x9xf32>
    %8 = tpu.matmul %6, %7, %cst_9 {dimension_numbers = #tpu.dot_dimension_numbers<[2], [2], [1], [1], [0, 0, 0, 1, 1, 1], [0], [0]>} : vector<1x9x8xbf16>, vector<1x9x8xbf16>, vector<1x9x9xf32> -> vector<1x9x9xf32>
    "tpu.trace_stop"() : () -> ()
    %c0_10 = arith.constant 0 : index
    %c0_11 = arith.constant 0 : index
    %c0_12 = arith.constant 0 : index
    %9 = vector.load %arg3[%c0_10, %c0_11, %c0_12] : memref<4x9x9xf32, #tpu.memory_space<vmem>>, vector<1x9x9xf32>
    %10 = vector.shape_cast %9 : vector<1x9x9xf32> to vector<9x9xf32>
    %11 = vector.shape_cast %10 : vector<9x9xf32> to vector<1x9x9xf32>
    %12 = arith.addf %8, %11 : vector<1x9x9xf32>
    %13 = arith.addf %12, %0 : vector<1x9x9xf32>
    %cst_13 = arith.constant dense<0xFF800000> : vector<1x9xf32>
    %14 = vector.multi_reduction <maximumf>, %13, %cst_13 [2] : vector<1x9x9xf32> to vector<1x9xf32>
    %15 = vector.shape_cast %14 : vector<1x9xf32> to vector<1x9x1xf32>
    %16 = vector.broadcast %15 : vector<1x9x1xf32> to vector<1x9x9xf32>
    %17 = arith.subf %13, %16 : vector<1x9x9xf32>
    %18 = math.exp %17 : vector<1x9x9xf32>
    %cst_14 = arith.constant dense<0.000000e+00> : vector<1x9xf32>
    %19 = vector.multi_reduction <add>, %18, %cst_14 [2] : vector<1x9x9xf32> to vector<1x9xf32>
    %20 = vector.shape_cast %19 : vector<1x9xf32> to vector<1x9x1xf32>
    %21 = tpu.reciprocal %20 {approx = true} : vector<1x9x1xf32> -> vector<1x9x1xf32>
    %22 = vector.broadcast %21 : vector<1x9x1xf32> to vector<1x9x9xf32>
    %23 = arith.mulf %18, %22 : vector<1x9x9xf32>
    %24 = arith.truncf %23 : vector<1x9x9xf32> to vector<1x9x9xbf16>
    %25 = arith.truncf %5 : vector<1x9x8xf32> to vector<1x9x8xbf16>
    "tpu.trace_start"() <{level = 10 : i32, message = "wnm,wmd->wnd"}> : () -> ()
    %cst_15 = arith.constant dense<0.000000e+00> : vector<1x9x8xf32>
    %26 = tpu.matmul %24, %25, %cst_15 {dimension_numbers = #tpu.dot_dimension_numbers<[2], [1], [1], [2], [0, 0, 0, 1, 1, 2], [0], [0]>} : vector<1x9x9xbf16>, vector<1x9x8xbf16>, vector<1x9x8xf32> -> vector<1x9x8xf32>
    "tpu.trace_stop"() : () -> ()
    %c0_16 = arith.constant 0 : index
    %c0_17 = arith.constant 0 : index
    %c8 = arith.constant 8 : index
    %27 = vector.load %arg2[%c0_16, %c0_17, %c8] : memref<1x9x96xf32, #tpu.memory_space<vmem>>, vector<1x9x8xf32>
    %cst_18 = arith.constant 0.353553385 : f32
    %28 = vector.broadcast %cst_18 : f32 to vector<1x9x8xf32>
    %29 = arith.mulf %27, %28 : vector<1x9x8xf32>
    %c0_19 = arith.constant 0 : index
    %c0_20 = arith.constant 0 : index
    %c40 = arith.constant 40 : index
    %30 = vector.load %arg2[%c0_19, %c0_20, %c40] : memref<1x9x96xf32, #tpu.memory_space<vmem>>, vector<1x9x8xf32>
    %c0_21 = arith.constant 0 : index
    %c0_22 = arith.constant 0 : index
    %c72 = arith.constant 72 : index
    %31 = vector.load %arg2[%c0_21, %c0_22, %c72] : memref<1x9x96xf32, #tpu.memory_space<vmem>>, vector<1x9x8xf32>
    %32 = arith.truncf %29 : vector<1x9x8xf32> to vector<1x9x8xbf16>
    %33 = arith.truncf %30 : vector<1x9x8xf32> to vector<1x9x8xbf16>
    "tpu.trace_start"() <{level = 10 : i32, message = "wnd,wmd->wnm"}> : () -> ()
    %cst_23 = arith.constant dense<0.000000e+00> : vector<1x9x9xf32>
    %34 = tpu.matmul %32, %33, %cst_23 {dimension_numbers = #tpu.dot_dimension_numbers<[2], [2], [1], [1], [0, 0, 0, 1, 1, 1], [0], [0]>} : vector<1x9x8xbf16>, vector<1x9x8xbf16>, vector<1x9x9xf32> -> vector<1x9x9xf32>
    "tpu.trace_stop"() : () -> ()
    %c1 = arith.constant 1 : index
    %c0_24 = arith.constant 0 : index
    %c0_25 = arith.constant 0 : index
    %35 = vector.load %arg3[%c1, %c0_24, %c0_25] : memref<4x9x9xf32, #tpu.memory_space<vmem>>, vector<1x9x9xf32>
    %36 = vector.shape_cast %35 : vector<1x9x9xf32> to vector<9x9xf32>
    %37 = vector.shape_cast %36 : vector<9x9xf32> to vector<1x9x9xf32>
    %38 = arith.addf %34, %37 : vector<1x9x9xf32>
    %39 = arith.addf %38, %0 : vector<1x9x9xf32>
    %cst_26 = arith.constant dense<0xFF800000> : vector<1x9xf32>
    %40 = vector.multi_reduction <maximumf>, %39, %cst_26 [2] : vector<1x9x9xf32> to vector<1x9xf32>
    %41 = vector.shape_cast %40 : vector<1x9xf32> to vector<1x9x1xf32>
    %42 = vector.broadcast %41 : vector<1x9x1xf32> to vector<1x9x9xf32>
    %43 = arith.subf %39, %42 : vector<1x9x9xf32>
    %44 = math.exp %43 : vector<1x9x9xf32>
    %cst_27 = arith.constant dense<0.000000e+00> : vector<1x9xf32>
    %45 = vector.multi_reduction <add>, %44, %cst_27 [2] : vector<1x9x9xf32> to vector<1x9xf32>
    %46 = vector.shape_cast %45 : vector<1x9xf32> to vector<1x9x1xf32>
    %47 = tpu.reciprocal %46 {approx = true} : vector<1x9x1xf32> -> vector<1x9x1xf32>
    %48 = vector.broadcast %47 : vector<1x9x1xf32> to vector<1x9x9xf32>
    %49 = arith.mulf %44, %48 : vector<1x9x9xf32>
    %50 = arith.truncf %49 : vector<1x9x9xf32> to vector<1x9x9xbf16>
    %51 = arith.truncf %31 : vector<1x9x8xf32> to vector<1x9x8xbf16>
    "tpu.trace_start"() <{level = 10 : i32, message = "wnm,wmd->wnd"}> : () -> ()
    %cst_28 = arith.constant dense<0.000000e+00> : vector<1x9x8xf32>
    %52 = tpu.matmul %50, %51, %cst_28 {dimension_numbers = #tpu.dot_dimension_numbers<[2], [1], [1], [2], [0, 0, 0, 1, 1, 2], [0], [0]>} : vector<1x9x9xbf16>, vector<1x9x8xbf16>, vector<1x9x8xf32> -> vector<1x9x8xf32>
    "tpu.trace_stop"() : () -> ()
    %c0_29 = arith.constant 0 : index
    %c0_30 = arith.constant 0 : index
    %c16 = arith.constant 16 : index
    %53 = vector.load %arg2[%c0_29, %c0_30, %c16] : memref<1x9x96xf32, #tpu.memory_space<vmem>>, vector<1x9x8xf32>
    %cst_31 = arith.constant 0.353553385 : f32
    %54 = vector.broadcast %cst_31 : f32 to vector<1x9x8xf32>
    %55 = arith.mulf %53, %54 : vector<1x9x8xf32>
    %c0_32 = arith.constant 0 : index
    %c0_33 = arith.constant 0 : index
    %c48 = arith.constant 48 : index
    %56 = vector.load %arg2[%c0_32, %c0_33, %c48] : memref<1x9x96xf32, #tpu.memory_space<vmem>>, vector<1x9x8xf32>
    %c0_34 = arith.constant 0 : index
    %c0_35 = arith.constant 0 : index
    %c80 = arith.constant 80 : index
    %57 = vector.load %arg2[%c0_34, %c0_35, %c80] : memref<1x9x96xf32, #tpu.memory_space<vmem>>, vector<1x9x8xf32>
    %58 = arith.truncf %55 : vector<1x9x8xf32> to vector<1x9x8xbf16>
    %59 = arith.truncf %56 : vector<1x9x8xf32> to vector<1x9x8xbf16>
    "tpu.trace_start"() <{level = 10 : i32, message = "wnd,wmd->wnm"}> : () -> ()
    %cst_36 = arith.constant dense<0.000000e+00> : vector<1x9x9xf32>
    %60 = tpu.matmul %58, %59, %cst_36 {dimension_numbers = #tpu.dot_dimension_numbers<[2], [2], [1], [1], [0, 0, 0, 1, 1, 1], [0], [0]>} : vector<1x9x8xbf16>, vector<1x9x8xbf16>, vector<1x9x9xf32> -> vector<1x9x9xf32>
    "tpu.trace_stop"() : () -> ()
    %c2 = arith.constant 2 : index
    %c0_37 = arith.constant 0 : index
    %c0_38 = arith.constant 0 : index
    %61 = vector.load %arg3[%c2, %c0_37, %c0_38] : memref<4x9x9xf32, #tpu.memory_space<vmem>>, vector<1x9x9xf32>
    %62 = vector.shape_cast %61 : vector<1x9x9xf32> to vector<9x9xf32>
    %63 = vector.shape_cast %62 : vector<9x9xf32> to vector<1x9x9xf32>
    %64 = arith.addf %60, %63 : vector<1x9x9xf32>
    %65 = arith.addf %64, %0 : vector<1x9x9xf32>
    %cst_39 = arith.constant dense<0xFF800000> : vector<1x9xf32>
    %66 = vector.multi_reduction <maximumf>, %65, %cst_39 [2] : vector<1x9x9xf32> to vector<1x9xf32>
    %67 = vector.shape_cast %66 : vector<1x9xf32> to vector<1x9x1xf32>
    %68 = vector.broadcast %67 : vector<1x9x1xf32> to vector<1x9x9xf32>
    %69 = arith.subf %65, %68 : vector<1x9x9xf32>
    %70 = math.exp %69 : vector<1x9x9xf32>
    %cst_40 = arith.constant dense<0.000000e+00> : vector<1x9xf32>
    %71 = vector.multi_reduction <add>, %70, %cst_40 [2] : vector<1x9x9xf32> to vector<1x9xf32>
    %72 = vector.shape_cast %71 : vector<1x9xf32> to vector<1x9x1xf32>
    %73 = tpu.reciprocal %72 {approx = true} : vector<1x9x1xf32> -> vector<1x9x1xf32>
    %74 = vector.broadcast %73 : vector<1x9x1xf32> to vector<1x9x9xf32>
    %75 = arith.mulf %70, %74 : vector<1x9x9xf32>
    %76 = arith.truncf %75 : vector<1x9x9xf32> to vector<1x9x9xbf16>
    %77 = arith.truncf %57 : vector<1x9x8xf32> to vector<1x9x8xbf16>
    "tpu.trace_start"() <{level = 10 : i32, message = "wnm,wmd->wnd"}> : () -> ()
    %cst_41 = arith.constant dense<0.000000e+00> : vector<1x9x8xf32>
    %78 = tpu.matmul %76, %77, %cst_41 {dimension_numbers = #tpu.dot_dimension_numbers<[2], [1], [1], [2], [0, 0, 0, 1, 1, 2], [0], [0]>} : vector<1x9x9xbf16>, vector<1x9x8xbf16>, vector<1x9x8xf32> -> vector<1x9x8xf32>
    "tpu.trace_stop"() : () -> ()
    %c0_42 = arith.constant 0 : index
    %c0_43 = arith.constant 0 : index
    %c24 = arith.constant 24 : index
    %79 = vector.load %arg2[%c0_42, %c0_43, %c24] : memref<1x9x96xf32, #tpu.memory_space<vmem>>, vector<1x9x8xf32>
    %cst_44 = arith.constant 0.353553385 : f32
    %80 = vector.broadcast %cst_44 : f32 to vector<1x9x8xf32>
    %81 = arith.mulf %79, %80 : vector<1x9x8xf32>
    %c0_45 = arith.constant 0 : index
    %c0_46 = arith.constant 0 : index
    %c56 = arith.constant 56 : index
    %82 = vector.load %arg2[%c0_45, %c0_46, %c56] : memref<1x9x96xf32, #tpu.memory_space<vmem>>, vector<1x9x8xf32>
    %c0_47 = arith.constant 0 : index
    %c0_48 = arith.constant 0 : index
    %c88 = arith.constant 88 : index
    %83 = vector.load %arg2[%c0_47, %c0_48, %c88] : memref<1x9x96xf32, #tpu.memory_space<vmem>>, vector<1x9x8xf32>
    %84 = arith.truncf %81 : vector<1x9x8xf32> to vector<1x9x8xbf16>
    %85 = arith.truncf %82 : vector<1x9x8xf32> to vector<1x9x8xbf16>
    "tpu.trace_start"() <{level = 10 : i32, message = "wnd,wmd->wnm"}> : () -> ()
    %cst_49 = arith.constant dense<0.000000e+00> : vector<1x9x9xf32>
    %86 = tpu.matmul %84, %85, %cst_49 {dimension_numbers = #tpu.dot_dimension_numbers<[2], [2], [1], [1], [0, 0, 0, 1, 1, 1], [0], [0]>} : vector<1x9x8xbf16>, vector<1x9x8xbf16>, vector<1x9x9xf32> -> vector<1x9x9xf32>
    "tpu.trace_stop"() : () -> ()
    %c3 = arith.constant 3 : index
    %c0_50 = arith.constant 0 : index
    %c0_51 = arith.constant 0 : index
    %87 = vector.load %arg3[%c3, %c0_50, %c0_51] : memref<4x9x9xf32, #tpu.memory_space<vmem>>, vector<1x9x9xf32>
    %88 = vector.shape_cast %87 : vector<1x9x9xf32> to vector<9x9xf32>
    %89 = vector.shape_cast %88 : vector<9x9xf32> to vector<1x9x9xf32>
    %90 = arith.addf %86, %89 : vector<1x9x9xf32>
    %91 = arith.addf %90, %0 : vector<1x9x9xf32>
    %cst_52 = arith.constant dense<0xFF800000> : vector<1x9xf32>
    %92 = vector.multi_reduction <maximumf>, %91, %cst_52 [2] : vector<1x9x9xf32> to vector<1x9xf32>
    %93 = vector.shape_cast %92 : vector<1x9xf32> to vector<1x9x1xf32>
    %94 = vector.broadcast %93 : vector<1x9x1xf32> to vector<1x9x9xf32>
    %95 = arith.subf %91, %94 : vector<1x9x9xf32>
    %96 = math.exp %95 : vector<1x9x9xf32>
    %cst_53 = arith.constant dense<0.000000e+00> : vector<1x9xf32>
    %97 = vector.multi_reduction <add>, %96, %cst_53 [2] : vector<1x9x9xf32> to vector<1x9xf32>
    %98 = vector.shape_cast %97 : vector<1x9xf32> to vector<1x9x1xf32>
    %99 = tpu.reciprocal %98 {approx = true} : vector<1x9x1xf32> -> vector<1x9x1xf32>
    %100 = vector.broadcast %99 : vector<1x9x1xf32> to vector<1x9x9xf32>
    %101 = arith.mulf %96, %100 : vector<1x9x9xf32>
    %102 = arith.truncf %101 : vector<1x9x9xf32> to vector<1x9x9xbf16>
    %103 = arith.truncf %83 : vector<1x9x8xf32> to vector<1x9x8xbf16>
    "tpu.trace_start"() <{level = 10 : i32, message = "wnm,wmd->wnd"}> : () -> ()
    %cst_54 = arith.constant dense<0.000000e+00> : vector<1x9x8xf32>
    %104 = tpu.matmul %102, %103, %cst_54 {dimension_numbers = #tpu.dot_dimension_numbers<[2], [1], [1], [2], [0, 0, 0, 1, 1, 2], [0], [0]>} : vector<1x9x9xbf16>, vector<1x9x8xbf16>, vector<1x9x8xf32> -> vector<1x9x8xf32>
    "tpu.trace_stop"() : () -> ()
    %105 = tpu.concatenate %26, %52, %78, %104 in 2 : vector<1x9x8xf32>, vector<1x9x8xf32>, vector<1x9x8xf32>, vector<1x9x8xf32> -> vector<1x9x32xf32>
    %c0_55 = arith.constant 0 : index
    %c0_56 = arith.constant 0 : index
    %c0_57 = arith.constant 0 : index
    %106 = vector.load %arg5[%c0_55, %c0_56, %c0_57] : memref<1x9x32xf32, #tpu.memory_space<vmem>>, vector<1x9x32xf32>
    tpu.vector_store %arg5[%c0_55, %c0_56, %c0_57], %105 {strides = array<i32>} : memref<1x9x32xf32, #tpu.memory_space<vmem>>, vector<1x9x32xf32>,
    return
  }
  func.func @transform_0(%arg0: i32, %arg1: i32) -> (i32, i32, i32) {
    %c1_i32 = arith.constant 1 : i32
    %0 = arith.muli %arg0, %c1_i32 : i32
    %1 = arith.addi %0, %arg1 : i32
    %c0_i32 = arith.constant 0 : i32
    %c0_i32_0 = arith.constant 0 : i32
    %c0_i32_1 = arith.constant 0 : i32
    return %1, %c0_i32, %c0_i32_0 : i32, i32, i32
  }
  func.func @transform_1(%arg0: i32, %arg1: i32) -> (i32, i32, i32) {
    %c0_i32 = arith.constant 0 : i32
    %c0_i32_0 = arith.constant 0 : i32
    %c0_i32_1 = arith.constant 0 : i32
    %c0_i32_2 = arith.constant 0 : i32
    return %c0_i32, %c0_i32_0, %c0_i32_1 : i32, i32, i32
  }
  func.func @transform_2(%arg0: i32, %arg1: i32) -> (i32, i32, i32) {
    %c0_i32 = arith.constant 0 : i32
    %c0_i32_0 = arith.constant 0 : i32
    %c0_i32_1 = arith.constant 0 : i32
    return %arg1, %c0_i32, %c0_i32_0 : i32, i32, i32
  }
  func.func @transform_3(%arg0: i32, %arg1: i32) -> (i32, i32, i32) {
    %c1_i32 = arith.constant 1 : i32
    %0 = arith.muli %arg0, %c1_i32 : i32
    %1 = arith.addi %0, %arg1 : i32
    %c0_i32 = arith.constant 0 : i32
    %c0_i32_0 = arith.constant 0 : i32
    %c0_i32_1 = arith.constant 0 : i32
    return %1, %c0_i32, %c0_i32_0 : i32, i32, i32
  }
}

module attributes {stable_mosaic.version = 11 : i64} {
  func.func @_ln_linear_kernel(%arg0: i32, %arg1: memref<18x64xf32, #tpu.memory_space<vmem>>, %arg2: memref<1x64xf32, #tpu.memory_space<vmem>>, %arg3: memref<1x64xf32, #tpu.memory_space<vmem>>, %arg4: memref<64x32xbf16, #tpu.memory_space<vmem>>, %arg5: memref<1x32xf32, #tpu.memory_space<vmem>>, %arg6: memref<18x32xf32, #tpu.memory_space<vmem>>) attributes {dimension_semantics = [#tpu.dimension_semantics<parallel>], iteration_bounds = array<i64: 1>, scalar_prefetch = 0 : i64, scratch_operands = 0 : i64, tpu.core_type = #tpu.core_type<tc>, window_params = [{transform_indices = @transform_0, window_bounds = array<i64: 18, 64>}, {pipeline_mode = #tpu.pipeline_mode<synchronous>, transform_indices = @transform_1, window_bounds = array<i64: 1, 64>}, {pipeline_mode = #tpu.pipeline_mode<synchronous>, transform_indices = @transform_2, window_bounds = array<i64: 1, 64>}, {pipeline_mode = #tpu.pipeline_mode<synchronous>, transform_indices = @transform_3, window_bounds = array<i64: 64, 32>}, {pipeline_mode = #tpu.pipeline_mode<synchronous>, transform_indices = @transform_4, window_bounds = array<i64: 1, 32>}, {transform_indices = @transform_5, window_bounds = array<i64: 18, 32>}]} {
    %c0 = arith.constant 0 : index
    %c0_0 = arith.constant 0 : index
    %0 = vector.load %arg1[%c0, %c0_0] : memref<18x64xf32, #tpu.memory_space<vmem>>, vector<18x64xf32>
    %c0_1 = arith.constant 0 : index
    %c0_2 = arith.constant 0 : index
    %1 = vector.load %arg2[%c0_1, %c0_2] : memref<1x64xf32, #tpu.memory_space<vmem>>, vector<1x64xf32>
    %c0_3 = arith.constant 0 : index
    %c0_4 = arith.constant 0 : index
    %2 = vector.load %arg3[%c0_3, %c0_4] : memref<1x64xf32, #tpu.memory_space<vmem>>, vector<1x64xf32>
    %cst = arith.constant dense<0.000000e+00> : vector<18xf32>
    %3 = vector.multi_reduction <add>, %0, %cst [1] : vector<18x64xf32> to vector<18xf32>
    %4 = vector.shape_cast %3 : vector<18xf32> to vector<18x1xf32>
    %cst_5 = arith.constant 6.400000e+01 : f32
    %5 = vector.broadcast %cst_5 : f32 to vector<18x1xf32>
    %6 = arith.divf %4, %5 : vector<18x1xf32>
    %7 = vector.broadcast %6 : vector<18x1xf32> to vector<18x64xf32>
    %8 = arith.subf %0, %7 : vector<18x64xf32>
    %9 = arith.mulf %8, %8 : vector<18x64xf32>
    %cst_6 = arith.constant dense<0.000000e+00> : vector<18xf32>
    %10 = vector.multi_reduction <add>, %9, %cst_6 [1] : vector<18x64xf32> to vector<18xf32>
    %11 = vector.shape_cast %10 : vector<18xf32> to vector<18x1xf32>
    %cst_7 = arith.constant 6.400000e+01 : f32
    %12 = vector.broadcast %cst_7 : f32 to vector<18x1xf32>
    %13 = arith.divf %11, %12 : vector<18x1xf32>
    %14 = vector.broadcast %6 : vector<18x1xf32> to vector<18x64xf32>
    %15 = arith.subf %0, %14 : vector<18x64xf32>
    %cst_8 = arith.constant 9.99999974E-6 : f32
    %16 = vector.broadcast %cst_8 : f32 to vector<18x1xf32>
    %17 = arith.addf %13, %16 : vector<18x1xf32>
    %18 = math.rsqrt %17 : vector<18x1xf32>
    %19 = vector.broadcast %18 : vector<18x1xf32> to vector<18x64xf32>
    %20 = arith.mulf %15, %19 : vector<18x64xf32>
    %21 = vector.broadcast %1 : vector<1x64xf32> to vector<18x64xf32>
    %22 = arith.mulf %20, %21 : vector<18x64xf32>
    %23 = vector.broadcast %2 : vector<1x64xf32> to vector<18x64xf32>
    %24 = arith.addf %22, %23 : vector<18x64xf32>
    %25 = arith.truncf %24 : vector<18x64xf32> to vector<18x64xbf16>
    %c0_9 = arith.constant 0 : index
    %c0_10 = arith.constant 0 : index
    %26 = vector.load %arg4[%c0_9, %c0_10] : memref<64x32xbf16, #tpu.memory_space<vmem>>, vector<64x32xbf16>
    %cst_11 = arith.constant dense<0.000000e+00> : vector<18x32xf32>
    %27 = tpu.matmul %25, %26, %cst_11 {dimension_numbers = #tpu.dot_dimension_numbers<[1], [0], [0], [1], [0, 0, 1, 1], [], []>} : vector<18x64xbf16>, vector<64x32xbf16>, vector<18x32xf32> -> vector<18x32xf32>
    %c0_12 = arith.constant 0 : index
    %c0_13 = arith.constant 0 : index
    %28 = vector.load %arg5[%c0_12, %c0_13] : memref<1x32xf32, #tpu.memory_space<vmem>>, vector<1x32xf32>
    %29 = vector.broadcast %28 : vector<1x32xf32> to vector<18x32xf32>
    %30 = arith.addf %27, %29 : vector<18x32xf32>
    %c0_14 = arith.constant 0 : index
    %c0_15 = arith.constant 0 : index
    %31 = vector.load %arg6[%c0_14, %c0_15] : memref<18x32xf32, #tpu.memory_space<vmem>>, vector<18x32xf32>
    tpu.vector_store %arg6[%c0_14, %c0_15], %30 {strides = array<i32>} : memref<18x32xf32, #tpu.memory_space<vmem>>, vector<18x32xf32>,
    return
  }
  func.func @transform_0(%arg0: i32) -> (i32, i32) {
    %c0_i32 = arith.constant 0 : i32
    %c0_i32_0 = arith.constant 0 : i32
    return %arg0, %c0_i32 : i32, i32
  }
  func.func @transform_1(%arg0: i32) -> (i32, i32) {
    %c0_i32 = arith.constant 0 : i32
    %c0_i32_0 = arith.constant 0 : i32
    %c0_i32_1 = arith.constant 0 : i32
    return %c0_i32, %c0_i32_0 : i32, i32
  }
  func.func @transform_2(%arg0: i32) -> (i32, i32) {
    %c0_i32 = arith.constant 0 : i32
    %c0_i32_0 = arith.constant 0 : i32
    %c0_i32_1 = arith.constant 0 : i32
    return %c0_i32, %c0_i32_0 : i32, i32
  }
  func.func @transform_3(%arg0: i32) -> (i32, i32) {
    %c0_i32 = arith.constant 0 : i32
    %c0_i32_0 = arith.constant 0 : i32
    %c0_i32_1 = arith.constant 0 : i32
    return %c0_i32, %c0_i32_0 : i32, i32
  }
  func.func @transform_4(%arg0: i32) -> (i32, i32) {
    %c0_i32 = arith.constant 0 : i32
    %c0_i32_0 = arith.constant 0 : i32
    %c0_i32_1 = arith.constant 0 : i32
    return %c0_i32, %c0_i32_0 : i32, i32
  }
  func.func @transform_5(%arg0: i32) -> (i32, i32) {
    %c0_i32 = arith.constant 0 : i32
    %c0_i32_0 = arith.constant 0 : i32
    return %arg0, %c0_i32 : i32, i32
  }
}

module attributes {stable_mosaic.version = 11 : i64} {
  func.func @_linear_residual_kernel(%arg0: i32, %arg1: memref<18x32xf32, #tpu.memory_space<vmem>>, %arg2: memref<32x32xbf16, #tpu.memory_space<vmem>>, %arg3: memref<1x32xf32, #tpu.memory_space<vmem>>, %arg4: memref<18x32xf32, #tpu.memory_space<vmem>>, %arg5: memref<18x32xf32, #tpu.memory_space<vmem>>) attributes {dimension_semantics = [#tpu.dimension_semantics<parallel>], iteration_bounds = array<i64: 1>, scalar_prefetch = 0 : i64, scratch_operands = 0 : i64, tpu.core_type = #tpu.core_type<tc>, window_params = [{transform_indices = @transform_0, window_bounds = array<i64: 18, 32>}, {pipeline_mode = #tpu.pipeline_mode<synchronous>, transform_indices = @transform_1, window_bounds = array<i64: 32, 32>}, {pipeline_mode = #tpu.pipeline_mode<synchronous>, transform_indices = @transform_2, window_bounds = array<i64: 1, 32>}, {transform_indices = @transform_3, window_bounds = array<i64: 18, 32>}, {transform_indices = @transform_4, window_bounds = array<i64: 18, 32>}]} {
    %c0 = arith.constant 0 : index
    %c0_0 = arith.constant 0 : index
    %0 = vector.load %arg1[%c0, %c0_0] : memref<18x32xf32, #tpu.memory_space<vmem>>, vector<18x32xf32>
    %1 = arith.truncf %0 : vector<18x32xf32> to vector<18x32xbf16>
    %c0_1 = arith.constant 0 : index
    %c0_2 = arith.constant 0 : index
    %2 = vector.load %arg2[%c0_1, %c0_2] : memref<32x32xbf16, #tpu.memory_space<vmem>>, vector<32x32xbf16>
    %cst = arith.constant dense<0.000000e+00> : vector<18x32xf32>
    %3 = tpu.matmul %1, %2, %cst {dimension_numbers = #tpu.dot_dimension_numbers<[1], [0], [0], [1], [0, 0, 1, 1], [], []>} : vector<18x32xbf16>, vector<32x32xbf16>, vector<18x32xf32> -> vector<18x32xf32>
    %c0_3 = arith.constant 0 : index
    %c0_4 = arith.constant 0 : index
    %4 = vector.load %arg3[%c0_3, %c0_4] : memref<1x32xf32, #tpu.memory_space<vmem>>, vector<1x32xf32>
    %5 = vector.broadcast %4 : vector<1x32xf32> to vector<18x32xf32>
    %6 = arith.addf %3, %5 : vector<18x32xf32>
    %c0_5 = arith.constant 0 : index
    %c0_6 = arith.constant 0 : index
    %7 = vector.load %arg4[%c0_5, %c0_6] : memref<18x32xf32, #tpu.memory_space<vmem>>, vector<18x32xf32>
    %8 = arith.addf %7, %6 : vector<18x32xf32>
    %c0_7 = arith.constant 0 : index
    %c0_8 = arith.constant 0 : index
    %9 = vector.load %arg5[%c0_7, %c0_8] : memref<18x32xf32, #tpu.memory_space<vmem>>, vector<18x32xf32>
    tpu.vector_store %arg5[%c0_7, %c0_8], %8 {strides = array<i32>} : memref<18x32xf32, #tpu.memory_space<vmem>>, vector<18x32xf32>,
    return
  }
  func.func @transform_0(%arg0: i32) -> (i32, i32) {
    %c0_i32 = arith.constant 0 : i32
    %c0_i32_0 = arith.constant 0 : i32
    return %arg0, %c0_i32 : i32, i32
  }
  func.func @transform_1(%arg0: i32) -> (i32, i32) {
    %c0_i32 = arith.constant 0 : i32
    %c0_i32_0 = arith.constant 0 : i32
    %c0_i32_1 = arith.constant 0 : i32
    return %c0_i32, %c0_i32_0 : i32, i32
  }
  func.func @transform_2(%arg0: i32) -> (i32, i32) {
    %c0_i32 = arith.constant 0 : i32
    %c0_i32_0 = arith.constant 0 : i32
    %c0_i32_1 = arith.constant 0 : i32
    return %c0_i32, %c0_i32_0 : i32, i32
  }
  func.func @transform_3(%arg0: i32) -> (i32, i32) {
    %c0_i32 = arith.constant 0 : i32
    %c0_i32_0 = arith.constant 0 : i32
    return %arg0, %c0_i32 : i32, i32
  }
  func.func @transform_4(%arg0: i32) -> (i32, i32) {
    %c0_i32 = arith.constant 0 : i32
    %c0_i32_0 = arith.constant 0 : i32
    return %arg0, %c0_i32 : i32, i32
  }
}

module attributes {stable_mosaic.version = 11 : i64} {
  func.func @_mlp_kernel(%arg0: i32, %arg1: memref<18x32xf32, #tpu.memory_space<vmem>>, %arg2: memref<1x32xf32, #tpu.memory_space<vmem>>, %arg3: memref<1x32xf32, #tpu.memory_space<vmem>>, %arg4: memref<32x128xbf16, #tpu.memory_space<vmem>>, %arg5: memref<1x128xf32, #tpu.memory_space<vmem>>, %arg6: memref<128x32xbf16, #tpu.memory_space<vmem>>, %arg7: memref<1x32xf32, #tpu.memory_space<vmem>>, %arg8: memref<18x32xf32, #tpu.memory_space<vmem>>) attributes {dimension_semantics = [#tpu.dimension_semantics<parallel>], iteration_bounds = array<i64: 1>, scalar_prefetch = 0 : i64, scratch_operands = 0 : i64, tpu.core_type = #tpu.core_type<tc>, window_params = [{transform_indices = @transform_0, window_bounds = array<i64: 18, 32>}, {pipeline_mode = #tpu.pipeline_mode<synchronous>, transform_indices = @transform_1, window_bounds = array<i64: 1, 32>}, {pipeline_mode = #tpu.pipeline_mode<synchronous>, transform_indices = @transform_2, window_bounds = array<i64: 1, 32>}, {pipeline_mode = #tpu.pipeline_mode<synchronous>, transform_indices = @transform_3, window_bounds = array<i64: 32, 128>}, {pipeline_mode = #tpu.pipeline_mode<synchronous>, transform_indices = @transform_4, window_bounds = array<i64: 1, 128>}, {pipeline_mode = #tpu.pipeline_mode<synchronous>, transform_indices = @transform_5, window_bounds = array<i64: 128, 32>}, {pipeline_mode = #tpu.pipeline_mode<synchronous>, transform_indices = @transform_6, window_bounds = array<i64: 1, 32>}, {transform_indices = @transform_7, window_bounds = array<i64: 18, 32>}]} {
    %c0 = arith.constant 0 : index
    %c0_0 = arith.constant 0 : index
    %0 = vector.load %arg1[%c0, %c0_0] : memref<18x32xf32, #tpu.memory_space<vmem>>, vector<18x32xf32>
    %c0_1 = arith.constant 0 : index
    %c0_2 = arith.constant 0 : index
    %1 = vector.load %arg2[%c0_1, %c0_2] : memref<1x32xf32, #tpu.memory_space<vmem>>, vector<1x32xf32>
    %c0_3 = arith.constant 0 : index
    %c0_4 = arith.constant 0 : index
    %2 = vector.load %arg3[%c0_3, %c0_4] : memref<1x32xf32, #tpu.memory_space<vmem>>, vector<1x32xf32>
    %cst = arith.constant dense<0.000000e+00> : vector<18xf32>
    %3 = vector.multi_reduction <add>, %0, %cst [1] : vector<18x32xf32> to vector<18xf32>
    %4 = vector.shape_cast %3 : vector<18xf32> to vector<18x1xf32>
    %cst_5 = arith.constant 3.200000e+01 : f32
    %5 = vector.broadcast %cst_5 : f32 to vector<18x1xf32>
    %6 = arith.divf %4, %5 : vector<18x1xf32>
    %7 = vector.broadcast %6 : vector<18x1xf32> to vector<18x32xf32>
    %8 = arith.subf %0, %7 : vector<18x32xf32>
    %9 = arith.mulf %8, %8 : vector<18x32xf32>
    %cst_6 = arith.constant dense<0.000000e+00> : vector<18xf32>
    %10 = vector.multi_reduction <add>, %9, %cst_6 [1] : vector<18x32xf32> to vector<18xf32>
    %11 = vector.shape_cast %10 : vector<18xf32> to vector<18x1xf32>
    %cst_7 = arith.constant 3.200000e+01 : f32
    %12 = vector.broadcast %cst_7 : f32 to vector<18x1xf32>
    %13 = arith.divf %11, %12 : vector<18x1xf32>
    %14 = vector.broadcast %6 : vector<18x1xf32> to vector<18x32xf32>
    %15 = arith.subf %0, %14 : vector<18x32xf32>
    %cst_8 = arith.constant 9.99999974E-6 : f32
    %16 = vector.broadcast %cst_8 : f32 to vector<18x1xf32>
    %17 = arith.addf %13, %16 : vector<18x1xf32>
    %18 = math.rsqrt %17 : vector<18x1xf32>
    %19 = vector.broadcast %18 : vector<18x1xf32> to vector<18x32xf32>
    %20 = arith.mulf %15, %19 : vector<18x32xf32>
    %21 = vector.broadcast %1 : vector<1x32xf32> to vector<18x32xf32>
    %22 = arith.mulf %20, %21 : vector<18x32xf32>
    %23 = vector.broadcast %2 : vector<1x32xf32> to vector<18x32xf32>
    %24 = arith.addf %22, %23 : vector<18x32xf32>
    %25 = arith.truncf %24 : vector<18x32xf32> to vector<18x32xbf16>
    %c0_9 = arith.constant 0 : index
    %c0_10 = arith.constant 0 : index
    %26 = vector.load %arg4[%c0_9, %c0_10] : memref<32x128xbf16, #tpu.memory_space<vmem>>, vector<32x128xbf16>
    %cst_11 = arith.constant dense<0.000000e+00> : vector<18x128xf32>
    %27 = tpu.matmul %25, %26, %cst_11 {dimension_numbers = #tpu.dot_dimension_numbers<[1], [0], [0], [1], [0, 0, 1, 1], [], []>} : vector<18x32xbf16>, vector<32x128xbf16>, vector<18x128xf32> -> vector<18x128xf32>
    %c0_12 = arith.constant 0 : index
    %c0_13 = arith.constant 0 : index
    %28 = vector.load %arg5[%c0_12, %c0_13] : memref<1x128xf32, #tpu.memory_space<vmem>>, vector<1x128xf32>
    %29 = vector.broadcast %28 : vector<1x128xf32> to vector<18x128xf32>
    %30 = arith.addf %27, %29 : vector<18x128xf32>
    %cst_14 = arith.constant 5.000000e-01 : f32
    %31 = vector.broadcast %cst_14 : f32 to vector<18x128xf32>
    %32 = arith.mulf %31, %30 : vector<18x128xf32>
    %cst_15 = arith.constant 0.707106769 : f32
    %33 = vector.broadcast %cst_15 : f32 to vector<18x128xf32>
    %34 = arith.mulf %30, %33 : vector<18x128xf32>
    %35 = math.erf %34 : vector<18x128xf32>
    %cst_16 = arith.constant 1.000000e+00 : f32
    %36 = vector.broadcast %cst_16 : f32 to vector<18x128xf32>
    %37 = arith.addf %36, %35 : vector<18x128xf32>
    %38 = arith.mulf %32, %37 : vector<18x128xf32>
    %39 = arith.truncf %38 : vector<18x128xf32> to vector<18x128xbf16>
    %c0_17 = arith.constant 0 : index
    %c0_18 = arith.constant 0 : index
    %40 = vector.load %arg6[%c0_17, %c0_18] : memref<128x32xbf16, #tpu.memory_space<vmem>>, vector<128x32xbf16>
    %cst_19 = arith.constant dense<0.000000e+00> : vector<18x32xf32>
    %41 = tpu.matmul %39, %40, %cst_19 {dimension_numbers = #tpu.dot_dimension_numbers<[1], [0], [0], [1], [0, 0, 1, 1], [], []>} : vector<18x128xbf16>, vector<128x32xbf16>, vector<18x32xf32> -> vector<18x32xf32>
    %c0_20 = arith.constant 0 : index
    %c0_21 = arith.constant 0 : index
    %42 = vector.load %arg7[%c0_20, %c0_21] : memref<1x32xf32, #tpu.memory_space<vmem>>, vector<1x32xf32>
    %43 = vector.broadcast %42 : vector<1x32xf32> to vector<18x32xf32>
    %44 = arith.addf %41, %43 : vector<18x32xf32>
    %45 = arith.addf %0, %44 : vector<18x32xf32>
    %c0_22 = arith.constant 0 : index
    %c0_23 = arith.constant 0 : index
    %46 = vector.load %arg8[%c0_22, %c0_23] : memref<18x32xf32, #tpu.memory_space<vmem>>, vector<18x32xf32>
    tpu.vector_store %arg8[%c0_22, %c0_23], %45 {strides = array<i32>} : memref<18x32xf32, #tpu.memory_space<vmem>>, vector<18x32xf32>,
    return
  }
  func.func @transform_0(%arg0: i32) -> (i32, i32) {
    %c0_i32 = arith.constant 0 : i32
    %c0_i32_0 = arith.constant 0 : i32
    return %arg0, %c0_i32 : i32, i32
  }
  func.func @transform_1(%arg0: i32) -> (i32, i32) {
    %c0_i32 = arith.constant 0 : i32
    %c0_i32_0 = arith.constant 0 : i32
    %c0_i32_1 = arith.constant 0 : i32
    return %c0_i32, %c0_i32_0 : i32, i32
  }
  func.func @transform_2(%arg0: i32) -> (i32, i32) {
    %c0_i32 = arith.constant 0 : i32
    %c0_i32_0 = arith.constant 0 : i32
    %c0_i32_1 = arith.constant 0 : i32
    return %c0_i32, %c0_i32_0 : i32, i32
  }
  func.func @transform_3(%arg0: i32) -> (i32, i32) {
    %c0_i32 = arith.constant 0 : i32
    %c0_i32_0 = arith.constant 0 : i32
    %c0_i32_1 = arith.constant 0 : i32
    return %c0_i32, %c0_i32_0 : i32, i32
  }
  func.func @transform_4(%arg0: i32) -> (i32, i32) {
    %c0_i32 = arith.constant 0 : i32
    %c0_i32_0 = arith.constant 0 : i32
    %c0_i32_1 = arith.constant 0 : i32
    return %c0_i32, %c0_i32_0 : i32, i32
  }
  func.func @transform_5(%arg0: i32) -> (i32, i32) {
    %c0_i32 = arith.constant 0 : i32
    %c0_i32_0 = arith.constant 0 : i32
    %c0_i32_1 = arith.constant 0 : i32
    return %c0_i32, %c0_i32_0 : i32, i32
  }
  func.func @transform_6(%arg0: i32) -> (i32, i32) {
    %c0_i32 = arith.constant 0 : i32
    %c0_i32_0 = arith.constant 0 : i32
    %c0_i32_1 = arith.constant 0 : i32
    return %c0_i32, %c0_i32_0 : i32, i32
  }
  func.func @transform_7(%arg0: i32) -> (i32, i32) {
    %c0_i32 = arith.constant 0 : i32
    %c0_i32_0 = arith.constant 0 : i32
    return %arg0, %c0_i32 : i32, i32
  }
}

module attributes {stable_mosaic.version = 11 : i64} {
  func.func @_layernorm_kernel(%arg0: i32, %arg1: memref<18x32xf32, #tpu.memory_space<vmem>>, %arg2: memref<1x32xf32, #tpu.memory_space<vmem>>, %arg3: memref<1x32xf32, #tpu.memory_space<vmem>>, %arg4: memref<18x32xf32, #tpu.memory_space<vmem>>) attributes {dimension_semantics = [#tpu.dimension_semantics<parallel>], iteration_bounds = array<i64: 1>, scalar_prefetch = 0 : i64, scratch_operands = 0 : i64, tpu.core_type = #tpu.core_type<tc>, window_params = [{transform_indices = @transform_0, window_bounds = array<i64: 18, 32>}, {pipeline_mode = #tpu.pipeline_mode<synchronous>, transform_indices = @transform_1, window_bounds = array<i64: 1, 32>}, {pipeline_mode = #tpu.pipeline_mode<synchronous>, transform_indices = @transform_2, window_bounds = array<i64: 1, 32>}, {transform_indices = @transform_3, window_bounds = array<i64: 18, 32>}]} {
    %c0 = arith.constant 0 : index
    %c0_0 = arith.constant 0 : index
    %0 = vector.load %arg1[%c0, %c0_0] : memref<18x32xf32, #tpu.memory_space<vmem>>, vector<18x32xf32>
    %c0_1 = arith.constant 0 : index
    %c0_2 = arith.constant 0 : index
    %1 = vector.load %arg2[%c0_1, %c0_2] : memref<1x32xf32, #tpu.memory_space<vmem>>, vector<1x32xf32>
    %c0_3 = arith.constant 0 : index
    %c0_4 = arith.constant 0 : index
    %2 = vector.load %arg3[%c0_3, %c0_4] : memref<1x32xf32, #tpu.memory_space<vmem>>, vector<1x32xf32>
    %cst = arith.constant dense<0.000000e+00> : vector<18xf32>
    %3 = vector.multi_reduction <add>, %0, %cst [1] : vector<18x32xf32> to vector<18xf32>
    %4 = vector.shape_cast %3 : vector<18xf32> to vector<18x1xf32>
    %cst_5 = arith.constant 3.200000e+01 : f32
    %5 = vector.broadcast %cst_5 : f32 to vector<18x1xf32>
    %6 = arith.divf %4, %5 : vector<18x1xf32>
    %7 = vector.broadcast %6 : vector<18x1xf32> to vector<18x32xf32>
    %8 = arith.subf %0, %7 : vector<18x32xf32>
    %9 = arith.mulf %8, %8 : vector<18x32xf32>
    %cst_6 = arith.constant dense<0.000000e+00> : vector<18xf32>
    %10 = vector.multi_reduction <add>, %9, %cst_6 [1] : vector<18x32xf32> to vector<18xf32>
    %11 = vector.shape_cast %10 : vector<18xf32> to vector<18x1xf32>
    %cst_7 = arith.constant 3.200000e+01 : f32
    %12 = vector.broadcast %cst_7 : f32 to vector<18x1xf32>
    %13 = arith.divf %11, %12 : vector<18x1xf32>
    %14 = vector.broadcast %6 : vector<18x1xf32> to vector<18x32xf32>
    %15 = arith.subf %0, %14 : vector<18x32xf32>
    %cst_8 = arith.constant 9.99999974E-6 : f32
    %16 = vector.broadcast %cst_8 : f32 to vector<18x1xf32>
    %17 = arith.addf %13, %16 : vector<18x1xf32>
    %18 = math.rsqrt %17 : vector<18x1xf32>
    %19 = vector.broadcast %18 : vector<18x1xf32> to vector<18x32xf32>
    %20 = arith.mulf %15, %19 : vector<18x32xf32>
    %21 = vector.broadcast %1 : vector<1x32xf32> to vector<18x32xf32>
    %22 = arith.mulf %20, %21 : vector<18x32xf32>
    %23 = vector.broadcast %2 : vector<1x32xf32> to vector<18x32xf32>
    %24 = arith.addf %22, %23 : vector<18x32xf32>
    %c0_9 = arith.constant 0 : index
    %c0_10 = arith.constant 0 : index
    %25 = vector.load %arg4[%c0_9, %c0_10] : memref<18x32xf32, #tpu.memory_space<vmem>>, vector<18x32xf32>
    tpu.vector_store %arg4[%c0_9, %c0_10], %24 {strides = array<i32>} : memref<18x32xf32, #tpu.memory_space<vmem>>, vector<18x32xf32>,
    return
  }
  func.func @transform_0(%arg0: i32) -> (i32, i32) {
    %c0_i32 = arith.constant 0 : i32
    %c0_i32_0 = arith.constant 0 : i32
    return %arg0, %c0_i32 : i32, i32
  }
  func.func @transform_1(%arg0: i32) -> (i32, i32) {
    %c0_i32 = arith.constant 0 : i32
    %c0_i32_0 = arith.constant 0 : i32
    %c0_i32_1 = arith.constant 0 : i32
    return %c0_i32, %c0_i32_0 : i32, i32
  }
  func.func @transform_2(%arg0: i32) -> (i32, i32) {
    %c0_i32 = arith.constant 0 : i32
    %c0_i32_0 = arith.constant 0 : i32
    %c0_i32_1 = arith.constant 0 : i32
    return %c0_i32, %c0_i32_0 : i32, i32
  }
  func.func @transform_3(%arg0: i32) -> (i32, i32) {
    %c0_i32 = arith.constant 0 : i32
    %c0_i32_0 = arith.constant 0 : i32
    return %arg0, %c0_i32 : i32, i32
  }
}

module attributes {stable_mosaic.version = 11 : i64} {
  func.func @_linear_kernel(%arg0: i32, %arg1: memref<2x32xf32, #tpu.memory_space<vmem>>, %arg2: memref<32x18xbf16, #tpu.memory_space<vmem>>, %arg3: memref<1x18xf32, #tpu.memory_space<vmem>>, %arg4: memref<2x18xf32, #tpu.memory_space<vmem>>) attributes {dimension_semantics = [#tpu.dimension_semantics<parallel>], iteration_bounds = array<i64: 1>, scalar_prefetch = 0 : i64, scratch_operands = 0 : i64, tpu.core_type = #tpu.core_type<tc>, window_params = [{transform_indices = @transform_0, window_bounds = array<i64: 2, 32>}, {pipeline_mode = #tpu.pipeline_mode<synchronous>, transform_indices = @transform_1, window_bounds = array<i64: 32, 18>}, {pipeline_mode = #tpu.pipeline_mode<synchronous>, transform_indices = @transform_2, window_bounds = array<i64: 1, 18>}, {transform_indices = @transform_3, window_bounds = array<i64: 2, 18>}]} {
    %c0 = arith.constant 0 : index
    %c0_0 = arith.constant 0 : index
    %0 = vector.load %arg1[%c0, %c0_0] : memref<2x32xf32, #tpu.memory_space<vmem>>, vector<2x32xf32>
    %1 = arith.truncf %0 : vector<2x32xf32> to vector<2x32xbf16>
    %c0_1 = arith.constant 0 : index
    %c0_2 = arith.constant 0 : index
    %2 = vector.load %arg2[%c0_1, %c0_2] : memref<32x18xbf16, #tpu.memory_space<vmem>>, vector<32x18xbf16>
    %cst = arith.constant dense<0.000000e+00> : vector<2x18xf32>
    %3 = tpu.matmul %1, %2, %cst {dimension_numbers = #tpu.dot_dimension_numbers<[1], [0], [0], [1], [0, 0, 1, 1], [], []>} : vector<2x32xbf16>, vector<32x18xbf16>, vector<2x18xf32> -> vector<2x18xf32>
    %c0_3 = arith.constant 0 : index
    %c0_4 = arith.constant 0 : index
    %4 = vector.load %arg3[%c0_3, %c0_4] : memref<1x18xf32, #tpu.memory_space<vmem>>, vector<1x18xf32>
    %5 = vector.broadcast %4 : vector<1x18xf32> to vector<2x18xf32>
    %6 = arith.addf %3, %5 : vector<2x18xf32>
    %c0_5 = arith.constant 0 : index
    %c0_6 = arith.constant 0 : index
    %7 = vector.load %arg4[%c0_5, %c0_6] : memref<2x18xf32, #tpu.memory_space<vmem>>, vector<2x18xf32>
    tpu.vector_store %arg4[%c0_5, %c0_6], %6 {strides = array<i32>} : memref<2x18xf32, #tpu.memory_space<vmem>>, vector<2x18xf32>,
    return
  }
  func.func @transform_0(%arg0: i32) -> (i32, i32) {
    %c0_i32 = arith.constant 0 : i32
    %c0_i32_0 = arith.constant 0 : i32
    return %arg0, %c0_i32 : i32, i32
  }
  func.func @transform_1(%arg0: i32) -> (i32, i32) {
    %c0_i32 = arith.constant 0 : i32
    %c0_i32_0 = arith.constant 0 : i32
    %c0_i32_1 = arith.constant 0 : i32
    return %c0_i32, %c0_i32_0 : i32, i32
  }
  func.func @transform_2(%arg0: i32) -> (i32, i32) {
    %c0_i32 = arith.constant 0 : i32
    %c0_i32_0 = arith.constant 0 : i32
    %c0_i32_1 = arith.constant 0 : i32
    return %c0_i32, %c0_i32_0 : i32, i32
  }
  func.func @transform_3(%arg0: i32) -> (i32, i32) {
    %c0_i32 = arith.constant 0 : i32
    %c0_i32_0 = arith.constant 0 : i32
    return %arg0, %c0_i32 : i32, i32
  }
}

</mosaic_0001>

<llo_original>
// kernel: forward.21
$region0: #{forward.21}
  #allocation0 [shape = 'u32[]', space=smem, size = 0x4, offset = 0x4, fixed_abs, tag = 'smem constant byte address 0x4 - core index']
  #allocation1 [shape = 'u32[144,128]{1,0:T(1,128)}', space=vmem, size = 0x12000, scoped, tag = 'internal scratch']
  %s0 = inlined_call_operand.vmem [shape: f32[72,16], index: 0, kind: input, shape index: {}]
  %s1 = inlined_call_operand.vmem [shape: f32[1,16], index: 1, kind: input, shape index: {}]
  %s2 = inlined_call_operand.vmem [shape: f32[1,16], index: 2, kind: input, shape index: {}]
  %s3 = inlined_call_operand.vmem [shape: bf16[16,48], index: 3, kind: input, shape index: {}]
  %s4 = inlined_call_operand.vmem [shape: f32[1,48], index: 4, kind: input, shape index: {}]
  %s5 = inlined_call_operand.vmem [shape: f32[72,48], index: 5, kind: output, shape index: {}]
  %s6 = sld [smem:[#allocation0]]
  $region30: #{forward.21} parent=0
    _
  %s8 = ssub.s32 1, %s6
  %s9 = scalar_select 0, %s8, %s6
  // Predicated region
  $region2: #{forward.21} parent=0 // pred_check
    _
  $region3: #{forward.21} parent=0 // pred_check_branch
    %11 = sbr.rel (0) target = $region5
  $region4: #{forward.21} parent=0 // pred_region
    _
  $region5: #{forward.21} parent=0 // pred_fallthru
    _
  // Predicated region
  $region6: #{forward.21} parent=0 // pred_check
    _
  $region7: #{forward.21} parent=0 // pred_check_branch
    %13 = sbr.rel (0) target = $region9
  $region8: #{forward.21} parent=0 // pred_region
    _
  $region9: #{forward.21} parent=0 // pred_fallthru
    _
  // Predicated region
  $region10: #{forward.21} parent=0 // pred_check
    _
  $region11: #{forward.21} parent=0 // pred_check_branch
    %15 = sbr.rel (0) target = $region13
  $region12: #{forward.21} parent=0 // pred_region
    _
  $region13: #{forward.21} parent=0 // pred_fallthru
    _
  // Predicated region
  $region14: #{forward.21} parent=0 // pred_check
    _
  $region15: #{forward.21} parent=0 // pred_check_branch
    %17 = sbr.rel (0) target = $region17
  $region16: #{forward.21} parent=0 // pred_region
    _
  $region17: #{forward.21} parent=0 // pred_fallthru
    _
  // Predicated region
  $region18: #{forward.21} parent=0 // pred_check
    _
  $region19: #{forward.21} parent=0 // pred_check_branch
    %19 = sbr.rel (0) target = $region21
  $region20: #{forward.21} parent=0 // pred_region
    _
  $region21: #{forward.21} parent=0 // pred_fallthru
    _
  %v21 = vld [vmem:[%s0] sm:$0xff]
  %v22 = vld [vmem:[%s0 + $0x8] sm:$0xff]
  %v23 = vld [vmem:[%s0 + $0x10] sm:$0xff]
  %v24 = vld [vmem:[%s0 + $0x18] sm:$0xff]
  %v25 = vld [vmem:[%s0 + $0x20] sm:$0xff]
  %v26 = vld [vmem:[%s0 + $0x28] sm:$0xff]
  %v27 = vld [vmem:[%s0 + $0x30] sm:$0xff]
  %v28 = vld [vmem:[%s0 + $0x38] sm:$0xff]
  %v29 = vld [vmem:[%s0 + $0x40] sm:$0xff]
  %v30 = vld [vmem:[%s1] sm:$0x1]
  %v31 = vld [vmem:[%s2] sm:$0x1]
  %vm32 = vcmask 130048
  %v33 = vsel %vm32, %v21, 0.0
  %34 = vadd.xlane.f32.xlu0 %v33
  %v35 = vpop.xlane.xlu0 %34
  %v36 = vsel %vm32, %v22, 0.0
  %37 = vadd.xlane.f32.xlu0 %v36
  %v38 = vpop.xlane.xlu0 %37
  %v39 = vsel %vm32, %v23, 0.0
  %40 = vadd.xlane.f32.xlu0 %v39
  %v41 = vpop.xlane.xlu0 %40
  %v42 = vsel %vm32, %v24, 0.0
  %43 = vadd.xlane.f32.xlu0 %v42
  %v44 = vpop.xlane.xlu0 %43
  %v45 = vsel %vm32, %v25, 0.0
  %46 = vadd.xlane.f32.xlu0 %v45
  %v47 = vpop.xlane.xlu0 %46
  %v48 = vsel %vm32, %v26, 0.0
  %49 = vadd.xlane.f32.xlu0 %v48
  %v50 = vpop.xlane.xlu0 %49
  %v51 = vsel %vm32, %v27, 0.0
  %52 = vadd.xlane.f32.xlu0 %v51
  %v53 = vpop.xlane.xlu0 %52
  %v54 = vsel %vm32, %v28, 0.0
  %55 = vadd.xlane.f32.xlu0 %v54
  %v56 = vpop.xlane.xlu0 %55
  %v57 = vsel %vm32, %v29, 0.0
  %58 = vadd.xlane.f32.xlu0 %v57
  %v59 = vpop.xlane.xlu0 %58
  %v60 = vrcp.pop 16.0
  %v61 = vmul.f32 %v35, %v60
  %v62 = vmul.f32 %v38, %v60
  %v63 = vmul.f32 %v41, %v60
  %v64 = vmul.f32 %v44, %v60
  %v65 = vmul.f32 %v47, %v60
  %v66 = vmul.f32 %v50, %v60
  %v67 = vmul.f32 %v53, %v60
  %v68 = vmul.f32 %v56, %v60
  %v69 = vmul.f32 %v59, %v60
  %v70 = vsub.f32 %v21, %v61
  %v71 = vsub.f32 %v22, %v62
  %v72 = vsub.f32 %v23, %v63
  %v73 = vsub.f32 %v24, %v64
  %v74 = vsub.f32 %v25, %v65
  %v75 = vsub.f32 %v26, %v66
  %v76 = vsub.f32 %v27, %v67
  %v77 = vsub.f32 %v28, %v68
  %v78 = vsub.f32 %v29, %v69
  %v79 = vmul.f32 %v70, %v70
  %v80 = vmul.f32 %v71, %v71
  %v81 = vmul.f32 %v72, %v72
  %v82 = vmul.f32 %v73, %v73
  %v83 = vmul.f32 %v74, %v74
  %v84 = vmul.f32 %v75, %v75
  %v85 = vmul.f32 %v76, %v76
  %v86 = vmul.f32 %v77, %v77
  %v87 = vmul.f32 %v78, %v78
  %v88 = vsel %vm32, %v79, 0.0
  %89 = vadd.xlane.f32.xlu0 %v88
  %v90 = vpop.xlane.xlu0 %89
  %v91 = vsel %vm32, %v80, 0.0
  %92 = vadd.xlane.f32.xlu0 %v91
  %v93 = vpop.xlane.xlu0 %92
  %v94 = vsel %vm32, %v81, 0.0
  %95 = vadd.xlane.f32.xlu0 %v94
  %v96 = vpop.xlane.xlu0 %95
  %v97 = vsel %vm32, %v82, 0.0
  %98 = vadd.xlane.f32.xlu0 %v97
  %v99 = vpop.xlane.xlu0 %98
  %v100 = vsel %vm32, %v83, 0.0
  %101 = vadd.xlane.f32.xlu0 %v100
  %v102 = vpop.xlane.xlu0 %101
  %v103 = vsel %vm32, %v84, 0.0
  %104 = vadd.xlane.f32.xlu0 %v103
  %v105 = vpop.xlane.xlu0 %104
  %v106 = vsel %vm32, %v85, 0.0
  %107 = vadd.xlane.f32.xlu0 %v106
  %v108 = vpop.xlane.xlu0 %107
  %v109 = vsel %vm32, %v86, 0.0
  %110 = vadd.xlane.f32.xlu0 %v109
  %v111 = vpop.xlane.xlu0 %110
  %v112 = vsel %vm32, %v87, 0.0
  %113 = vadd.xlane.f32.xlu0 %v112
  %v114 = vpop.xlane.xlu0 %113
  %v115 = vmul.f32 %v90, %v60
  %v116 = vmul.f32 %v93, %v60
  %v117 = vmul.f32 %v96, %v60
  %v118 = vmul.f32 %v99, %v60
  %v119 = vmul.f32 %v102, %v60
  %v120 = vmul.f32 %v105, %v60
  %v121 = vmul.f32 %v108, %v60
  %v122 = vmul.f32 %v111, %v60
  %v123 = vmul.f32 %v114, %v60
  %v124 = vadd.f32 %v115, 1e-05
  %v125 = vadd.f32 %v116, 1e-05
  %v126 = vadd.f32 %v117, 1e-05
  %v127 = vadd.f32 %v118, 1e-05
  %v128 = vadd.f32 %v119, 1e-05
  %v129 = vadd.f32 %v120, 1e-05
  %v130 = vadd.f32 %v121, 1e-05
  %v131 = vadd.f32 %v122, 1e-05
  %v132 = vadd.f32 %v123, 1e-05
  %v133 = vrsqrt.pop %v124
  %v134 = vrsqrt.pop %v125
  %v135 = vrsqrt.pop %v126
  %v136 = vrsqrt.pop %v127
  %v137 = vrsqrt.pop %v128
  %v138 = vrsqrt.pop %v129
  %v139 = vrsqrt.pop %v130
  %v140 = vrsqrt.pop %v131
  %v141 = vrsqrt.pop %v132
  %v142 = vmul.f32 %v70, %v133
  %v143 = vmul.f32 %v71, %v134
  %v144 = vmul.f32 %v72, %v135
  %v145 = vmul.f32 %v73, %v136
  %v146 = vmul.f32 %v74, %v137
  %v147 = vmul.f32 %v75, %v138
  %v148 = vmul.f32 %v76, %v139
  %v149 = vmul.f32 %v77, %v140
  %v150 = vmul.f32 %v78, %v141
  %v152 = vlaneseq
  %v153 = vshrl.u32 %v152, 7
  %v154 = vsub.s32 0, %v153
  %v155 = vrot.slane %v30, %v154
  %v157 = vmul.f32 %v142, %v155
  %v158 = vmul.f32 %v143, %v155
  %v159 = vmul.f32 %v144, %v155
  %v160 = vmul.f32 %v145, %v155
  %v161 = vmul.f32 %v146, %v155
  %v162 = vmul.f32 %v147, %v155
  %v163 = vmul.f32 %v148, %v155
  %v164 = vmul.f32 %v149, %v155
  %v165 = vmul.f32 %v150, %v155
  %v167 = vlaneseq
  %v168 = vshrl.u32 %v167, 7
  %v169 = vsub.s32 0, %v168
  %v170 = vrot.slane %v31, %v169
  %v172 = vadd.f32 %v157, %v170
  %v173 = vadd.f32 %v158, %v170
  %v174 = vadd.f32 %v159, %v170
  %v175 = vadd.f32 %v160, %v170
  %v176 = vadd.f32 %v161, %v170
  %v177 = vadd.f32 %v162, %v170
  %v178 = vadd.f32 %v163, %v170
  %v179 = vadd.f32 %v164, %v170
  %v180 = vadd.f32 %v165, %v170
  %v181 = vpack.c.bf16 %v173, %v172
  %v182 = vpack.c.bf16 %v175, %v174
  %v183 = vpack.c.bf16 %v177, %v176
  %v184 = vpack.c.bf16 %v179, %v178
  %v185 = vpack.c.bf16 %v180, %v180
  %v186 = vld [vmem:[%s3] sm:$0xf]
  %v187 = vld [vmem:[%s3 + $0x4] sm:$0xf]
  %v188 = vld [vmem:[%s4] sm:$0x1]
  %v190 = vlaneseq
  %v191 = vshrl.u32 %v190, 7
  %v192 = vsub.s32 0, %v191
  %v193 = vrot.slane %v188, %v192
  %v197 = vunpack.c.l.b16 %v186
  %v198 = vunpack.c.l.b16 %v187
  %v199 = vpack.c.b16 %v198, %v197
  %v202 = vsel %vm32, %v181, 0
  %v205 = vsel %vm32, %v182, 0
  %v208 = vsel %vm32, %v183, 0
  %v211 = vsel %vm32, %v184, 0
  %v214 = vsel %vm32, %v185, 0
  %216 = vmatprep.subr.bf16.mxu0 0
  %217 = vmatpush1.bf16.msra.mxu0 0
  %218 = vmatprep.subr.bf16.mxu0 0
  %219 = vmatpush1.bf16.msra.mxu0 0
  %220 = vmatprep.subr.bf16.mxu0 0
  %221 = vmatpush1.bf16.msra.mxu0 0
  %222 = vmatprep.subr.bf16.mxu0 0
  %223 = vmatpush1.bf16.msra.mxu0 0
  %224 = vmatprep.subr.bf16.mxu0 0
  %225 = vmatpush1.bf16.msra.mxu0 0
  %226 = vmatprep.subr.bf16.mxu0 0
  %227 = vmatpush1.bf16.msra.mxu0 0
  %228 = vmatprep.subr.bf16.mxu0 0
  %229 = vmatpush1.bf16.msra.mxu0 0
  %230 = vmatprep.subr.bf16.mxu0 0
  %231 = vmatpush1.bf16.msra.mxu0 %v199
  %232 = vmatprep.subr.bf16.mxu0 0
  %233 = vmatpush2.bf16.msra.mxu0 0
  %234 = vmatprep.subr.bf16.mxu0 0
  %235 = vmatpush2.bf16.msra.mxu0 0
  %236 = vmatprep.subr.bf16.mxu0 0
  %237 = vmatpush2.bf16.msra.mxu0 0
  %238 = vmatprep.subr.bf16.mxu0 0
  %239 = vmatpush2.bf16.msra.mxu0 0
  %240 = vmatprep.subr.bf16.mxu0 0
  %241 = vmatpush2.bf16.msra.mxu0 0
  %242 = vmatprep.subr.bf16.mxu0 0
  %243 = vmatpush2.bf16.msra.mxu0 0
  %244 = vmatprep.subr.bf16.mxu0 0
  %245 = vmatpush2.bf16.msra.mxu0 0
  %246 = vmatprep.subr.bf16.mxu0 0
  %247 = vmatpush2.bf16.msra.mxu0 0
  %248 = vmatprep.mubr.bf16.mxu0 0
  %249 = vmatmul.mubr.bf16.gmra.mxu0 %v202
  %v250 = vpop.f32.mrf.mxu0
  %v251 = vadd.f32 %v193, %v250
  %v252 = vpop.f32.mrf.mxu0
  %v253 = vpop.f32.mrf.mxu0
  %v254 = vadd.f32 %v193, %v253
  %v255 = vpop.f32.mrf.mxu0
  %256 = vmatprep.mubr.bf16.mxu0 0
  %257 = vmatmul.mubr.bf16.gmra.mxu0 %v205
  %v258 = vpop.f32.mrf.mxu0
  %v259 = vadd.f32 %v193, %v258
  %v260 = vpop.f32.mrf.mxu0
  %v261 = vpop.f32.mrf.mxu0
  %v262 = vadd.f32 %v193, %v261
  %v263 = vpop.f32.mrf.mxu0
  %264 = vmatprep.mubr.bf16.mxu0 0
  %265 = vmatmul.mubr.bf16.gmra.mxu0 %v208
  %v266 = vpop.f32.mrf.mxu0
  %v267 = vadd.f32 %v193, %v266
  %v268 = vpop.f32.mrf.mxu0
  %v269 = vpop.f32.mrf.mxu0
  %v270 = vadd.f32 %v193, %v269
  %v271 = vpop.f32.mrf.mxu0
  %272 = vmatprep.mubr.bf16.mxu0 0
  %273 = vmatmul.mubr.bf16.gmra.mxu0 %v211
  %v274 = vpop.f32.mrf.mxu0
  %v275 = vadd.f32 %v193, %v274
  %v276 = vpop.f32.mrf.mxu0
  %v277 = vpop.f32.mrf.mxu0
  %v278 = vadd.f32 %v193, %v277
  %v279 = vpop.f32.mrf.mxu0
  %280 = vmatprep.mubr.bf16.mxu0 0
  %281 = vmatmul.mubr.bf16.gmra.mxu0 %v214
  %v282 = vpop.f32.mrf.mxu0
  %v283 = vadd.f32 %v193, %v282
  %v284 = vpop.f32.mrf.mxu0
  %v285 = vpop.f32.mrf.mxu0
  %v286 = vpop.f32.mrf.mxu0
  %287 = vdwg.mxu0
  %vm288 = vcmask 392192
  %289 = vst.msk [vmem:[%s5] sm:$0xff] %vm288, %v251
  %290 = vst.msk [vmem:[%s5 + $0x8] sm:$0xff] %vm288, %v254
  %291 = vst.msk [vmem:[%s5 + $0x10] sm:$0xff] %vm288, %v259
  %292 = vst.msk [vmem:[%s5 + $0x18] sm:$0xff] %vm288, %v262
  %293 = vst.msk [vmem:[%s5 + $0x20] sm:$0xff] %vm288, %v267
  %294 = vst.msk [vmem:[%s5 + $0x28] sm:$0xff] %vm288, %v270
  %295 = vst.msk [vmem:[%s5 + $0x30] sm:$0xff] %vm288, %v275
  %296 = vst.msk [vmem:[%s5 + $0x38] sm:$0xff] %vm288, %v278
  %297 = vst.msk [vmem:[%s5 + $0x40] sm:$0xff] %vm288, %v283
  // Predicated region
  $region22: #{forward.21} parent=0 // pred_check
    _
  $region23: #{forward.21} parent=0 // pred_check_branch
    %299 = sbr.rel (0) target = $region25
  $region24: #{forward.21} parent=0 // pred_region
    _
  $region25: #{forward.21} parent=0 // pred_fallthru
    _
  // Predicated region
  $region26: #{forward.21} parent=0 // pred_check
    _
  $region27: #{forward.21} parent=0 // pred_check_branch
    %301 = sbr.rel (0) target = $region29
  $region28: #{forward.21} parent=0 // pred_region
    _
  $region29: #{forward.21} parent=0 // pred_fallthru
    _

// kernel: forward.20
$region0: #{forward.20}
  #allocation0 [shape = 'u32[]', space=smem, size = 0x4, offset = 0x4, fixed_abs, tag = 'smem constant byte address 0x4 - core index']
  #allocation1 [shape = 'u32[144,128]{1,0:T(1,128)}', space=vmem, size = 0x12000, scoped, tag = 'internal scratch']
  %s0 = inlined_call_operand.vmem [shape: f32[72,48], index: 0, kind: input, shape index: {}]
  %s1 = inlined_call_operand.vmem [shape: bf16[48,16], index: 1, kind: input, shape index: {}]
  %s2 = inlined_call_operand.vmem [shape: f32[1,16], index: 2, kind: input, shape index: {}]
  %s3 = inlined_call_operand.vmem [shape: f32[1,16], index: 3, kind: input, shape index: {}]
  %s4 = inlined_call_operand.vmem [shape: f32[1,16], index: 4, kind: input, shape index: {}]
  %s5 = inlined_call_operand.vmem [shape: f32[72,16], index: 5, kind: output, shape index: {}]
  %s6 = sld [smem:[#allocation0]]
  $region30: #{forward.20} parent=0
    _
  %s8 = ssub.s32 1, %s6
  %s9 = scalar_select 0, %s8, %s6
  // Predicated region
  $region2: #{forward.20} parent=0 // pred_check
    _
  $region3: #{forward.20} parent=0 // pred_check_branch
    %11 = sbr.rel (0) target = $region5
  $region4: #{forward.20} parent=0 // pred_region
    _
  $region5: #{forward.20} parent=0 // pred_fallthru
    _
  // Predicated region
  $region6: #{forward.20} parent=0 // pred_check
    _
  $region7: #{forward.20} parent=0 // pred_check_branch
    %13 = sbr.rel (0) target = $region9
  $region8: #{forward.20} parent=0 // pred_region
    _
  $region9: #{forward.20} parent=0 // pred_fallthru
    _
  // Predicated region
  $region10: #{forward.20} parent=0 // pred_check
    _
  $region11: #{forward.20} parent=0 // pred_check_branch
    %15 = sbr.rel (0) target = $region13
  $region12: #{forward.20} parent=0 // pred_region
    _
  $region13: #{forward.20} parent=0 // pred_fallthru
    _
  // Predicated region
  $region14: #{forward.20} parent=0 // pred_check
    _
  $region15: #{forward.20} parent=0 // pred_check_branch
    %17 = sbr.rel (0) target = $region17
  $region16: #{forward.20} parent=0 // pred_region
    _
  $region17: #{forward.20} parent=0 // pred_fallthru
    _
  // Predicated region
  $region18: #{forward.20} parent=0 // pred_check
    _
  $region19: #{forward.20} parent=0 // pred_check_branch
    %19 = sbr.rel (0) target = $region21
  $region20: #{forward.20} parent=0 // pred_region
    _
  $region21: #{forward.20} parent=0 // pred_fallthru
    _
  %v21 = vld [vmem:[%s0] sm:$0xff]
  %v22 = vld [vmem:[%s0 + $0x8] sm:$0xff]
  %v23 = vld [vmem:[%s0 + $0x10] sm:$0xff]
  %v24 = vld [vmem:[%s0 + $0x18] sm:$0xff]
  %v25 = vld [vmem:[%s0 + $0x20] sm:$0xff]
  %v26 = vld [vmem:[%s0 + $0x28] sm:$0xff]
  %v27 = vld [vmem:[%s0 + $0x30] sm:$0xff]
  %v28 = vld [vmem:[%s0 + $0x38] sm:$0xff]
  %v29 = vld [vmem:[%s0 + $0x40] sm:$0xff]
  %v30 = vpack.c.bf16 %v22, %v21
  %v31 = vpack.c.bf16 %v24, %v23
  %v32 = vpack.c.bf16 %v26, %v25
  %v33 = vpack.c.bf16 %v28, %v27
  %v34 = vpack.c.bf16 %v29, %v29
  %v35 = vld [vmem:[%s1] sm:$0xf]
  %v36 = vld [vmem:[%s1 + $0x4] sm:$0xf]
  %v37 = vld [vmem:[%s1 + $0x8] sm:$0xf]
  %v38 = vld [vmem:[%s1 + $0xc] sm:$0xf]
  %v39 = vld [vmem:[%s1 + $0x10] sm:$0xf]
  %v40 = vld [vmem:[%s1 + $0x14] sm:$0xf]
  %v41 = vld [vmem:[%s2] sm:$0x1]
  %v43 = vlaneseq
  %v44 = vshrl.u32 %v43, 7
  %v45 = vsub.s32 0, %v44
  %v46 = vrot.slane %v41, %v45
  %v54 = vunpack.c.l.b16 %v35
  %v55 = vunpack.c.l.b16 %v36
  %v56 = vunpack.c.l.b16 %v37
  %v57 = vunpack.c.l.b16 %v38
  %v58 = vunpack.c.l.b16 %v39
  %v59 = vunpack.c.l.b16 %v40
  %v60 = vpack.c.b16 %v55, %v54
  %v61 = vpack.c.b16 %v57, %v56
  %v62 = vpack.c.b16 %v59, %v58
  %vm66 = vcmask 392192
  %v68 = vsel %vm66, %v30, 0
  %v71 = vsel %vm66, %v31, 0
  %v74 = vsel %vm66, %v32, 0
  %v77 = vsel %vm66, %v33, 0
  %v80 = vsel %vm66, %v34, 0
  %82 = vmatprep.subr.bf16.mxu0 0
  %83 = vmatpush1.bf16.msra.mxu0 0
  %84 = vmatprep.subr.bf16.mxu0 0
  %85 = vmatpush1.bf16.msra.mxu0 0
  %86 = vmatprep.subr.bf16.mxu0 0
  %87 = vmatpush1.bf16.msra.mxu0 0
  %88 = vmatprep.subr.bf16.mxu0 0
  %89 = vmatpush1.bf16.msra.mxu0 0
  %90 = vmatprep.subr.bf16.mxu0 0
  %91 = vmatpush1.bf16.msra.mxu0 0
  %92 = vmatprep.subr.bf16.mxu0 0
  %93 = vmatpush1.bf16.msra.mxu0 %v62
  %94 = vmatprep.subr.bf16.mxu0 0
  %95 = vmatpush1.bf16.msra.mxu0 %v61
  %96 = vmatprep.subr.bf16.mxu0 0
  %97 = vmatpush1.bf16.msra.mxu0 %v60
  %98 = vmatprep.subr.bf16.mxu0 0
  %99 = vmatpush2.bf16.msra.mxu0 0
  %100 = vmatprep.subr.bf16.mxu0 0
  %101 = vmatpush2.bf16.msra.mxu0 0
  %102 = vmatprep.subr.bf16.mxu0 0
  %103 = vmatpush2.bf16.msra.mxu0 0
  %104 = vmatprep.subr.bf16.mxu0 0
  %105 = vmatpush2.bf16.msra.mxu0 0
  %106 = vmatprep.subr.bf16.mxu0 0
  %107 = vmatpush2.bf16.msra.mxu0 0
  %108 = vmatprep.subr.bf16.mxu0 0
  %109 = vmatpush2.bf16.msra.mxu0 0
  %110 = vmatprep.subr.bf16.mxu0 0
  %111 = vmatpush2.bf16.msra.mxu0 0
  %112 = vmatprep.subr.bf16.mxu0 0
  %113 = vmatpush2.bf16.msra.mxu0 0
  %114 = vmatprep.mubr.bf16.mxu0 0
  %115 = vmatmul.mubr.bf16.gmra.mxu0 %v68
  %v116 = vpop.f32.mrf.mxu0
  %v117 = vadd.f32 %v46, %v116
  %v118 = vpop.f32.mrf.mxu0
  %v119 = vpop.f32.mrf.mxu0
  %v120 = vadd.f32 %v46, %v119
  %v121 = vpop.f32.mrf.mxu0
  %122 = vmatprep.mubr.bf16.mxu0 0
  %123 = vmatmul.mubr.bf16.gmra.mxu0 %v71
  %v124 = vpop.f32.mrf.mxu0
  %v125 = vadd.f32 %v46, %v124
  %v126 = vpop.f32.mrf.mxu0
  %v127 = vpop.f32.mrf.mxu0
  %v128 = vadd.f32 %v46, %v127
  %v129 = vpop.f32.mrf.mxu0
  %130 = vmatprep.mubr.bf16.mxu0 0
  %131 = vmatmul.mubr.bf16.gmra.mxu0 %v74
  %v132 = vpop.f32.mrf.mxu0
  %v133 = vadd.f32 %v46, %v132
  %v134 = vpop.f32.mrf.mxu0
  %v135 = vpop.f32.mrf.mxu0
  %v136 = vadd.f32 %v46, %v135
  %v137 = vpop.f32.mrf.mxu0
  %138 = vmatprep.mubr.bf16.mxu0 0
  %139 = vmatmul.mubr.bf16.gmra.mxu0 %v77
  %v140 = vpop.f32.mrf.mxu0
  %v141 = vadd.f32 %v46, %v140
  %v142 = vpop.f32.mrf.mxu0
  %v143 = vpop.f32.mrf.mxu0
  %v144 = vadd.f32 %v46, %v143
  %v145 = vpop.f32.mrf.mxu0
  %146 = vmatprep.mubr.bf16.mxu0 0
  %147 = vmatmul.mubr.bf16.gmra.mxu0 %v80
  %v148 = vpop.f32.mrf.mxu0
  %v149 = vadd.f32 %v46, %v148
  %v150 = vpop.f32.mrf.mxu0
  %v151 = vpop.f32.mrf.mxu0
  %v152 = vpop.f32.mrf.mxu0
  %153 = vdwg.mxu0
  %v154 = vld [vmem:[%s3] sm:$0x1]
  %v155 = vld [vmem:[%s4] sm:$0x1]
  %vm156 = vcmask 130048
  %v157 = vsel %vm156, %v117, 0.0
  %158 = vadd.xlane.f32.xlu0 %v157
  %v159 = vpop.xlane.xlu0 %158
  %v160 = vsel %vm156, %v120, 0.0
  %161 = vadd.xlane.f32.xlu0 %v160
  %v162 = vpop.xlane.xlu0 %161
  %v163 = vsel %vm156, %v125, 0.0
  %164 = vadd.xlane.f32.xlu0 %v163
  %v165 = vpop.xlane.xlu0 %164
  %v166 = vsel %vm156, %v128, 0.0
  %167 = vadd.xlane.f32.xlu0 %v166
  %v168 = vpop.xlane.xlu0 %167
  %v169 = vsel %vm156, %v133, 0.0
  %170 = vadd.xlane.f32.xlu0 %v169
  %v171 = vpop.xlane.xlu0 %170
  %v172 = vsel %vm156, %v136, 0.0
  %173 = vadd.xlane.f32.xlu0 %v172
  %v174 = vpop.xlane.xlu0 %173
  %v175 = vsel %vm156, %v141, 0.0
  %176 = vadd.xlane.f32.xlu0 %v175
  %v177 = vpop.xlane.xlu0 %176
  %v178 = vsel %vm156, %v144, 0.0
  %179 = vadd.xlane.f32.xlu0 %v178
  %v180 = vpop.xlane.xlu0 %179
  %v181 = vsel %vm156, %v149, 0.0
  %182 = vadd.xlane.f32.xlu0 %v181
  %v183 = vpop.xlane.xlu0 %182
  %v184 = vrcp.pop 16.0
  %v185 = vmul.f32 %v159, %v184
  %v186 = vmul.f32 %v162, %v184
  %v187 = vmul.f32 %v165, %v184
  %v188 = vmul.f32 %v168, %v184
  %v189 = vmul.f32 %v171, %v184
  %v190 = vmul.f32 %v174, %v184
  %v191 = vmul.f32 %v177, %v184
  %v192 = vmul.f32 %v180, %v184
  %v193 = vmul.f32 %v183, %v184
  %v194 = vsub.f32 %v117, %v185
  %v195 = vsub.f32 %v120, %v186
  %v196 = vsub.f32 %v125, %v187
  %v197 = vsub.f32 %v128, %v188
  %v198 = vsub.f32 %v133, %v189
  %v199 = vsub.f32 %v136, %v190
  %v200 = vsub.f32 %v141, %v191
  %v201 = vsub.f32 %v144, %v192
  %v202 = vsub.f32 %v149, %v193
  %v203 = vmul.f32 %v194, %v194
  %v204 = vmul.f32 %v195, %v195
  %v205 = vmul.f32 %v196, %v196
  %v206 = vmul.f32 %v197, %v197
  %v207 = vmul.f32 %v198, %v198
  %v208 = vmul.f32 %v199, %v199
  %v209 = vmul.f32 %v200, %v200
  %v210 = vmul.f32 %v201, %v201
  %v211 = vmul.f32 %v202, %v202
  %v212 = vsel %vm156, %v203, 0.0
  %213 = vadd.xlane.f32.xlu0 %v212
  %v214 = vpop.xlane.xlu0 %213
  %v215 = vsel %vm156, %v204, 0.0
  %216 = vadd.xlane.f32.xlu0 %v215
  %v217 = vpop.xlane.xlu0 %216
  %v218 = vsel %vm156, %v205, 0.0
  %219 = vadd.xlane.f32.xlu0 %v218
  %v220 = vpop.xlane.xlu0 %219
  %v221 = vsel %vm156, %v206, 0.0
  %222 = vadd.xlane.f32.xlu0 %v221
  %v223 = vpop.xlane.xlu0 %222
  %v224 = vsel %vm156, %v207, 0.0
  %225 = vadd.xlane.f32.xlu0 %v224
  %v226 = vpop.xlane.xlu0 %225
  %v227 = vsel %vm156, %v208, 0.0
  %228 = vadd.xlane.f32.xlu0 %v227
  %v229 = vpop.xlane.xlu0 %228
  %v230 = vsel %vm156, %v209, 0.0
  %231 = vadd.xlane.f32.xlu0 %v230
  %v232 = vpop.xlane.xlu0 %231
  %v233 = vsel %vm156, %v210, 0.0
  %234 = vadd.xlane.f32.xlu0 %v233
  %v235 = vpop.xlane.xlu0 %234
  %v236 = vsel %vm156, %v211, 0.0
  %237 = vadd.xlane.f32.xlu0 %v236
  %v238 = vpop.xlane.xlu0 %237
  %v239 = vmul.f32 %v214, %v184
  %v240 = vmul.f32 %v217, %v184
  %v241 = vmul.f32 %v220, %v184
  %v242 = vmul.f32 %v223, %v184
  %v243 = vmul.f32 %v226, %v184
  %v244 = vmul.f32 %v229, %v184
  %v245 = vmul.f32 %v232, %v184
  %v246 = vmul.f32 %v235, %v184
  %v247 = vmul.f32 %v238, %v184
  %v248 = vadd.f32 %v239, 1e-05
  %v249 = vadd.f32 %v240, 1e-05
  %v250 = vadd.f32 %v241, 1e-05
  %v251 = vadd.f32 %v242, 1e-05
  %v252 = vadd.f32 %v243, 1e-05
  %v253 = vadd.f32 %v244, 1e-05
  %v254 = vadd.f32 %v245, 1e-05
  %v255 = vadd.f32 %v246, 1e-05
  %v256 = vadd.f32 %v247, 1e-05
  %v257 = vrsqrt.pop %v248
  %v258 = vrsqrt.pop %v249
  %v259 = vrsqrt.pop %v250
  %v260 = vrsqrt.pop %v251
  %v261 = vrsqrt.pop %v252
  %v262 = vrsqrt.pop %v253
  %v263 = vrsqrt.pop %v254
  %v264 = vrsqrt.pop %v255
  %v265 = vrsqrt.pop %v256
  %v266 = vmul.f32 %v194, %v257
  %v267 = vmul.f32 %v195, %v258
  %v268 = vmul.f32 %v196, %v259
  %v269 = vmul.f32 %v197, %v260
  %v270 = vmul.f32 %v198, %v261
  %v271 = vmul.f32 %v199, %v262
  %v272 = vmul.f32 %v200, %v263
  %v273 = vmul.f32 %v201, %v264
  %v274 = vmul.f32 %v202, %v265
  %v276 = vlaneseq
  %v277 = vshrl.u32 %v276, 7
  %v278 = vsub.s32 0, %v277
  %v279 = vrot.slane %v154, %v278
  %v281 = vmul.f32 %v266, %v279
  %v282 = vmul.f32 %v267, %v279
  %v283 = vmul.f32 %v268, %v279
  %v284 = vmul.f32 %v269, %v279
  %v285 = vmul.f32 %v270, %v279
  %v286 = vmul.f32 %v271, %v279
  %v287 = vmul.f32 %v272, %v279
  %v288 = vmul.f32 %v273, %v279
  %v289 = vmul.f32 %v274, %v279
  %v291 = vlaneseq
  %v292 = vshrl.u32 %v291, 7
  %v293 = vsub.s32 0, %v292
  %v294 = vrot.slane %v155, %v293
  %v296 = vadd.f32 %v281, %v294
  %v297 = vadd.f32 %v282, %v294
  %v298 = vadd.f32 %v283, %v294
  %v299 = vadd.f32 %v284, %v294
  %v300 = vadd.f32 %v285, %v294
  %v301 = vadd.f32 %v286, %v294
  %v302 = vadd.f32 %v287, %v294
  %v303 = vadd.f32 %v288, %v294
  %v304 = vadd.f32 %v289, %v294
  %305 = vst.msk [vmem:[%s5] sm:$0xff] %vm156, %v296
  %306 = vst.msk [vmem:[%s5 + $0x8] sm:$0xff] %vm156, %v297
  %307 = vst.msk [vmem:[%s5 + $0x10] sm:$0xff] %vm156, %v298
  %308 = vst.msk [vmem:[%s5 + $0x18] sm:$0xff] %vm156, %v299
  %309 = vst.msk [vmem:[%s5 + $0x20] sm:$0xff] %vm156, %v300
  %310 = vst.msk [vmem:[%s5 + $0x28] sm:$0xff] %vm156, %v301
  %311 = vst.msk [vmem:[%s5 + $0x30] sm:$0xff] %vm156, %v302
  %312 = vst.msk [vmem:[%s5 + $0x38] sm:$0xff] %vm156, %v303
  %313 = vst.msk [vmem:[%s5 + $0x40] sm:$0xff] %vm156, %v304
  // Predicated region
  $region22: #{forward.20} parent=0 // pred_check
    _
  $region23: #{forward.20} parent=0 // pred_check_branch
    %315 = sbr.rel (0) target = $region25
  $region24: #{forward.20} parent=0 // pred_region
    _
  $region25: #{forward.20} parent=0 // pred_fallthru
    _
  // Predicated region
  $region26: #{forward.20} parent=0 // pred_check
    _
  $region27: #{forward.20} parent=0 // pred_check_branch
    %317 = sbr.rel (0) target = $region29
  $region28: #{forward.20} parent=0 // pred_region
    _
  $region29: #{forward.20} parent=0 // pred_fallthru
    _

// kernel: forward.22
$region0: #{forward.22}
  #allocation0 [shape = 'u32[]', space=smem, size = 0x4, offset = 0x4, fixed_abs, tag = 'smem constant byte address 0x4 - core index']
  #allocation1 [shape = 'u32[144,128]{1,0:T(1,128)}', space=vmem, size = 0x12000, scoped, tag = 'internal scratch']
  %s0 = inlined_call_operand.vmem [shape: f32[8,9,48], index: 0, kind: input, shape index: {}]
  %s1 = inlined_call_operand.vmem [shape: f32[2,9,9], index: 1, kind: input, shape index: {}]
  %s2 = inlined_call_operand.vmem [shape: f32[4,9,9], index: 2, kind: input, shape index: {}]
  %s3 = inlined_call_operand.vmem [shape: f32[8,9,16], index: 3, kind: output, shape index: {}]
  %s4 = sld [smem:[#allocation0]]
  $region45: #{forward.22} parent=0
    _
  %s6 = ssub.s32 1, %s4
  %s7 = scalar_select 0, %s6, %s4
  loop: start=0, step=1, limit=4
  $region2: #{forward.22} parent=0 // loop_pre_header
    _
  $region3: #{forward.22} parent=0 // loop_header
    %s9 = sphi 0, %s13
    %p10 = scmp.ge.s32.totalorder %s9, 4
    %s16 = sphi 0, %s28
    %s17 = sphi 0, %s24
    %s18 = sphi 0, %s16
    %s19 = sphi 0, %s17
    %s20 = sphi 0, %s18
    %s21 = sphi 0, %s19
    %s33 = sphi 0, %s35
    %s36 = sphi 0, %s33
    %s37 = sphi 0, %s36
    %s53 = sphi 0, %s37
    %s57 = sphi 0, %s57
    %s59 = sphi 0, %s57
    %s60 = sphi 0, %s59
    %s74 = sphi 0, %s60
    %s80 = sphi 0, %s82
    %s83 = sphi 0, %s80
    %s84 = sphi 0, %s83
    %s100 = sphi 0, %s84
    %s108 = sphi 0, %s110
    %s111 = sphi 0, %s108
    %s112 = sphi 0, %s111
    %s128 = sphi 0, %s112
  $region4: #{forward.22} parent=0 // loop_header_branch
    %12 = sbr.rel (%p10) target = $region8
  $region5: #{forward.22} parent=0 // loop_body
    %s14 = ssub.s32 %s9, 1
    %s15 = ssub.s32 %s9, 2
    %s22 = sadd.s32 1, %s17
    %p23 = scmp.ge.s32.totalorder %s22, 1
    %s24 = scalar_select %p23, 0, %s22
    %s25 = sadd.s32 1, %s16
    %s26 = scalar_select %p23, %s25, %s16
    %p27 = scmp.ge.s32.totalorder %s26, 2
    %s28 = scalar_select %p27, 0, %s26
    %s29 = sadd.s32 %s16, %s17
    %s30 = sadd.s32 %s28, %s24
    %s31 = ssub.s32 %s29, %s30
    %p32 = scmp.eq.s32.totalorder %s31, 0
    %s34 = sadd.s32 %s33, 1
    %s35 = scalar_select %p32, %s33, %s34
    %p38 = pneg %p32
    %p39 = scmp.eq.s32.totalorder %s9, 1
    %p40 = por %p38, %p39
    %p41 = scmp.ne.s32.totalorder %s33, %s36
    %p42 = scmp.eq.s32.totalorder %s9, 0
    %p43 = por %p41, %p42
    %p44 = scmp.ne.s32.totalorder %s33, %s36
    %p45 = scmp.eq.s32.totalorder %s14, 1
    %p46 = por %p44, %p45
    %p47 = scmp.ne.s32.totalorder %s36, %s37
    %p48 = scmp.eq.s32.totalorder %s14, 0
    %p49 = por %p47, %p48
    %p50 = scmp.ne.s32.totalorder %s36, %s37
    %p51 = scmp.eq.s32.totalorder %s15, 1
    %p52 = por %p50, %p51
    %p54 = scmp.ne.s32.totalorder %s37, %s53
    %p55 = scmp.eq.s32.totalorder %s15, 0
    %p56 = por %p54, %p55
    %s58 = sadd.s32 %s57, 1
    %p61 = scmp.eq.s32.totalorder %s9, 1
    %p62 = scmp.ne.s32.totalorder %s57, %s59
    %p63 = scmp.eq.s32.totalorder %s9, 0
    %p64 = por %p62, %p63
    %p65 = scmp.ne.s32.totalorder %s57, %s59
    %p66 = scmp.eq.s32.totalorder %s14, 1
    %p67 = por %p65, %p66
    %p68 = scmp.ne.s32.totalorder %s59, %s60
    %p69 = scmp.eq.s32.totalorder %s14, 0
    %p70 = por %p68, %p69
    %p71 = scmp.ne.s32.totalorder %s59, %s60
    %p72 = scmp.eq.s32.totalorder %s15, 1
    %p73 = por %p71, %p72
    %p75 = scmp.ne.s32.totalorder %s60, %s74
    %p76 = scmp.eq.s32.totalorder %s15, 0
    %p77 = por %p75, %p76
    %s78 = ssub.s32 %s17, %s24
    %p79 = scmp.eq.s32.totalorder %s78, 0
    %s81 = sadd.s32 %s80, 1
    %s82 = scalar_select %p79, %s80, %s81
    %p85 = pneg %p79
    %p86 = scmp.eq.s32.totalorder %s9, 1
    %p87 = por %p85, %p86
    %p88 = scmp.ne.s32.totalorder %s80, %s83
    %p89 = scmp.eq.s32.totalorder %s9, 0
    %p90 = por %p88, %p89
    %p91 = scmp.ne.s32.totalorder %s80, %s83
    %p92 = scmp.eq.s32.totalorder %s14, 1
    %p93 = por %p91, %p92
    %p94 = scmp.ne.s32.totalorder %s83, %s84
    %p95 = scmp.eq.s32.totalorder %s14, 0
    %p96 = por %p94, %p95
    %p97 = scmp.ne.s32.totalorder %s83, %s84
    %p98 = scmp.eq.s32.totalorder %s15, 1
    %p99 = por %p97, %p98
    %p101 = scmp.ne.s32.totalorder %s84, %s100
    %p102 = scmp.eq.s32.totalorder %s15, 0
    %p103 = por %p101, %p102
    %s104 = sadd.s32 %s16, %s17
    %s105 = sadd.s32 %s28, %s24
    %s106 = ssub.s32 %s104, %s105
    %p107 = scmp.eq.s32.totalorder %s106, 0
    %s109 = sadd.s32 %s108, 1
    %s110 = scalar_select %p107, %s108, %s109
    %p113 = pneg %p107
    %p114 = scmp.eq.s32.totalorder %s9, 1
    %p115 = por %p113, %p114
    %p116 = scmp.ne.s32.totalorder %s108, %s111
    %p117 = scmp.eq.s32.totalorder %s9, 0
    %p118 = por %p116, %p117
    %p119 = scmp.ne.s32.totalorder %s108, %s111
    %p120 = scmp.eq.s32.totalorder %s14, 1
    %p121 = por %p119, %p120
    %p122 = scmp.ne.s32.totalorder %s111, %s112
    %p123 = scmp.eq.s32.totalorder %s14, 0
    %p124 = por %p122, %p123
    %p125 = scmp.ne.s32.totalorder %s111, %s112
    %p126 = scmp.eq.s32.totalorder %s15, 1
    %p127 = por %p125, %p126
    %p129 = scmp.ne.s32.totalorder %s112, %s128
    %p130 = scmp.eq.s32.totalorder %s15, 0
    %p131 = por %p129, %p130
    %p132 = scmp.le.s32.totalorder 1, %s9
    %p133 = scmp.lt.s32.totalorder %s9, 3
    %p134 = pnand %p132, %p133
    %p135 = pneg %p134
    // Predicated region
    $region9: #{forward.22} parent=5 // pred_check
      _
    $region10: #{forward.22} parent=5 // pred_check_branch
      %137 = sbr.rel (%p134) target = $region12
    $region11: #{forward.22} parent=5 // pred_region
      %s138 = ssub.s32 %s9, 1
      // Predicated region
      $region13: #{forward.22} parent=11 // pred_check
        %p139 = pneg %p70
      $region14: #{forward.22} parent=11 // pred_check_branch
        %141 = sbr.rel (%p139) target = $region16
      $region15: #{forward.22} parent=11 // pred_region
        _
      $region16: #{forward.22} parent=11 // pred_fallthru
        _
      // Predicated region
      $region17: #{forward.22} parent=11 // pred_check
        %p142 = pneg %p96
      $region18: #{forward.22} parent=11 // pred_check_branch
        %144 = sbr.rel (%p142) target = $region20
      $region19: #{forward.22} parent=11 // pred_region
        %s145 = smul.u32 4, %s19
        %p146 = scmp.lt.s32.totalorder %s145, 3
        %s147 = scalar_select %p146, %s145, 3
        %s148 = smul.addr %s147, 2
        %s149 = smul.addr %s148, 8
        %s150 = scalar_lea.vmem %s2, %s149
        %s151 = smul.u32 4, %s19
      $region20: #{forward.22} parent=11 // pred_fallthru
        _
    $region12: #{forward.22} parent=5 // pred_fallthru
      _
    %p152 = scmp.lt.s32.totalorder %s9, 2
    // Predicated region
    $region21: #{forward.22} parent=5 // pred_check
      %p153 = pneg %p152
    $region22: #{forward.22} parent=5 // pred_check_branch
      %155 = sbr.rel (%p153) target = $region24
    $region23: #{forward.22} parent=5 // pred_region
      // Predicated region
      $region25: #{forward.22} parent=23 // pred_check
        %p156 = pneg %p43
      $region26: #{forward.22} parent=23 // pred_check_branch
        %158 = sbr.rel (%p156) target = $region28
      $region27: #{forward.22} parent=23 // pred_region
        %s159 = sadd.s32 %s16, %s17
        %s160 = smul.u32 4, %s159
        %p161 = scmp.lt.s32.totalorder %s160, 7
        %s162 = scalar_select %p161, %s160, 7
        %s163 = smul.addr %s162, 2
        %s164 = smul.addr %s163, 8
        %s165 = scalar_lea.vmem %s0, %s164
        %s166 = sadd.s32 %s16, %s17
        %s167 = smul.u32 4, %s166
      $region28: #{forward.22} parent=23 // pred_fallthru
        _
    $region24: #{forward.22} parent=5 // pred_fallthru
      _
    %p168 = scmp.le.s32.totalorder 1, %s9
    %p169 = scmp.lt.s32.totalorder %s9, 3
    %p170 = pnand %p168, %p169
    %p171 = pneg %p170
    // Predicated region
    $region29: #{forward.22} parent=5 // pred_check
      _
    $region30: #{forward.22} parent=5 // pred_check_branch
      %173 = sbr.rel (%p170) target = $region32
    $region31: #{forward.22} parent=5 // pred_region
      %s174 = ssub.s32 %s9, 1
      %s175 = sadd.s32 %s18, %s19
      %s176 = smul.u32 4, %s175
      %p177 = scmp.lt.s32.totalorder %s176, 7
      %s178 = scalar_select %p177, %s176, 7
      %s179 = smul.addr %s178, 2
      %s180 = smul.addr %s179, 8
      %s181 = scalar_lea.vmem %s0, %s180
      %p182 = pneg %p49
      %p183 = pneg %p46
      %p184 = pneg %p70
      %p185 = pneg %p67
      %s186 = smul.u32 4, %s19
      %p187 = scmp.lt.s32.totalorder %s186, 3
      %s188 = scalar_select %p187, %s186, 3
      %s189 = smul.addr %s188, 2
      %s190 = smul.addr %s189, 8
      %s191 = scalar_lea.vmem %s2, %s190
      %p192 = pneg %p96
      %p193 = pneg %p93
      %p194 = pneg %p124
      %p195 = pneg %p121
      %s196 = sadd.s32 %s18, %s19
      %s197 = smul.u32 4, %s196
      %p198 = scmp.lt.s32.totalorder %s197, 7
      %s199 = scalar_select %p198, %s197, 7
      %s200 = smul.addr %s199, 2
      %s201 = smul.addr %s200, 8
      %s202 = scalar_lea.vmem %s3, %s201
      %s203 = sadd.s32 %s18, %s19
      %s204 = smul.u32 4, %s203
      %p205 = scmp.lt.s32.totalorder %s204, 7
      %s206 = scalar_select %p205, %s204, 7
      %s207 = smul.addr %s206, 2
      %s208 = smul.addr %s207, 8
      %s209 = scalar_lea.vmem %s0, %s208
      %s210 = sadd.s32 %s18, %s19
      %s211 = smul.u32 4, %s210
      %s212 = smul.u32 4, %s19
      %p213 = scmp.lt.s32.totalorder %s212, 3
      %s214 = scalar_select %p213, %s212, 3
      %s215 = smul.addr %s214, 2
      %s216 = smul.addr %s215, 8
      %s217 = scalar_lea.vmem %s2, %s216
      %s218 = smul.u32 4, %s19
      %s219 = sadd.s32 %s18, %s19
      %s220 = smul.u32 4, %s219
      %p221 = scmp.lt.s32.totalorder %s220, 7
      %s222 = scalar_select %p221, %s220, 7
      %s223 = smul.addr %s222, 2
      %s224 = smul.addr %s223, 8
      %s225 = scalar_lea.vmem %s3, %s224
      %s226 = sadd.s32 %s18, %s19
      %s227 = smul.u32 4, %s226
      %v229 = vld [vmem:[%s217] sm:$0xff]
      %v230 = vld [vmem:[%s217 + $0x8] sm:$0x1]
      %v231 = vld [vmem:[%s217 + $0x10] sm:$0xff]
      %v232 = vld [vmem:[%s217 + $0x18] sm:$0x1]
      %v233 = vld [vmem:[%s217 + $0x20] sm:$0xff]
      %v234 = vld [vmem:[%s217 + $0x28] sm:$0x1]
      %v235 = vld [vmem:[%s217 + $0x30] sm:$0xff]
      %v236 = vld [vmem:[%s217 + $0x38] sm:$0x1]
      %v237 = vld [vmem:[%s209] sm:$0xff]
      %v238 = vld [vmem:[%s209 + $0x8] sm:$0x1]
      %v239 = vld [vmem:[%s209 + $0x10] sm:$0xff]
      %v240 = vld [vmem:[%s209 + $0x18] sm:$0x1]
      %v241 = vld [vmem:[%s209 + $0x20] sm:$0xff]
      %v242 = vld [vmem:[%s209 + $0x28] sm:$0x1]
      %v243 = vld [vmem:[%s209 + $0x30] sm:$0xff]
      %v244 = vld [vmem:[%s209 + $0x38] sm:$0x1]
      %v245 = vmul.f32 %v237, 0.35355338
      %v246 = vmul.f32 %v238, 0.35355338
      %v247 = vmul.f32 %v239, 0.35355338
      %v248 = vmul.f32 %v240, 0.35355338
      %v249 = vmul.f32 %v241, 0.35355338
      %v250 = vmul.f32 %v242, 0.35355338
      %v251 = vmul.f32 %v243, 0.35355338
      %v252 = vmul.f32 %v244, 0.35355338
      %v253 = vpack.c.bf16 %v246, %v245
      %v254 = vpack.c.bf16 %v248, %v247
      %v255 = vpack.c.bf16 %v250, %v249
      %v256 = vpack.c.bf16 %v252, %v251
      %v257 = vpack.c.bf16 %v238, %v237
      %v258 = vpack.c.bf16 %v240, %v239
      %v259 = vpack.c.bf16 %v242, %v241
      %v260 = vpack.c.bf16 %v244, %v243
      %v261 = vld [vmem:[%s1] sm:$0xff]
      %v262 = vld [vmem:[%s1 + $0x8] sm:$0x1]
      %264 = vrot.lane.b32.xlu0 %v257, 112
      %v265 = vpop.permute.xlu0 %264
      %vm266 = vcmask 64512
      %v268 = vsel %vm266, %v253, 0
      %v271 = vsel %vm266, %v265, 0
      %273 = vmatprep.subr.bf16.mxu0 0
      %274 = vmatpush1.bf16.xpose.msra.mxu0 0
      %275 = vmatprep.subr.bf16.mxu0 0
      %276 = vmatpush1.bf16.xpose.msra.mxu0 0
      %277 = vmatprep.subr.bf16.mxu0 0
      %278 = vmatpush1.bf16.xpose.msra.mxu0 0
      %279 = vmatprep.subr.bf16.mxu0 0
      %280 = vmatpush1.bf16.xpose.msra.mxu0 0
      %281 = vmatprep.subr.bf16.mxu0 0
      %282 = vmatpush1.bf16.xpose.msra.mxu0 0
      %283 = vmatprep.subr.bf16.mxu0 0
      %284 = vmatpush1.bf16.xpose.msra.mxu0 0
      %285 = vmatprep.subr.bf16.mxu0 0
      %286 = vmatpush1.bf16.xpose.msra.mxu0 0
      %287 = vmatprep.subr.bf16.mxu0 0
      %288 = vmatpush1.bf16.xpose.msra.mxu0 %v271
      %289 = vmatprep.subr.bf16.mxu0 0
      %290 = vmatpush2.bf16.xpose.msra.mxu0 0
      %291 = vmatprep.subr.bf16.mxu0 0
      %292 = vmatpush2.bf16.xpose.msra.mxu0 0
      %293 = vmatprep.subr.bf16.mxu0 0
      %294 = vmatpush2.bf16.xpose.msra.mxu0 0
      %295 = vmatprep.subr.bf16.mxu0 0
      %296 = vmatpush2.bf16.xpose.msra.mxu0 0
      %297 = vmatprep.subr.bf16.mxu0 0
      %298 = vmatpush2.bf16.xpose.msra.mxu0 0
      %299 = vmatprep.subr.bf16.mxu0 0
      %300 = vmatpush2.bf16.xpose.msra.mxu0 0
      %301 = vmatprep.subr.bf16.mxu0 0
      %302 = vmatpush2.bf16.xpose.msra.mxu0 0
      %303 = vmatprep.subr.bf16.mxu0 0
      %304 = vmatpush2.bf16.xpose.msra.mxu0 0
      %305 = vmatprep.mubr.bf16.mxu0 0
      %306 = vmatmul.mubr.bf16.gmra.mxu0 %v268
      %v307 = vpop.f32.mrf.mxu0
      %v308 = vadd.f32 %v261, %v307
      %v309 = vpop.f32.mrf.mxu0
      %v310 = vpop.f32.mrf.mxu0
      %v311 = vadd.f32 %v262, %v310
      %v312 = vpop.f32.mrf.mxu0
      %313 = vdwg.mxu0
      %315 = vrot.lane.b32.xlu0 %v258, 112
      %v316 = vpop.permute.xlu0 %315
      %v318 = vsel %vm266, %v254, 0
      %v321 = vsel %vm266, %v316, 0
      %323 = vmatprep.subr.bf16.mxu0 0
      %324 = vmatpush1.bf16.xpose.msra.mxu0 0
      %325 = vmatprep.subr.bf16.mxu0 0
      %326 = vmatpush1.bf16.xpose.msra.mxu0 0
      %327 = vmatprep.subr.bf16.mxu0 0
      %328 = vmatpush1.bf16.xpose.msra.mxu0 0
      %329 = vmatprep.subr.bf16.mxu0 0
      %330 = vmatpush1.bf16.xpose.msra.mxu0 0
      %331 = vmatprep.subr.bf16.mxu0 0
      %332 = vmatpush1.bf16.xpose.msra.mxu0 0
      %333 = vmatprep.subr.bf16.mxu0 0
      %334 = vmatpush1.bf16.xpose.msra.mxu0 0
      %335 = vmatprep.subr.bf16.mxu0 0
      %336 = vmatpush1.bf16.xpose.msra.mxu0 0
      %337 = vmatprep.subr.bf16.mxu0 0
      %338 = vmatpush1.bf16.xpose.msra.mxu0 %v321
      %339 = vmatprep.subr.bf16.mxu0 0
      %340 = vmatpush2.bf16.xpose.msra.mxu0 0
      %341 = vmatprep.subr.bf16.mxu0 0
      %342 = vmatpush2.bf16.xpose.msra.mxu0 0
      %343 = vmatprep.subr.bf16.mxu0 0
      %344 = vmatpush2.bf16.xpose.msra.mxu0 0
      %345 = vmatprep.subr.bf16.mxu0 0
      %346 = vmatpush2.bf16.xpose.msra.mxu0 0
      %347 = vmatprep.subr.bf16.mxu0 0
      %348 = vmatpush2.bf16.xpose.msra.mxu0 0
      %349 = vmatprep.subr.bf16.mxu0 0
      %350 = vmatpush2.bf16.xpose.msra.mxu0 0
      %351 = vmatprep.subr.bf16.mxu0 0
      %352 = vmatpush2.bf16.xpose.msra.mxu0 0
      %353 = vmatprep.subr.bf16.mxu0 0
      %354 = vmatpush2.bf16.xpose.msra.mxu0 0
      %355 = vmatprep.mubr.bf16.mxu0 0
      %356 = vmatmul.mubr.bf16.gmra.mxu0 %v318
      %v357 = vpop.f32.mrf.mxu0
      %v358 = vadd.f32 %v261, %v357
      %v359 = vpop.f32.mrf.mxu0
      %v360 = vpop.f32.mrf.mxu0
      %v361 = vadd.f32 %v262, %v360
      %v362 = vpop.f32.mrf.mxu0
      %363 = vdwg.mxu0
      %365 = vrot.lane.b32.xlu0 %v259, 112
      %v366 = vpop.permute.xlu0 %365
      %v368 = vsel %vm266, %v255, 0
      %v371 = vsel %vm266, %v366, 0
      %373 = vmatprep.subr.bf16.mxu0 0
      %374 = vmatpush1.bf16.xpose.msra.mxu0 0
      %375 = vmatprep.subr.bf16.mxu0 0
      %376 = vmatpush1.bf16.xpose.msra.mxu0 0
      %377 = vmatprep.subr.bf16.mxu0 0
      %378 = vmatpush1.bf16.xpose.msra.mxu0 0
      %379 = vmatprep.subr.bf16.mxu0 0
      %380 = vmatpush1.bf16.xpose.msra.mxu0 0
      %381 = vmatprep.subr.bf16.mxu0 0
      %382 = vmatpush1.bf16.xpose.msra.mxu0 0
      %383 = vmatprep.subr.bf16.mxu0 0
      %384 = vmatpush1.bf16.xpose.msra.mxu0 0
      %385 = vmatprep.subr.bf16.mxu0 0
      %386 = vmatpush1.bf16.xpose.msra.mxu0 0
      %387 = vmatprep.subr.bf16.mxu0 0
      %388 = vmatpush1.bf16.xpose.msra.mxu0 %v371
      %389 = vmatprep.subr.bf16.mxu0 0
      %390 = vmatpush2.bf16.xpose.msra.mxu0 0
      %391 = vmatprep.subr.bf16.mxu0 0
      %392 = vmatpush2.bf16.xpose.msra.mxu0 0
      %393 = vmatprep.subr.bf16.mxu0 0
      %394 = vmatpush2.bf16.xpose.msra.mxu0 0
      %395 = vmatprep.subr.bf16.mxu0 0
      %396 = vmatpush2.bf16.xpose.msra.mxu0 0
      %397 = vmatprep.subr.bf16.mxu0 0
      %398 = vmatpush2.bf16.xpose.msra.mxu0 0
      %399 = vmatprep.subr.bf16.mxu0 0
      %400 = vmatpush2.bf16.xpose.msra.mxu0 0
      %401 = vmatprep.subr.bf16.mxu0 0
      %402 = vmatpush2.bf16.xpose.msra.mxu0 0
      %403 = vmatprep.subr.bf16.mxu0 0
      %404 = vmatpush2.bf16.xpose.msra.mxu0 0
      %405 = vmatprep.mubr.bf16.mxu0 0
      %406 = vmatmul.mubr.bf16.gmra.mxu0 %v368
      %v407 = vpop.f32.mrf.mxu0
      %v408 = vadd.f32 %v261, %v407
      %v409 = vpop.f32.mrf.mxu0
      %v410 = vpop.f32.mrf.mxu0
      %v411 = vadd.f32 %v262, %v410
      %v412 = vpop.f32.mrf.mxu0
      %413 = vdwg.mxu0
      %415 = vrot.lane.b32.xlu0 %v260, 112
      %v416 = vpop.permute.xlu0 %415
      %v418 = vsel %vm266, %v256, 0
      %v421 = vsel %vm266, %v416, 0
      %423 = vmatprep.subr.bf16.mxu0 0
      %424 = vmatpush1.bf16.xpose.msra.mxu0 0
      %425 = vmatprep.subr.bf16.mxu0 0
      %426 = vmatpush1.bf16.xpose.msra.mxu0 0
      %427 = vmatprep.subr.bf16.mxu0 0
      %428 = vmatpush1.bf16.xpose.msra.mxu0 0
      %429 = vmatprep.subr.bf16.mxu0 0
      %430 = vmatpush1.bf16.xpose.msra.mxu0 0
      %431 = vmatprep.subr.bf16.mxu0 0
      %432 = vmatpush1.bf16.xpose.msra.mxu0 0
      %433 = vmatprep.subr.bf16.mxu0 0
      %434 = vmatpush1.bf16.xpose.msra.mxu0 0
      %435 = vmatprep.subr.bf16.mxu0 0
      %436 = vmatpush1.bf16.xpose.msra.mxu0 0
      %437 = vmatprep.subr.bf16.mxu0 0
      %438 = vmatpush1.bf16.xpose.msra.mxu0 %v421
      %439 = vmatprep.subr.bf16.mxu0 0
      %440 = vmatpush2.bf16.xpose.msra.mxu0 0
      %441 = vmatprep.subr.bf16.mxu0 0
      %442 = vmatpush2.bf16.xpose.msra.mxu0 0
      %443 = vmatprep.subr.bf16.mxu0 0
      %444 = vmatpush2.bf16.xpose.msra.mxu0 0
      %445 = vmatprep.subr.bf16.mxu0 0
      %446 = vmatpush2.bf16.xpose.msra.mxu0 0
      %447 = vmatprep.subr.bf16.mxu0 0
      %448 = vmatpush2.bf16.xpose.msra.mxu0 0
      %449 = vmatprep.subr.bf16.mxu0 0
      %450 = vmatpush2.bf16.xpose.msra.mxu0 0
      %451 = vmatprep.subr.bf16.mxu0 0
      %452 = vmatpush2.bf16.xpose.msra.mxu0 0
      %453 = vmatprep.subr.bf16.mxu0 0
      %454 = vmatpush2.bf16.xpose.msra.mxu0 0
      %455 = vmatprep.mubr.bf16.mxu0 0
      %456 = vmatmul.mubr.bf16.gmra.mxu0 %v418
      %v457 = vpop.f32.mrf.mxu0
      %v458 = vadd.f32 %v261, %v457
      %v459 = vpop.f32.mrf.mxu0
      %v460 = vpop.f32.mrf.mxu0
      %v461 = vadd.f32 %v262, %v460
      %v462 = vpop.f32.mrf.mxu0
      %463 = vdwg.mxu0
      %v464 = vadd.f32 %v308, %v229
      %v465 = vadd.f32 %v311, %v230
      %v466 = vadd.f32 %v358, %v231
      %v467 = vadd.f32 %v361, %v232
      %v468 = vadd.f32 %v408, %v233
      %v469 = vadd.f32 %v411, %v234
      %v470 = vadd.f32 %v458, %v235
      %v471 = vadd.f32 %v461, %v236
      %vm472 = vcmask 72704
      %v473 = vsel %vm472, %v464, -inf
      %474 = vmax.xlane.f32.xlu0 %v473
      %v475 = vpop.xlane.xlu0 %474
      %vm476 = vcmask 65536
      %v477 = vsel %vm476, %v465, -inf
      %478 = vmax.xlane.f32.xlu0 %v477
      %v479 = vpop.xlane.xlu0 %478
      %v480 = vsel %vm472, %v466, -inf
      %481 = vmax.xlane.f32.xlu0 %v480
      %v482 = vpop.xlane.xlu0 %481
      %v483 = vsel %vm476, %v467, -inf
      %484 = vmax.xlane.f32.xlu0 %v483
      %v485 = vpop.xlane.xlu0 %484
      %v486 = vsel %vm472, %v468, -inf
      %487 = vmax.xlane.f32.xlu0 %v486
      %v488 = vpop.xlane.xlu0 %487
      %v489 = vsel %vm476, %v469, -inf
      %490 = vmax.xlane.f32.xlu0 %v489
      %v491 = vpop.xlane.xlu0 %490
      %v492 = vsel %vm472, %v470, -inf
      %493 = vmax.xlane.f32.xlu0 %v492
      %v494 = vpop.xlane.xlu0 %493
      %v495 = vsel %vm476, %v471, -inf
      %496 = vmax.xlane.f32.xlu0 %v495
      %v497 = vpop.xlane.xlu0 %496
      %v498 = vsub.f32 %v464, %v475
      %v499 = vsub.f32 %v465, %v479
      %v500 = vsub.f32 %v466, %v482
      %v501 = vsub.f32 %v467, %v485
      %v502 = vsub.f32 %v468, %v488
      %v503 = vsub.f32 %v469, %v491
      %v504 = vsub.f32 %v470, %v494
      %v505 = vsub.f32 %v471, %v497
      %v506 = vmul.f32 %v498, 1.442695
      %v507 = vpow.pop %v506
      %v508 = vmul.f32 %v499, 1.442695
      %v509 = vpow.pop %v508
      %v510 = vmul.f32 %v500, 1.442695
      %v511 = vpow.pop %v510
      %v512 = vmul.f32 %v501, 1.442695
      %v513 = vpow.pop %v512
      %v514 = vmul.f32 %v502, 1.442695
      %v515 = vpow.pop %v514
      %v516 = vmul.f32 %v503, 1.442695
      %v517 = vpow.pop %v516
      %v518 = vmul.f32 %v504, 1.442695
      %v519 = vpow.pop %v518
      %v520 = vmul.f32 %v505, 1.442695
      %v521 = vpow.pop %v520
      %v522 = vsel %vm472, %v507, 0.0
      %523 = vadd.xlane.f32.xlu0 %v522
      %v524 = vpop.xlane.xlu0 %523
      %v525 = vsel %vm476, %v509, 0.0
      %526 = vadd.xlane.f32.xlu0 %v525
      %v527 = vpop.xlane.xlu0 %526
      %v528 = vsel %vm472, %v511, 0.0
      %529 = vadd.xlane.f32.xlu0 %v528
      %v530 = vpop.xlane.xlu0 %529
      %v531 = vsel %vm476, %v513, 0.0
      %532 = vadd.xlane.f32.xlu0 %v531
      %v533 = vpop.xlane.xlu0 %532
      %v534 = vsel %vm472, %v515, 0.0
      %535 = vadd.xlane.f32.xlu0 %v534
      %v536 = vpop.xlane.xlu0 %535
      %v537 = vsel %vm476, %v517, 0.0
      %538 = vadd.xlane.f32.xlu0 %v537
      %v539 = vpop.xlane.xlu0 %538
      %v540 = vsel %vm472, %v519, 0.0
      %541 = vadd.xlane.f32.xlu0 %v540
      %v542 = vpop.xlane.xlu0 %541
      %v543 = vsel %vm476, %v521, 0.0
      %544 = vadd.xlane.f32.xlu0 %v543
      %v545 = vpop.xlane.xlu0 %544
      %v546 = vrcp.pop %v524
      %v547 = vrcp.pop %v527
      %v548 = vrcp.pop %v530
      %v549 = vrcp.pop %v533
      %v550 = vrcp.pop %v536
      %v551 = vrcp.pop %v539
      %v552 = vrcp.pop %v542
      %v553 = vrcp.pop %v545
      %v554 = vmul.f32 %v507, %v546
      %v555 = vmul.f32 %v509, %v547
      %v556 = vmul.f32 %v511, %v548
      %v557 = vmul.f32 %v513, %v549
      %v558 = vmul.f32 %v515, %v550
      %v559 = vmul.f32 %v517, %v551
      %v560 = vmul.f32 %v519, %v552
      %v561 = vmul.f32 %v521, %v553
      %v562 = vpack.c.bf16 %v555, %v554
      %v563 = vpack.c.bf16 %v557, %v556
      %v564 = vpack.c.bf16 %v559, %v558
      %v565 = vpack.c.bf16 %v561, %v560
      %566 = vrot.lane.b32.xlu0 %v257, 96
      %v567 = vpop.permute.xlu0 %566
      %v569 = vsel %vm472, %v562, 0
      %vm571 = vcmask 1043456
      %vm572 = vcmask 1044480
      %v573 = vsel %vm571, 4294967295, 65535
      %v574 = vsel %vm572, %v573, 0
      %v576 = vand.u32 %v567, %v574
      %578 = vmatprep.subr.bf16.mxu0 0
      %579 = vmatpush1.bf16.msra.mxu0 0
      %580 = vmatprep.subr.bf16.mxu0 0
      %581 = vmatpush1.bf16.msra.mxu0 0
      %582 = vmatprep.subr.bf16.mxu0 0
      %583 = vmatpush1.bf16.msra.mxu0 0
      %584 = vmatprep.subr.bf16.mxu0 0
      %585 = vmatpush1.bf16.msra.mxu0 0
      %586 = vmatprep.subr.bf16.mxu0 0
      %587 = vmatpush1.bf16.msra.mxu0 0
      %588 = vmatprep.subr.bf16.mxu0 0
      %589 = vmatpush1.bf16.msra.mxu0 0
      %590 = vmatprep.subr.bf16.mxu0 0
      %591 = vmatpush1.bf16.msra.mxu0 0
      %592 = vmatprep.subr.bf16.mxu0 0
      %593 = vmatpush1.bf16.msra.mxu0 %v576
      %594 = vmatprep.subr.bf16.mxu0 0
      %595 = vmatpush2.bf16.msra.mxu0 0
      %596 = vmatprep.subr.bf16.mxu0 0
      %597 = vmatpush2.bf16.msra.mxu0 0
      %598 = vmatprep.subr.bf16.mxu0 0
      %599 = vmatpush2.bf16.msra.mxu0 0
      %600 = vmatprep.subr.bf16.mxu0 0
      %601 = vmatpush2.bf16.msra.mxu0 0
      %602 = vmatprep.subr.bf16.mxu0 0
      %603 = vmatpush2.bf16.msra.mxu0 0
      %604 = vmatprep.subr.bf16.mxu0 0
      %605 = vmatpush2.bf16.msra.mxu0 0
      %606 = vmatprep.subr.bf16.mxu0 0
      %607 = vmatpush2.bf16.msra.mxu0 0
      %608 = vmatprep.subr.bf16.mxu0 0
      %609 = vmatpush2.bf16.msra.mxu0 0
      %610 = vmatprep.mubr.bf16.mxu0 0
      %611 = vmatmul.mubr.bf16.gmra.mxu0 %v569
      %v612 = vpop.f32.mrf.mxu0
      %v613 = vadd.f32 0.0, %v612
      %v614 = vpop.f32.mrf.mxu0
      %v615 = vpop.f32.mrf.mxu0
      %v616 = vadd.f32 0.0, %v615
      %v617 = vpop.f32.mrf.mxu0
      %618 = vdwg.mxu0
      %619 = vrot.lane.b32.xlu0 %v258, 96
      %v620 = vpop.permute.xlu0 %619
      %v622 = vsel %vm472, %v563, 0
      %v625 = vand.u32 %v620, %v574
      %627 = vmatprep.subr.bf16.mxu0 0
      %628 = vmatpush1.bf16.msra.mxu0 0
      %629 = vmatprep.subr.bf16.mxu0 0
      %630 = vmatpush1.bf16.msra.mxu0 0
      %631 = vmatprep.subr.bf16.mxu0 0
      %632 = vmatpush1.bf16.msra.mxu0 0
      %633 = vmatprep.subr.bf16.mxu0 0
      %634 = vmatpush1.bf16.msra.mxu0 0
      %635 = vmatprep.subr.bf16.mxu0 0
      %636 = vmatpush1.bf16.msra.mxu0 0
      %637 = vmatprep.subr.bf16.mxu0 0
      %638 = vmatpush1.bf16.msra.mxu0 0
      %639 = vmatprep.subr.bf16.mxu0 0
      %640 = vmatpush1.bf16.msra.mxu0 0
      %641 = vmatprep.subr.bf16.mxu0 0
      %642 = vmatpush1.bf16.msra.mxu0 %v625
      %643 = vmatprep.subr.bf16.mxu0 0
      %644 = vmatpush2.bf16.msra.mxu0 0
      %645 = vmatprep.subr.bf16.mxu0 0
      %646 = vmatpush2.bf16.msra.mxu0 0
      %647 = vmatprep.subr.bf16.mxu0 0
      %648 = vmatpush2.bf16.msra.mxu0 0
      %649 = vmatprep.subr.bf16.mxu0 0
      %650 = vmatpush2.bf16.msra.mxu0 0
      %651 = vmatprep.subr.bf16.mxu0 0
      %652 = vmatpush2.bf16.msra.mxu0 0
      %653 = vmatprep.subr.bf16.mxu0 0
      %654 = vmatpush2.bf16.msra.mxu0 0
      %655 = vmatprep.subr.bf16.mxu0 0
      %656 = vmatpush2.bf16.msra.mxu0 0
      %657 = vmatprep.subr.bf16.mxu0 0
      %658 = vmatpush2.bf16.msra.mxu0 0
      %659 = vmatprep.mubr.bf16.mxu0 0
      %660 = vmatmul.mubr.bf16.gmra.mxu0 %v622
      %v661 = vpop.f32.mrf.mxu0
      %v662 = vadd.f32 0.0, %v661
      %v663 = vpop.f32.mrf.mxu0
      %v664 = vpop.f32.mrf.mxu0
      %v665 = vadd.f32 0.0, %v664
      %v666 = vpop.f32.mrf.mxu0
      %667 = vdwg.mxu0
      %668 = vrot.lane.b32.xlu0 %v259, 96
      %v669 = vpop.permute.xlu0 %668
      %v671 = vsel %vm472, %v564, 0
      %v674 = vand.u32 %v669, %v574
      %676 = vmatprep.subr.bf16.mxu0 0
      %677 = vmatpush1.bf16.msra.mxu0 0
      %678 = vmatprep.subr.bf16.mxu0 0
      %679 = vmatpush1.bf16.msra.mxu0 0
      %680 = vmatprep.subr.bf16.mxu0 0
      %681 = vmatpush1.bf16.msra.mxu0 0
      %682 = vmatprep.subr.bf16.mxu0 0
      %683 = vmatpush1.bf16.msra.mxu0 0
      %684 = vmatprep.subr.bf16.mxu0 0
      %685 = vmatpush1.bf16.msra.mxu0 0
      %686 = vmatprep.subr.bf16.mxu0 0
      %687 = vmatpush1.bf16.msra.mxu0 0
      %688 = vmatprep.subr.bf16.mxu0 0
      %689 = vmatpush1.bf16.msra.mxu0 0
      %690 = vmatprep.subr.bf16.mxu0 0
      %691 = vmatpush1.bf16.msra.mxu0 %v674
      %692 = vmatprep.subr.bf16.mxu0 0
      %693 = vmatpush2.bf16.msra.mxu0 0
      %694 = vmatprep.subr.bf16.mxu0 0
      %695 = vmatpush2.bf16.msra.mxu0 0
      %696 = vmatprep.subr.bf16.mxu0 0
      %697 = vmatpush2.bf16.msra.mxu0 0
      %698 = vmatprep.subr.bf16.mxu0 0
      %699 = vmatpush2.bf16.msra.mxu0 0
      %700 = vmatprep.subr.bf16.mxu0 0
      %701 = vmatpush2.bf16.msra.mxu0 0
      %702 = vmatprep.subr.bf16.mxu0 0
      %703 = vmatpush2.bf16.msra.mxu0 0
      %704 = vmatprep.subr.bf16.mxu0 0
      %705 = vmatpush2.bf16.msra.mxu0 0
      %706 = vmatprep.subr.bf16.mxu0 0
      %707 = vmatpush2.bf16.msra.mxu0 0
      %708 = vmatprep.mubr.bf16.mxu0 0
      %709 = vmatmul.mubr.bf16.gmra.mxu0 %v671
      %v710 = vpop.f32.mrf.mxu0
      %v711 = vadd.f32 0.0, %v710
      %v712 = vpop.f32.mrf.mxu0
      %v713 = vpop.f32.mrf.mxu0
      %v714 = vadd.f32 0.0, %v713
      %v715 = vpop.f32.mrf.mxu0
      %716 = vdwg.mxu0
      %717 = vrot.lane.b32.xlu0 %v260, 96
      %v718 = vpop.permute.xlu0 %717
      %v720 = vsel %vm472, %v565, 0
      %v723 = vand.u32 %v718, %v574
      %725 = vmatprep.subr.bf16.mxu0 0
      %726 = vmatpush1.bf16.msra.mxu0 0
      %727 = vmatprep.subr.bf16.mxu0 0
      %728 = vmatpush1.bf16.msra.mxu0 0
      %729 = vmatprep.subr.bf16.mxu0 0
      %730 = vmatpush1.bf16.msra.mxu0 0
      %731 = vmatprep.subr.bf16.mxu0 0
      %732 = vmatpush1.bf16.msra.mxu0 0
      %733 = vmatprep.subr.bf16.mxu0 0
      %734 = vmatpush1.bf16.msra.mxu0 0
      %735 = vmatprep.subr.bf16.mxu0 0
      %736 = vmatpush1.bf16.msra.mxu0 0
      %737 = vmatprep.subr.bf16.mxu0 0
      %738 = vmatpush1.bf16.msra.mxu0 0
      %739 = vmatprep.subr.bf16.mxu0 0
      %740 = vmatpush1.bf16.msra.mxu0 %v723
      %741 = vmatprep.subr.bf16.mxu0 0
      %742 = vmatpush2.bf16.msra.mxu0 0
      %743 = vmatprep.subr.bf16.mxu0 0
      %744 = vmatpush2.bf16.msra.mxu0 0
      %745 = vmatprep.subr.bf16.mxu0 0
      %746 = vmatpush2.bf16.msra.mxu0 0
      %747 = vmatprep.subr.bf16.mxu0 0
      %748 = vmatpush2.bf16.msra.mxu0 0
      %749 = vmatprep.subr.bf16.mxu0 0
      %750 = vmatpush2.bf16.msra.mxu0 0
      %751 = vmatprep.subr.bf16.mxu0 0
      %752 = vmatpush2.bf16.msra.mxu0 0
      %753 = vmatprep.subr.bf16.mxu0 0
      %754 = vmatpush2.bf16.msra.mxu0 0
      %755 = vmatprep.subr.bf16.mxu0 0
      %756 = vmatpush2.bf16.msra.mxu0 0
      %757 = vmatprep.mubr.bf16.mxu0 0
      %758 = vmatmul.mubr.bf16.gmra.mxu0 %v720
      %v759 = vpop.f32.mrf.mxu0
      %v760 = vadd.f32 0.0, %v759
      %v761 = vpop.f32.mrf.mxu0
      %v762 = vpop.f32.mrf.mxu0
      %v763 = vadd.f32 0.0, %v762
      %v764 = vpop.f32.mrf.mxu0
      %765 = vdwg.mxu0
      %v766 = vld [vmem:[%s209] sm:$0xff]
      %v767 = vld [vmem:[%s209 + $0x8] sm:$0x1]
      %v768 = vld [vmem:[%s209 + $0x10] sm:$0xff]
      %v769 = vld [vmem:[%s209 + $0x18] sm:$0x1]
      %v770 = vld [vmem:[%s209 + $0x20] sm:$0xff]
      %v771 = vld [vmem:[%s209 + $0x28] sm:$0x1]
      %v772 = vld [vmem:[%s209 + $0x30] sm:$0xff]
      %v773 = vld [vmem:[%s209 + $0x38] sm:$0x1]
      %v774 = vmul.f32 %v766, 0.35355338
      %v775 = vmul.f32 %v767, 0.35355338
      %v776 = vmul.f32 %v768, 0.35355338
      %v777 = vmul.f32 %v769, 0.35355338
      %v778 = vmul.f32 %v770, 0.35355338
      %v779 = vmul.f32 %v771, 0.35355338
      %v780 = vmul.f32 %v772, 0.35355338
      %v781 = vmul.f32 %v773, 0.35355338
      %v782 = vpack.c.bf16 %v775, %v774
      %v783 = vpack.c.bf16 %v777, %v776
      %v784 = vpack.c.bf16 %v779, %v778
      %v785 = vpack.c.bf16 %v781, %v780
      %v786 = vpack.c.bf16 %v767, %v766
      %v787 = vpack.c.bf16 %v769, %v768
      %v788 = vpack.c.bf16 %v771, %v770
      %v789 = vpack.c.bf16 %v773, %v772
      %s790 = scalar_lea.vmem %s1, 16
      %v791 = vld [vmem:[%s790] sm:$0xff]
      %v792 = vld [vmem:[%s790 + $0x8] sm:$0x1]
      %794 = vrot.lane.b32.xlu0 %v782, 120
      %v795 = vpop.permute.xlu0 %794
      %797 = vrot.lane.b32.xlu0 %v786, 104
      %v798 = vpop.permute.xlu0 %797
      %v800 = vsel %vm266, %v795, 0
      %v803 = vsel %vm266, %v798, 0
      %805 = vmatprep.subr.bf16.mxu0 0
      %806 = vmatpush1.bf16.xpose.msra.mxu0 0
      %807 = vmatprep.subr.bf16.mxu0 0
      %808 = vmatpush1.bf16.xpose.msra.mxu0 0
      %809 = vmatprep.subr.bf16.mxu0 0
      %810 = vmatpush1.bf16.xpose.msra.mxu0 0
      %811 = vmatprep.subr.bf16.mxu0 0
      %812 = vmatpush1.bf16.xpose.msra.mxu0 0
      %813 = vmatprep.subr.bf16.mxu0 0
      %814 = vmatpush1.bf16.xpose.msra.mxu0 0
      %815 = vmatprep.subr.bf16.mxu0 0
      %816 = vmatpush1.bf16.xpose.msra.mxu0 0
      %817 = vmatprep.subr.bf16.mxu0 0
      %818 = vmatpush1.bf16.xpose.msra.mxu0 0
      %819 = vmatprep.subr.bf16.mxu0 0
      %820 = vmatpush1.bf16.xpose.msra.mxu0 %v803
      %821 = vmatprep.subr.bf16.mxu0 0
      %822 = vmatpush2.bf16.xpose.msra.mxu0 0
      %823 = vmatprep.subr.bf16.mxu0 0
      %824 = vmatpush2.bf16.xpose.msra.mxu0 0
      %825 = vmatprep.subr.bf16.mxu0 0
      %826 = vmatpush2.bf16.xpose.msra.mxu0 0
      %827 = vmatprep.subr.bf16.mxu0 0
      %828 = vmatpush2.bf16.xpose.msra.mxu0 0
      %829 = vmatprep.subr.bf16.mxu0 0
      %830 = vmatpush2.bf16.xpose.msra.mxu0 0
      %831 = vmatprep.subr.bf16.mxu0 0
      %832 = vmatpush2.bf16.xpose.msra.mxu0 0
      %833 = vmatprep.subr.bf16.mxu0 0
      %834 = vmatpush2.bf16.xpose.msra.mxu0 0
      %835 = vmatprep.subr.bf16.mxu0 0
      %836 = vmatpush2.bf16.xpose.msra.mxu0 0
      %837 = vmatprep.mubr.bf16.mxu0 0
      %838 = vmatmul.mubr.bf16.gmra.mxu0 %v800
      %v839 = vpop.f32.mrf.mxu0
      %v840 = vadd.f32 %v791, %v839
      %v841 = vpop.f32.mrf.mxu0
      %v842 = vpop.f32.mrf.mxu0
      %v843 = vadd.f32 %v792, %v842
      %v844 = vpop.f32.mrf.mxu0
      %845 = vdwg.mxu0
      %847 = vrot.lane.b32.xlu0 %v783, 120
      %v848 = vpop.permute.xlu0 %847
      %850 = vrot.lane.b32.xlu0 %v787, 104
      %v851 = vpop.permute.xlu0 %850
      %v853 = vsel %vm266, %v848, 0
      %v856 = vsel %vm266, %v851, 0
      %858 = vmatprep.subr.bf16.mxu0 0
      %859 = vmatpush1.bf16.xpose.msra.mxu0 0
      %860 = vmatprep.subr.bf16.mxu0 0
      %861 = vmatpush1.bf16.xpose.msra.mxu0 0
      %862 = vmatprep.subr.bf16.mxu0 0
      %863 = vmatpush1.bf16.xpose.msra.mxu0 0
      %864 = vmatprep.subr.bf16.mxu0 0
      %865 = vmatpush1.bf16.xpose.msra.mxu0 0
      %866 = vmatprep.subr.bf16.mxu0 0
      %867 = vmatpush1.bf16.xpose.msra.mxu0 0
      %868 = vmatprep.subr.bf16.mxu0 0
      %869 = vmatpush1.bf16.xpose.msra.mxu0 0
      %870 = vmatprep.subr.bf16.mxu0 0
      %871 = vmatpush1.bf16.xpose.msra.mxu0 0
      %872 = vmatprep.subr.bf16.mxu0 0
      %873 = vmatpush1.bf16.xpose.msra.mxu0 %v856
      %874 = vmatprep.subr.bf16.mxu0 0
      %875 = vmatpush2.bf16.xpose.msra.mxu0 0
      %876 = vmatprep.subr.bf16.mxu0 0
      %877 = vmatpush2.bf16.xpose.msra.mxu0 0
      %878 = vmatprep.subr.bf16.mxu0 0
      %879 = vmatpush2.bf16.xpose.msra.mxu0 0
      %880 = vmatprep.subr.bf16.mxu0 0
      %881 = vmatpush2.bf16.xpose.msra.mxu0 0
      %882 = vmatprep.subr.bf16.mxu0 0
      %883 = vmatpush2.bf16.xpose.msra.mxu0 0
      %884 = vmatprep.subr.bf16.mxu0 0
      %885 = vmatpush2.bf16.xpose.msra.mxu0 0
      %886 = vmatprep.subr.bf16.mxu0 0
      %887 = vmatpush2.bf16.xpose.msra.mxu0 0
      %888 = vmatprep.subr.bf16.mxu0 0
      %889 = vmatpush2.bf16.xpose.msra.mxu0 0
      %890 = vmatprep.mubr.bf16.mxu0 0
      %891 = vmatmul.mubr.bf16.gmra.mxu0 %v853
      %v892 = vpop.f32.mrf.mxu0
      %v893 = vadd.f32 %v791, %v892
      %v894 = vpop.f32.mrf.mxu0
      %v895 = vpop.f32.mrf.mxu0
      %v896 = vadd.f32 %v792, %v895
      %v897 = vpop.f32.mrf.mxu0
      %898 = vdwg.mxu0
      %900 = vrot.lane.b32.xlu0 %v784, 120
      %v901 = vpop.permute.xlu0 %900
      %903 = vrot.lane.b32.xlu0 %v788, 104
      %v904 = vpop.permute.xlu0 %903
      %v906 = vsel %vm266, %v901, 0
      %v909 = vsel %vm266, %v904, 0
      %911 = vmatprep.subr.bf16.mxu0 0
      %912 = vmatpush1.bf16.xpose.msra.mxu0 0
      %913 = vmatprep.subr.bf16.mxu0 0
      %914 = vmatpush1.bf16.xpose.msra.mxu0 0
      %915 = vmatprep.subr.bf16.mxu0 0
      %916 = vmatpush1.bf16.xpose.msra.mxu0 0
      %917 = vmatprep.subr.bf16.mxu0 0
      %918 = vmatpush1.bf16.xpose.msra.mxu0 0
      %919 = vmatprep.subr.bf16.mxu0 0
      %920 = vmatpush1.bf16.xpose.msra.mxu0 0
      %921 = vmatprep.subr.bf16.mxu0 0
      %922 = vmatpush1.bf16.xpose.msra.mxu0 0
      %923 = vmatprep.subr.bf16.mxu0 0
      %924 = vmatpush1.bf16.xpose.msra.mxu0 0
      %925 = vmatprep.subr.bf16.mxu0 0
      %926 = vmatpush1.bf16.xpose.msra.mxu0 %v909
      %927 = vmatprep.subr.bf16.mxu0 0
      %928 = vmatpush2.bf16.xpose.msra.mxu0 0
      %929 = vmatprep.subr.bf16.mxu0 0
      %930 = vmatpush2.bf16.xpose.msra.mxu0 0
      %931 = vmatprep.subr.bf16.mxu0 0
      %932 = vmatpush2.bf16.xpose.msra.mxu0 0
      %933 = vmatprep.subr.bf16.mxu0 0
      %934 = vmatpush2.bf16.xpose.msra.mxu0 0
      %935 = vmatprep.subr.bf16.mxu0 0
      %936 = vmatpush2.bf16.xpose.msra.mxu0 0
      %937 = vmatprep.subr.bf16.mxu0 0
      %938 = vmatpush2.bf16.xpose.msra.mxu0 0
      %939 = vmatprep.subr.bf16.mxu0 0
      %940 = vmatpush2.bf16.xpose.msra.mxu0 0
      %941 = vmatprep.subr.bf16.mxu0 0
      %942 = vmatpush2.bf16.xpose.msra.mxu0 0
      %943 = vmatprep.mubr.bf16.mxu0 0
      %944 = vmatmul.mubr.bf16.gmra.mxu0 %v906
      %v945 = vpop.f32.mrf.mxu0
      %v946 = vadd.f32 %v791, %v945
      %v947 = vpop.f32.mrf.mxu0
      %v948 = vpop.f32.mrf.mxu0
      %v949 = vadd.f32 %v792, %v948
      %v950 = vpop.f32.mrf.mxu0
      %951 = vdwg.mxu0
      %953 = vrot.lane.b32.xlu0 %v785, 120
      %v954 = vpop.permute.xlu0 %953
      %956 = vrot.lane.b32.xlu0 %v789, 104
      %v957 = vpop.permute.xlu0 %956
      %v959 = vsel %vm266, %v954, 0
      %v962 = vsel %vm266, %v957, 0
      %964 = vmatprep.subr.bf16.mxu0 0
      %965 = vmatpush1.bf16.xpose.msra.mxu0 0
      %966 = vmatprep.subr.bf16.mxu0 0
      %967 = vmatpush1.bf16.xpose.msra.mxu0 0
      %968 = vmatprep.subr.bf16.mxu0 0
      %969 = vmatpush1.bf16.xpose.msra.mxu0 0
      %970 = vmatprep.subr.bf16.mxu0 0
      %971 = vmatpush1.bf16.xpose.msra.mxu0 0
      %972 = vmatprep.subr.bf16.mxu0 0
      %973 = vmatpush1.bf16.xpose.msra.mxu0 0
      %974 = vmatprep.subr.bf16.mxu0 0
      %975 = vmatpush1.bf16.xpose.msra.mxu0 0
      %976 = vmatprep.subr.bf16.mxu0 0
      %977 = vmatpush1.bf16.xpose.msra.mxu0 0
      %978 = vmatprep.subr.bf16.mxu0 0
      %979 = vmatpush1.bf16.xpose.msra.mxu0 %v962
      %980 = vmatprep.subr.bf16.mxu0 0
      %981 = vmatpush2.bf16.xpose.msra.mxu0 0
      %982 = vmatprep.subr.bf16.mxu0 0
      %983 = vmatpush2.bf16.xpose.msra.mxu0 0
      %984 = vmatprep.subr.bf16.mxu0 0
      %985 = vmatpush2.bf16.xpose.msra.mxu0 0
      %986 = vmatprep.subr.bf16.mxu0 0
      %987 = vmatpush2.bf16.xpose.msra.mxu0 0
      %988 = vmatprep.subr.bf16.mxu0 0
      %989 = vmatpush2.bf16.xpose.msra.mxu0 0
      %990 = vmatprep.subr.bf16.mxu0 0
      %991 = vmatpush2.bf16.xpose.msra.mxu0 0
      %992 = vmatprep.subr.bf16.mxu0 0
      %993 = vmatpush2.bf16.xpose.msra.mxu0 0
      %994 = vmatprep.subr.bf16.mxu0 0
      %995 = vmatpush2.bf16.xpose.msra.mxu0 0
      %996 = vmatprep.mubr.bf16.mxu0 0
      %997 = vmatmul.mubr.bf16.gmra.mxu0 %v959
      %v998 = vpop.f32.mrf.mxu0
      %v999 = vadd.f32 %v791, %v998
      %v1000 = vpop.f32.mrf.mxu0
      %v1001 = vpop.f32.mrf.mxu0
      %v1002 = vadd.f32 %v792, %v1001
      %v1003 = vpop.f32.mrf.mxu0
      %1004 = vdwg.mxu0
      %v1005 = vadd.f32 %v840, %v229
      %v1006 = vadd.f32 %v843, %v230
      %v1007 = vadd.f32 %v893, %v231
      %v1008 = vadd.f32 %v896, %v232
      %v1009 = vadd.f32 %v946, %v233
      %v1010 = vadd.f32 %v949, %v234
      %v1011 = vadd.f32 %v999, %v235
      %v1012 = vadd.f32 %v1002, %v236
      %v1013 = vsel %vm472, %v1005, -inf
      %1014 = vmax.xlane.f32.xlu0 %v1013
      %v1015 = vpop.xlane.xlu0 %1014
      %v1016 = vsel %vm476, %v1006, -inf
      %1017 = vmax.xlane.f32.xlu0 %v1016
      %v1018 = vpop.xlane.xlu0 %1017
      %v1019 = vsel %vm472, %v1007, -inf
      %1020 = vmax.xlane.f32.xlu0 %v1019
      %v1021 = vpop.xlane.xlu0 %1020
      %v1022 = vsel %vm476, %v1008, -inf
      %1023 = vmax.xlane.f32.xlu0 %v1022
      %v1024 = vpop.xlane.xlu0 %1023
      %v1025 = vsel %vm472, %v1009, -inf
      %1026 = vmax.xlane.f32.xlu0 %v1025
      %v1027 = vpop.xlane.xlu0 %1026
      %v1028 = vsel %vm476, %v1010, -inf
      %1029 = vmax.xlane.f32.xlu0 %v1028
      %v1030 = vpop.xlane.xlu0 %1029
      %v1031 = vsel %vm472, %v1011, -inf
      %1032 = vmax.xlane.f32.xlu0 %v1031
      %v1033 = vpop.xlane.xlu0 %1032
      %v1034 = vsel %vm476, %v1012, -inf
      %1035 = vmax.xlane.f32.xlu0 %v1034
      %v1036 = vpop.xlane.xlu0 %1035
      %v1037 = vsub.f32 %v1005, %v1015
      %v1038 = vsub.f32 %v1006, %v1018
      %v1039 = vsub.f32 %v1007, %v1021
      %v1040 = vsub.f32 %v1008, %v1024
      %v1041 = vsub.f32 %v1009, %v1027
      %v1042 = vsub.f32 %v1010, %v1030
      %v1043 = vsub.f32 %v1011, %v1033
      %v1044 = vsub.f32 %v1012, %v1036
      %v1045 = vmul.f32 %v1037, 1.442695
      %v1046 = vpow.pop %v1045
      %v1047 = vmul.f32 %v1038, 1.442695
      %v1048 = vpow.pop %v1047
      %v1049 = vmul.f32 %v1039, 1.442695
      %v1050 = vpow.pop %v1049
      %v1051 = vmul.f32 %v1040, 1.442695
      %v1052 = vpow.pop %v1051
      %v1053 = vmul.f32 %v1041, 1.442695
      %v1054 = vpow.pop %v1053
      %v1055 = vmul.f32 %v1042, 1.442695
      %v1056 = vpow.pop %v1055
      %v1057 = vmul.f32 %v1043, 1.442695
      %v1058 = vpow.pop %v1057
      %v1059 = vmul.f32 %v1044, 1.442695
      %v1060 = vpow.pop %v1059
      %v1061 = vsel %vm472, %v1046, 0.0
      %1062 = vadd.xlane.f32.xlu0 %v1061
      %v1063 = vpop.xlane.xlu0 %1062
      %v1064 = vsel %vm476, %v1048, 0.0
      %1065 = vadd.xlane.f32.xlu0 %v1064
      %v1066 = vpop.xlane.xlu0 %1065
      %v1067 = vsel %vm472, %v1050, 0.0
      %1068 = vadd.xlane.f32.xlu0 %v1067
      %v1069 = vpop.xlane.xlu0 %1068
      %v1070 = vsel %vm476, %v1052, 0.0
      %1071 = vadd.xlane.f32.xlu0 %v1070
      %v1072 = vpop.xlane.xlu0 %1071
      %v1073 = vsel %vm472, %v1054, 0.0
      %1074 = vadd.xlane.f32.xlu0 %v1073
      %v1075 = vpop.xlane.xlu0 %1074
      %v1076 = vsel %vm476, %v1056, 0.0
      %1077 = vadd.xlane.f32.xlu0 %v1076
      %v1078 = vpop.xlane.xlu0 %1077
      %v1079 = vsel %vm472, %v1058, 0.0
      %1080 = vadd.xlane.f32.xlu0 %v1079
      %v1081 = vpop.xlane.xlu0 %1080
      %v1082 = vsel %vm476, %v1060, 0.0
      %1083 = vadd.xlane.f32.xlu0 %v1082
      %v1084 = vpop.xlane.xlu0 %1083
      %v1085 = vrcp.pop %v1063
      %v1086 = vrcp.pop %v1066
      %v1087 = vrcp.pop %v1069
      %v1088 = vrcp.pop %v1072
      %v1089 = vrcp.pop %v1075
      %v1090 = vrcp.pop %v1078
      %v1091 = vrcp.pop %v1081
      %v1092 = vrcp.pop %v1084
      %v1093 = vmul.f32 %v1046, %v1085
      %v1094 = vmul.f32 %v1048, %v1086
      %v1095 = vmul.f32 %v1050, %v1087
      %v1096 = vmul.f32 %v1052, %v1088
      %v1097 = vmul.f32 %v1054, %v1089
      %v1098 = vmul.f32 %v1056, %v1090
      %v1099 = vmul.f32 %v1058, %v1091
      %v1100 = vmul.f32 %v1060, %v1092
      %v1101 = vpack.c.bf16 %v1094, %v1093
      %v1102 = vpack.c.bf16 %v1096, %v1095
      %v1103 = vpack.c.bf16 %v1098, %v1097
      %v1104 = vpack.c.bf16 %v1100, %v1099
      %1105 = vrot.lane.b32.xlu0 %v786, 88
      %v1106 = vpop.permute.xlu0 %1105
      %v1108 = vsel %vm472, %v1101, 0
      %v1111 = vand.u32 %v1106, %v574
      %1113 = vmatprep.subr.bf16.mxu0 0
      %1114 = vmatpush1.bf16.msra.mxu0 0
      %1115 = vmatprep.subr.bf16.mxu0 0
      %1116 = vmatpush1.bf16.msra.mxu0 0
      %1117 = vmatprep.subr.bf16.mxu0 0
      %1118 = vmatpush1.bf16.msra.mxu0 0
      %1119 = vmatprep.subr.bf16.mxu0 0
      %1120 = vmatpush1.bf16.msra.mxu0 0
      %1121 = vmatprep.subr.bf16.mxu0 0
      %1122 = vmatpush1.bf16.msra.mxu0 0
      %1123 = vmatprep.subr.bf16.mxu0 0
      %1124 = vmatpush1.bf16.msra.mxu0 0
      %1125 = vmatprep.subr.bf16.mxu0 0
      %1126 = vmatpush1.bf16.msra.mxu0 0
      %1127 = vmatprep.subr.bf16.mxu0 0
      %1128 = vmatpush1.bf16.msra.mxu0 %v1111
      %1129 = vmatprep.subr.bf16.mxu0 0
      %1130 = vmatpush2.bf16.msra.mxu0 0
      %1131 = vmatprep.subr.bf16.mxu0 0
      %1132 = vmatpush2.bf16.msra.mxu0 0
      %1133 = vmatprep.subr.bf16.mxu0 0
      %1134 = vmatpush2.bf16.msra.mxu0 0
      %1135 = vmatprep.subr.bf16.mxu0 0
      %1136 = vmatpush2.bf16.msra.mxu0 0
      %1137 = vmatprep.subr.bf16.mxu0 0
      %1138 = vmatpush2.bf16.msra.mxu0 0
      %1139 = vmatprep.subr.bf16.mxu0 0
      %1140 = vmatpush2.bf16.msra.mxu0 0
      %1141 = vmatprep.subr.bf16.mxu0 0
      %1142 = vmatpush2.bf16.msra.mxu0 0
      %1143 = vmatprep.subr.bf16.mxu0 0
      %1144 = vmatpush2.bf16.msra.mxu0 0
      %1145 = vmatprep.mubr.bf16.mxu0 0
      %1146 = vmatmul.mubr.bf16.gmra.mxu0 %v1108
      %v1147 = vpop.f32.mrf.mxu0
      %v1148 = vadd.f32 0.0, %v1147
      %v1149 = vpop.f32.mrf.mxu0
      %v1150 = vpop.f32.mrf.mxu0
      %v1151 = vadd.f32 0.0, %v1150
      %v1152 = vpop.f32.mrf.mxu0
      %1153 = vdwg.mxu0
      %1154 = vrot.lane.b32.xlu0 %v787, 88
      %v1155 = vpop.permute.xlu0 %1154
      %v1157 = vsel %vm472, %v1102, 0
      %v1160 = vand.u32 %v1155, %v574
      %1162 = vmatprep.subr.bf16.mxu0 0
      %1163 = vmatpush1.bf16.msra.mxu0 0
      %1164 = vmatprep.subr.bf16.mxu0 0
      %1165 = vmatpush1.bf16.msra.mxu0 0
      %1166 = vmatprep.subr.bf16.mxu0 0
      %1167 = vmatpush1.bf16.msra.mxu0 0
      %1168 = vmatprep.subr.bf16.mxu0 0
      %1169 = vmatpush1.bf16.msra.mxu0 0
      %1170 = vmatprep.subr.bf16.mxu0 0
      %1171 = vmatpush1.bf16.msra.mxu0 0
      %1172 = vmatprep.subr.bf16.mxu0 0
      %1173 = vmatpush1.bf16.msra.mxu0 0
      %1174 = vmatprep.subr.bf16.mxu0 0
      %1175 = vmatpush1.bf16.msra.mxu0 0
      %1176 = vmatprep.subr.bf16.mxu0 0
      %1177 = vmatpush1.bf16.msra.mxu0 %v1160
      %1178 = vmatprep.subr.bf16.mxu0 0
      %1179 = vmatpush2.bf16.msra.mxu0 0
      %1180 = vmatprep.subr.bf16.mxu0 0
      %1181 = vmatpush2.bf16.msra.mxu0 0
      %1182 = vmatprep.subr.bf16.mxu0 0
      %1183 = vmatpush2.bf16.msra.mxu0 0
      %1184 = vmatprep.subr.bf16.mxu0 0
      %1185 = vmatpush2.bf16.msra.mxu0 0
      %1186 = vmatprep.subr.bf16.mxu0 0
      %1187 = vmatpush2.bf16.msra.mxu0 0
      %1188 = vmatprep.subr.bf16.mxu0 0
      %1189 = vmatpush2.bf16.msra.mxu0 0
      %1190 = vmatprep.subr.bf16.mxu0 0
      %1191 = vmatpush2.bf16.msra.mxu0 0
      %1192 = vmatprep.subr.bf16.mxu0 0
      %1193 = vmatpush2.bf16.msra.mxu0 0
      %1194 = vmatprep.mubr.bf16.mxu0 0
      %1195 = vmatmul.mubr.bf16.gmra.mxu0 %v1157
      %v1196 = vpop.f32.mrf.mxu0
      %v1197 = vadd.f32 0.0, %v1196
      %v1198 = vpop.f32.mrf.mxu0
      %v1199 = vpop.f32.mrf.mxu0
      %v1200 = vadd.f32 0.0, %v1199
      %v1201 = vpop.f32.mrf.mxu0
      %1202 = vdwg.mxu0
      %1203 = vrot.lane.b32.xlu0 %v788, 88
      %v1204 = vpop.permute.xlu0 %1203
      %v1206 = vsel %vm472, %v1103, 0
      %v1209 = vand.u32 %v1204, %v574
      %1211 = vmatprep.subr.bf16.mxu0 0
      %1212 = vmatpush1.bf16.msra.mxu0 0
      %1213 = vmatprep.subr.bf16.mxu0 0
      %1214 = vmatpush1.bf16.msra.mxu0 0
      %1215 = vmatprep.subr.bf16.mxu0 0
      %1216 = vmatpush1.bf16.msra.mxu0 0
      %1217 = vmatprep.subr.bf16.mxu0 0
      %1218 = vmatpush1.bf16.msra.mxu0 0
      %1219 = vmatprep.subr.bf16.mxu0 0
      %1220 = vmatpush1.bf16.msra.mxu0 0
      %1221 = vmatprep.subr.bf16.mxu0 0
      %1222 = vmatpush1.bf16.msra.mxu0 0
      %1223 = vmatprep.subr.bf16.mxu0 0
      %1224 = vmatpush1.bf16.msra.mxu0 0
      %1225 = vmatprep.subr.bf16.mxu0 0
      %1226 = vmatpush1.bf16.msra.mxu0 %v1209
      %1227 = vmatprep.subr.bf16.mxu0 0
      %1228 = vmatpush2.bf16.msra.mxu0 0
      %1229 = vmatprep.subr.bf16.mxu0 0
      %1230 = vmatpush2.bf16.msra.mxu0 0
      %1231 = vmatprep.subr.bf16.mxu0 0
      %1232 = vmatpush2.bf16.msra.mxu0 0
      %1233 = vmatprep.subr.bf16.mxu0 0
      %1234 = vmatpush2.bf16.msra.mxu0 0
      %1235 = vmatprep.subr.bf16.mxu0 0
      %1236 = vmatpush2.bf16.msra.mxu0 0
      %1237 = vmatprep.subr.bf16.mxu0 0
      %1238 = vmatpush2.bf16.msra.mxu0 0
      %1239 = vmatprep.subr.bf16.mxu0 0
      %1240 = vmatpush2.bf16.msra.mxu0 0
      %1241 = vmatprep.subr.bf16.mxu0 0
      %1242 = vmatpush2.bf16.msra.mxu0 0
      %1243 = vmatprep.mubr.bf16.mxu0 0
      %1244 = vmatmul.mubr.bf16.gmra.mxu0 %v1206
      %v1245 = vpop.f32.mrf.mxu0
      %v1246 = vadd.f32 0.0, %v1245
      %v1247 = vpop.f32.mrf.mxu0
      %v1248 = vpop.f32.mrf.mxu0
      %v1249 = vadd.f32 0.0, %v1248
      %v1250 = vpop.f32.mrf.mxu0
      %1251 = vdwg.mxu0
      %1252 = vrot.lane.b32.xlu0 %v789, 88
      %v1253 = vpop.permute.xlu0 %1252
      %v1255 = vsel %vm472, %v1104, 0
      %v1258 = vand.u32 %v1253, %v574
      %1260 = vmatprep.subr.bf16.mxu0 0
      %1261 = vmatpush1.bf16.msra.mxu0 0
      %1262 = vmatprep.subr.bf16.mxu0 0
      %1263 = vmatpush1.bf16.msra.mxu0 0
      %1264 = vmatprep.subr.bf16.mxu0 0
      %1265 = vmatpush1.bf16.msra.mxu0 0
      %1266 = vmatprep.subr.bf16.mxu0 0
      %1267 = vmatpush1.bf16.msra.mxu0 0
      %1268 = vmatprep.subr.bf16.mxu0 0
      %1269 = vmatpush1.bf16.msra.mxu0 0
      %1270 = vmatprep.subr.bf16.mxu0 0
      %1271 = vmatpush1.bf16.msra.mxu0 0
      %1272 = vmatprep.subr.bf16.mxu0 0
      %1273 = vmatpush1.bf16.msra.mxu0 0
      %1274 = vmatprep.subr.bf16.mxu0 0
      %1275 = vmatpush1.bf16.msra.mxu0 %v1258
      %1276 = vmatprep.subr.bf16.mxu0 0
      %1277 = vmatpush2.bf16.msra.mxu0 0
      %1278 = vmatprep.subr.bf16.mxu0 0
      %1279 = vmatpush2.bf16.msra.mxu0 0
      %1280 = vmatprep.subr.bf16.mxu0 0
      %1281 = vmatpush2.bf16.msra.mxu0 0
      %1282 = vmatprep.subr.bf16.mxu0 0
      %1283 = vmatpush2.bf16.msra.mxu0 0
      %1284 = vmatprep.subr.bf16.mxu0 0
      %1285 = vmatpush2.bf16.msra.mxu0 0
      %1286 = vmatprep.subr.bf16.mxu0 0
      %1287 = vmatpush2.bf16.msra.mxu0 0
      %1288 = vmatprep.subr.bf16.mxu0 0
      %1289 = vmatpush2.bf16.msra.mxu0 0
      %1290 = vmatprep.subr.bf16.mxu0 0
      %1291 = vmatpush2.bf16.msra.mxu0 0
      %1292 = vmatprep.mubr.bf16.mxu0 0
      %1293 = vmatmul.mubr.bf16.gmra.mxu0 %v1255
      %v1294 = vpop.f32.mrf.mxu0
      %v1295 = vadd.f32 0.0, %v1294
      %v1296 = vpop.f32.mrf.mxu0
      %v1297 = vpop.f32.mrf.mxu0
      %v1298 = vadd.f32 0.0, %v1297
      %v1299 = vpop.f32.mrf.mxu0
      %1300 = vdwg.mxu0
      %1309 = vrot.lane.b32.xlu0 %v1148, 8
      %v1310 = vpop.permute.xlu0 %1309
      %1311 = vrot.lane.b32.xlu0 %v1151, 8
      %v1312 = vpop.permute.xlu0 %1311
      %1313 = vrot.lane.b32.xlu0 %v1197, 8
      %v1314 = vpop.permute.xlu0 %1313
      %1315 = vrot.lane.b32.xlu0 %v1200, 8
      %v1316 = vpop.permute.xlu0 %1315
      %1317 = vrot.lane.b32.xlu0 %v1246, 8
      %v1318 = vpop.permute.xlu0 %1317
      %1319 = vrot.lane.b32.xlu0 %v1249, 8
      %v1320 = vpop.permute.xlu0 %1319
      %1321 = vrot.lane.b32.xlu0 %v1295, 8
      %v1322 = vpop.permute.xlu0 %1321
      %1323 = vrot.lane.b32.xlu0 %v1298, 8
      %v1324 = vpop.permute.xlu0 %1323
      %v1333 = vsel %vm266, %v613, %v1310
      %v1334 = vsel %vm266, %v616, %v1312
      %v1335 = vsel %vm266, %v662, %v1314
      %v1336 = vsel %vm266, %v665, %v1316
      %v1337 = vsel %vm266, %v711, %v1318
      %v1338 = vsel %vm266, %v714, %v1320
      %v1339 = vsel %vm266, %v760, %v1322
      %v1340 = vsel %vm266, %v763, %v1324
      %vm1341 = vcmask 130048
      %1342 = vst.msk [vmem:[%s225] sm:$0xff] %vm1341, %v1333
      %vm1343 = vcmask 122880
      %1344 = vst.msk [vmem:[%s225 + $0x8] sm:$0x1] %vm1343, %v1334
      %1345 = vst.msk [vmem:[%s225 + $0x10] sm:$0xff] %vm1341, %v1335
      %1346 = vst.msk [vmem:[%s225 + $0x18] sm:$0x1] %vm1343, %v1336
      %1347 = vst.msk [vmem:[%s225 + $0x20] sm:$0xff] %vm1341, %v1337
      %1348 = vst.msk [vmem:[%s225 + $0x28] sm:$0x1] %vm1343, %v1338
      %1349 = vst.msk [vmem:[%s225 + $0x30] sm:$0xff] %vm1341, %v1339
      %1350 = vst.msk [vmem:[%s225 + $0x38] sm:$0x1] %vm1343, %v1340
      %s1351 = sadd.s32 %s18, %s19
      %s1352 = smul.u32 4, %s1351
      %p1353 = scmp.lt.s32.totalorder %s1352, 7
      %s1354 = scalar_select %p1353, %s1352, 7
      %s1355 = smul.addr %s1354, 2
      %s1356 = smul.addr %s1355, 8
      %s1357 = scalar_lea.vmem %s3, %s1356
      // Predicated region
      $region33: #{forward.22} parent=31 // pred_check
        %p1358 = pneg %p121
      $region34: #{forward.22} parent=31 // pred_check_branch
        %1360 = sbr.rel (%p1358) target = $region36
      $region35: #{forward.22} parent=31 // pred_region
        %s1361 = sadd.s32 %s18, %s19
        %s1362 = smul.u32 4, %s1361
      $region36: #{forward.22} parent=31 // pred_fallthru
        _
    $region32: #{forward.22} parent=5 // pred_fallthru
      _
    %p1363 = scmp.le.s32.totalorder 2, %s9
    // Predicated region
    $region37: #{forward.22} parent=5 // pred_check
      %p1364 = pneg %p1363
    $region38: #{forward.22} parent=5 // pred_check_branch
      %1366 = sbr.rel (%p1364) target = $region40
    $region39: #{forward.22} parent=5 // pred_region
      %s1367 = ssub.s32 %s9, 2
      // Predicated region
      $region41: #{forward.22} parent=39 // pred_check
        %p1368 = pneg %p127
      $region42: #{forward.22} parent=39 // pred_check_branch
        %1370 = sbr.rel (%p1368) target = $region44
      $region43: #{forward.22} parent=39 // pred_region
        %s1371 = sadd.s32 %s20, %s21
        %s1372 = smul.u32 4, %s1371
        %p1373 = scmp.lt.s32.totalorder %s1372, 7
        %s1374 = scalar_select %p1373, %s1372, 7
        %s1375 = smul.addr %s1374, 2
        %s1376 = smul.addr %s1375, 8
        %s1377 = scalar_lea.vmem %s3, %s1376
      $region44: #{forward.22} parent=39 // pred_fallthru
        _
    $region40: #{forward.22} parent=5 // pred_fallthru
      _
  $region6: #{forward.22} parent=0 // loop_footer
    %s13 = sadd.s32 1, %s9
  $region7: #{forward.22} parent=0 // loop_footer_branch
    %8 = sbr.rel target = $region3
  $region8: #{forward.22} parent=0 // loop_exit
    _

// kernel: forward.23
$region0: #{forward.23}
  #allocation0 [shape = 'u32[]', space=smem, size = 0x4, offset = 0x4, fixed_abs, tag = 'smem constant byte address 0x4 - core index']
  #allocation1 [shape = 'u32[144,128]{1,0:T(1,128)}', space=vmem, size = 0x12000, scoped, tag = 'internal scratch']
  %s0 = inlined_call_operand.vmem [shape: f32[72,16], index: 0, kind: input, shape index: {}]
  %s1 = inlined_call_operand.vmem [shape: bf16[16,16], index: 1, kind: input, shape index: {}]
  %s2 = inlined_call_operand.vmem [shape: f32[1,16], index: 2, kind: input, shape index: {}]
  %s3 = inlined_call_operand.vmem [shape: f32[72,16], index: 3, kind: input, shape index: {}]
  %s4 = inlined_call_operand.vmem [shape: f32[72,16], index: 4, kind: output, shape index: {}]
  %s5 = sld [smem:[#allocation0]]
  $region26: #{forward.23} parent=0
    _
  %s7 = ssub.s32 1, %s5
  %s8 = scalar_select 0, %s7, %s5
  // Predicated region
  $region2: #{forward.23} parent=0 // pred_check
    _
  $region3: #{forward.23} parent=0 // pred_check_branch
    %10 = sbr.rel (0) target = $region5
  $region4: #{forward.23} parent=0 // pred_region
    _
  $region5: #{forward.23} parent=0 // pred_fallthru
    _
  // Predicated region
  $region6: #{forward.23} parent=0 // pred_check
    _
  $region7: #{forward.23} parent=0 // pred_check_branch
    %12 = sbr.rel (0) target = $region9
  $region8: #{forward.23} parent=0 // pred_region
    _
  $region9: #{forward.23} parent=0 // pred_fallthru
    _
  // Predicated region
  $region10: #{forward.23} parent=0 // pred_check
    _
  $region11: #{forward.23} parent=0 // pred_check_branch
    %14 = sbr.rel (0) target = $region13
  $region12: #{forward.23} parent=0 // pred_region
    _
  $region13: #{forward.23} parent=0 // pred_fallthru
    _
  // Predicated region
  $region14: #{forward.23} parent=0 // pred_check
    _
  $region15: #{forward.23} parent=0 // pred_check_branch
    %16 = sbr.rel (0) target = $region17
  $region16: #{forward.23} parent=0 // pred_region
    _
  $region17: #{forward.23} parent=0 // pred_fallthru
    _
  %v18 = vld [vmem:[%s0] sm:$0xff]
  %v19 = vld [vmem:[%s0 + $0x8] sm:$0xff]
  %v20 = vld [vmem:[%s0 + $0x10] sm:$0xff]
  %v21 = vld [vmem:[%s0 + $0x18] sm:$0xff]
  %v22 = vld [vmem:[%s0 + $0x20] sm:$0xff]
  %v23 = vld [vmem:[%s0 + $0x28] sm:$0xff]
  %v24 = vld [vmem:[%s0 + $0x30] sm:$0xff]
  %v25 = vld [vmem:[%s0 + $0x38] sm:$0xff]
  %v26 = vld [vmem:[%s0 + $0x40] sm:$0xff]
  %v27 = vpack.c.bf16 %v19, %v18
  %v28 = vpack.c.bf16 %v21, %v20
  %v29 = vpack.c.bf16 %v23, %v22
  %v30 = vpack.c.bf16 %v25, %v24
  %v31 = vpack.c.bf16 %v26, %v26
  %v32 = vld [vmem:[%s1] sm:$0xf]
  %v33 = vld [vmem:[%s1 + $0x4] sm:$0xf]
  %v34 = vld [vmem:[%s2] sm:$0x1]
  %v36 = vlaneseq
  %v37 = vshrl.u32 %v36, 7
  %v38 = vsub.s32 0, %v37
  %v39 = vrot.slane %v34, %v38
  %v43 = vunpack.c.l.b16 %v32
  %v44 = vunpack.c.l.b16 %v33
  %v45 = vpack.c.b16 %v44, %v43
  %vm47 = vcmask 130048
  %v49 = vsel %vm47, %v27, 0
  %v52 = vsel %vm47, %v28, 0
  %v55 = vsel %vm47, %v29, 0
  %v58 = vsel %vm47, %v30, 0
  %v61 = vsel %vm47, %v31, 0
  %63 = vmatprep.subr.bf16.mxu0 0
  %64 = vmatpush1.bf16.msra.mxu0 0
  %65 = vmatprep.subr.bf16.mxu0 0
  %66 = vmatpush1.bf16.msra.mxu0 0
  %67 = vmatprep.subr.bf16.mxu0 0
  %68 = vmatpush1.bf16.msra.mxu0 0
  %69 = vmatprep.subr.bf16.mxu0 0
  %70 = vmatpush1.bf16.msra.mxu0 0
  %71 = vmatprep.subr.bf16.mxu0 0
  %72 = vmatpush1.bf16.msra.mxu0 0
  %73 = vmatprep.subr.bf16.mxu0 0
  %74 = vmatpush1.bf16.msra.mxu0 0
  %75 = vmatprep.subr.bf16.mxu0 0
  %76 = vmatpush1.bf16.msra.mxu0 0
  %77 = vmatprep.subr.bf16.mxu0 0
  %78 = vmatpush1.bf16.msra.mxu0 %v45
  %79 = vmatprep.subr.bf16.mxu0 0
  %80 = vmatpush2.bf16.msra.mxu0 0
  %81 = vmatprep.subr.bf16.mxu0 0
  %82 = vmatpush2.bf16.msra.mxu0 0
  %83 = vmatprep.subr.bf16.mxu0 0
  %84 = vmatpush2.bf16.msra.mxu0 0
  %85 = vmatprep.subr.bf16.mxu0 0
  %86 = vmatpush2.bf16.msra.mxu0 0
  %87 = vmatprep.subr.bf16.mxu0 0
  %88 = vmatpush2.bf16.msra.mxu0 0
  %89 = vmatprep.subr.bf16.mxu0 0
  %90 = vmatpush2.bf16.msra.mxu0 0
  %91 = vmatprep.subr.bf16.mxu0 0
  %92 = vmatpush2.bf16.msra.mxu0 0
  %93 = vmatprep.subr.bf16.mxu0 0
  %94 = vmatpush2.bf16.msra.mxu0 0
  %95 = vmatprep.mubr.bf16.mxu0 0
  %96 = vmatmul.mubr.bf16.gmra.mxu0 %v49
  %v97 = vpop.f32.mrf.mxu0
  %v98 = vadd.f32 %v39, %v97
  %v99 = vpop.f32.mrf.mxu0
  %v100 = vpop.f32.mrf.mxu0
  %v101 = vadd.f32 %v39, %v100
  %v102 = vpop.f32.mrf.mxu0
  %103 = vmatprep.mubr.bf16.mxu0 0
  %104 = vmatmul.mubr.bf16.gmra.mxu0 %v52
  %v105 = vpop.f32.mrf.mxu0
  %v106 = vadd.f32 %v39, %v105
  %v107 = vpop.f32.mrf.mxu0
  %v108 = vpop.f32.mrf.mxu0
  %v109 = vadd.f32 %v39, %v108
  %v110 = vpop.f32.mrf.mxu0
  %111 = vmatprep.mubr.bf16.mxu0 0
  %112 = vmatmul.mubr.bf16.gmra.mxu0 %v55
  %v113 = vpop.f32.mrf.mxu0
  %v114 = vadd.f32 %v39, %v113
  %v115 = vpop.f32.mrf.mxu0
  %v116 = vpop.f32.mrf.mxu0
  %v117 = vadd.f32 %v39, %v116
  %v118 = vpop.f32.mrf.mxu0
  %119 = vmatprep.mubr.bf16.mxu0 0
  %120 = vmatmul.mubr.bf16.gmra.mxu0 %v58
  %v121 = vpop.f32.mrf.mxu0
  %v122 = vadd.f32 %v39, %v121
  %v123 = vpop.f32.mrf.mxu0
  %v124 = vpop.f32.mrf.mxu0
  %v125 = vadd.f32 %v39, %v124
  %v126 = vpop.f32.mrf.mxu0
  %127 = vmatprep.mubr.bf16.mxu0 0
  %128 = vmatmul.mubr.bf16.gmra.mxu0 %v61
  %v129 = vpop.f32.mrf.mxu0
  %v130 = vadd.f32 %v39, %v129
  %v131 = vpop.f32.mrf.mxu0
  %v132 = vpop.f32.mrf.mxu0
  %v133 = vpop.f32.mrf.mxu0
  %134 = vdwg.mxu0
  %v135 = vld [vmem:[%s3] sm:$0xff]
  %v136 = vld [vmem:[%s3 + $0x8] sm:$0xff]
  %v137 = vld [vmem:[%s3 + $0x10] sm:$0xff]
  %v138 = vld [vmem:[%s3 + $0x18] sm:$0xff]
  %v139 = vld [vmem:[%s3 + $0x20] sm:$0xff]
  %v140 = vld [vmem:[%s3 + $0x28] sm:$0xff]
  %v141 = vld [vmem:[%s3 + $0x30] sm:$0xff]
  %v142 = vld [vmem:[%s3 + $0x38] sm:$0xff]
  %v143 = vld [vmem:[%s3 + $0x40] sm:$0xff]
  %v144 = vadd.f32 %v135, %v98
  %v145 = vadd.f32 %v136, %v101
  %v146 = vadd.f32 %v137, %v106
  %v147 = vadd.f32 %v138, %v109
  %v148 = vadd.f32 %v139, %v114
  %v149 = vadd.f32 %v140, %v117
  %v150 = vadd.f32 %v141, %v122
  %v151 = vadd.f32 %v142, %v125
  %v152 = vadd.f32 %v143, %v130
  %153 = vst.msk [vmem:[%s4] sm:$0xff] %vm47, %v144
  %154 = vst.msk [vmem:[%s4 + $0x8] sm:$0xff] %vm47, %v145
  %155 = vst.msk [vmem:[%s4 + $0x10] sm:$0xff] %vm47, %v146
  %156 = vst.msk [vmem:[%s4 + $0x18] sm:$0xff] %vm47, %v147
  %157 = vst.msk [vmem:[%s4 + $0x20] sm:$0xff] %vm47, %v148
  %158 = vst.msk [vmem:[%s4 + $0x28] sm:$0xff] %vm47, %v149
  %159 = vst.msk [vmem:[%s4 + $0x30] sm:$0xff] %vm47, %v150
  %160 = vst.msk [vmem:[%s4 + $0x38] sm:$0xff] %vm47, %v151
  %161 = vst.msk [vmem:[%s4 + $0x40] sm:$0xff] %vm47, %v152
  // Predicated region
  $region18: #{forward.23} parent=0 // pred_check
    _
  $region19: #{forward.23} parent=0 // pred_check_branch
    %163 = sbr.rel (0) target = $region21
  $region20: #{forward.23} parent=0 // pred_region
    _
  $region21: #{forward.23} parent=0 // pred_fallthru
    _
  // Predicated region
  $region22: #{forward.23} parent=0 // pred_check
    _
  $region23: #{forward.23} parent=0 // pred_check_branch
    %165 = sbr.rel (0) target = $region25
  $region24: #{forward.23} parent=0 // pred_region
    _
  $region25: #{forward.23} parent=0 // pred_fallthru
    _

// kernel: forward.24
$region0: #{forward.24}
  #allocation0 [shape = 'u32[]', space=smem, size = 0x4, offset = 0x4, fixed_abs, tag = 'smem constant byte address 0x4 - core index']
  #allocation1 [shape = 'u32[144,128]{1,0:T(1,128)}', space=vmem, size = 0x12000, scoped, tag = 'internal scratch']
  %s0 = inlined_call_operand.vmem [shape: f32[72,16], index: 0, kind: input, shape index: {}]
  %s1 = inlined_call_operand.vmem [shape: f32[1,16], index: 1, kind: input, shape index: {}]
  %s2 = inlined_call_operand.vmem [shape: f32[1,16], index: 2, kind: input, shape index: {}]
  %s3 = inlined_call_operand.vmem [shape: bf16[16,64], index: 3, kind: input, shape index: {}]
  %s4 = inlined_call_operand.vmem [shape: f32[1,64], index: 4, kind: input, shape index: {}]
  %s5 = inlined_call_operand.vmem [shape: bf16[64,16], index: 5, kind: input, shape index: {}]
  %s6 = inlined_call_operand.vmem [shape: f32[1,16], index: 6, kind: input, shape index: {}]
  %s7 = inlined_call_operand.vmem [shape: f32[72,16], index: 7, kind: output, shape index: {}]
  %s8 = sld [smem:[#allocation0]]
  $region38: #{forward.24} parent=0
    _
  %s10 = ssub.s32 1, %s8
  %s11 = scalar_select 0, %s10, %s8
  // Predicated region
  $region2: #{forward.24} parent=0 // pred_check
    _
  $region3: #{forward.24} parent=0 // pred_check_branch
    %13 = sbr.rel (0) target = $region5
  $region4: #{forward.24} parent=0 // pred_region
    _
  $region5: #{forward.24} parent=0 // pred_fallthru
    _
  // Predicated region
  $region6: #{forward.24} parent=0 // pred_check
    _
  $region7: #{forward.24} parent=0 // pred_check_branch
    %15 = sbr.rel (0) target = $region9
  $region8: #{forward.24} parent=0 // pred_region
    _
  $region9: #{forward.24} parent=0 // pred_fallthru
    _
  // Predicated region
  $region10: #{forward.24} parent=0 // pred_check
    _
  $region11: #{forward.24} parent=0 // pred_check_branch
    %17 = sbr.rel (0) target = $region13
  $region12: #{forward.24} parent=0 // pred_region
    _
  $region13: #{forward.24} parent=0 // pred_fallthru
    _
  // Predicated region
  $region14: #{forward.24} parent=0 // pred_check
    _
  $region15: #{forward.24} parent=0 // pred_check_branch
    %19 = sbr.rel (0) target = $region17
  $region16: #{forward.24} parent=0 // pred_region
    _
  $region17: #{forward.24} parent=0 // pred_fallthru
    _
  // Predicated region
  $region18: #{forward.24} parent=0 // pred_check
    _
  $region19: #{forward.24} parent=0 // pred_check_branch
    %21 = sbr.rel (0) target = $region21
  $region20: #{forward.24} parent=0 // pred_region
    _
  $region21: #{forward.24} parent=0 // pred_fallthru
    _
  // Predicated region
  $region22: #{forward.24} parent=0 // pred_check
    _
  $region23: #{forward.24} parent=0 // pred_check_branch
    %23 = sbr.rel (0) target = $region25
  $region24: #{forward.24} parent=0 // pred_region
    _
  $region25: #{forward.24} parent=0 // pred_fallthru
    _
  // Predicated region
  $region26: #{forward.24} parent=0 // pred_check
    _
  $region27: #{forward.24} parent=0 // pred_check_branch
    %25 = sbr.rel (0) target = $region29
  $region28: #{forward.24} parent=0 // pred_region
    _
  $region29: #{forward.24} parent=0 // pred_fallthru
    _
  %v27 = vld [vmem:[%s0] sm:$0xff]
  %v28 = vld [vmem:[%s0 + $0x8] sm:$0xff]
  %v29 = vld [vmem:[%s0 + $0x10] sm:$0xff]
  %v30 = vld [vmem:[%s0 + $0x18] sm:$0xff]
  %v31 = vld [vmem:[%s0 + $0x20] sm:$0xff]
  %v32 = vld [vmem:[%s0 + $0x28] sm:$0xff]
  %v33 = vld [vmem:[%s0 + $0x30] sm:$0xff]
  %v34 = vld [vmem:[%s0 + $0x38] sm:$0xff]
  %v35 = vld [vmem:[%s0 + $0x40] sm:$0xff]
  %v36 = vld [vmem:[%s1] sm:$0x1]
  %v37 = vld [vmem:[%s2] sm:$0x1]
  %vm38 = vcmask 130048
  %v39 = vsel %vm38, %v27, 0.0
  %40 = vadd.xlane.f32.xlu0 %v39
  %v41 = vpop.xlane.xlu0 %40
  %v42 = vsel %vm38, %v28, 0.0
  %43 = vadd.xlane.f32.xlu0 %v42
  %v44 = vpop.xlane.xlu0 %43
  %v45 = vsel %vm38, %v29, 0.0
  %46 = vadd.xlane.f32.xlu0 %v45
  %v47 = vpop.xlane.xlu0 %46
  %v48 = vsel %vm38, %v30, 0.0
  %49 = vadd.xlane.f32.xlu0 %v48
  %v50 = vpop.xlane.xlu0 %49
  %v51 = vsel %vm38, %v31, 0.0
  %52 = vadd.xlane.f32.xlu0 %v51
  %v53 = vpop.xlane.xlu0 %52
  %v54 = vsel %vm38, %v32, 0.0
  %55 = vadd.xlane.f32.xlu0 %v54
  %v56 = vpop.xlane.xlu0 %55
  %v57 = vsel %vm38, %v33, 0.0
  %58 = vadd.xlane.f32.xlu0 %v57
  %v59 = vpop.xlane.xlu0 %58
  %v60 = vsel %vm38, %v34, 0.0
  %61 = vadd.xlane.f32.xlu0 %v60
  %v62 = vpop.xlane.xlu0 %61
  %v63 = vsel %vm38, %v35, 0.0
  %64 = vadd.xlane.f32.xlu0 %v63
  %v65 = vpop.xlane.xlu0 %64
  %v66 = vrcp.pop 16.0
  %v67 = vmul.f32 %v41, %v66
  %v68 = vmul.f32 %v44, %v66
  %v69 = vmul.f32 %v47, %v66
  %v70 = vmul.f32 %v50, %v66
  %v71 = vmul.f32 %v53, %v66
  %v72 = vmul.f32 %v56, %v66
  %v73 = vmul.f32 %v59, %v66
  %v74 = vmul.f32 %v62, %v66
  %v75 = vmul.f32 %v65, %v66
  %v76 = vsub.f32 %v27, %v67
  %v77 = vsub.f32 %v28, %v68
  %v78 = vsub.f32 %v29, %v69
  %v79 = vsub.f32 %v30, %v70
  %v80 = vsub.f32 %v31, %v71
  %v81 = vsub.f32 %v32, %v72
  %v82 = vsub.f32 %v33, %v73
  %v83 = vsub.f32 %v34, %v74
  %v84 = vsub.f32 %v35, %v75
  %v85 = vmul.f32 %v76, %v76
  %v86 = vmul.f32 %v77, %v77
  %v87 = vmul.f32 %v78, %v78
  %v88 = vmul.f32 %v79, %v79
  %v89 = vmul.f32 %v80, %v80
  %v90 = vmul.f32 %v81, %v81
  %v91 = vmul.f32 %v82, %v82
  %v92 = vmul.f32 %v83, %v83
  %v93 = vmul.f32 %v84, %v84
  %v94 = vsel %vm38, %v85, 0.0
  %95 = vadd.xlane.f32.xlu0 %v94
  %v96 = vpop.xlane.xlu0 %95
  %v97 = vsel %vm38, %v86, 0.0
  %98 = vadd.xlane.f32.xlu0 %v97
  %v99 = vpop.xlane.xlu0 %98
  %v100 = vsel %vm38, %v87, 0.0
  %101 = vadd.xlane.f32.xlu0 %v100
  %v102 = vpop.xlane.xlu0 %101
  %v103 = vsel %vm38, %v88, 0.0
  %104 = vadd.xlane.f32.xlu0 %v103
  %v105 = vpop.xlane.xlu0 %104
  %v106 = vsel %vm38, %v89, 0.0
  %107 = vadd.xlane.f32.xlu0 %v106
  %v108 = vpop.xlane.xlu0 %107
  %v109 = vsel %vm38, %v90, 0.0
  %110 = vadd.xlane.f32.xlu0 %v109
  %v111 = vpop.xlane.xlu0 %110
  %v112 = vsel %vm38, %v91, 0.0
  %113 = vadd.xlane.f32.xlu0 %v112
  %v114 = vpop.xlane.xlu0 %113
  %v115 = vsel %vm38, %v92, 0.0
  %116 = vadd.xlane.f32.xlu0 %v115
  %v117 = vpop.xlane.xlu0 %116
  %v118 = vsel %vm38, %v93, 0.0
  %119 = vadd.xlane.f32.xlu0 %v118
  %v120 = vpop.xlane.xlu0 %119
  %v121 = vmul.f32 %v96, %v66
  %v122 = vmul.f32 %v99, %v66
  %v123 = vmul.f32 %v102, %v66
  %v124 = vmul.f32 %v105, %v66
  %v125 = vmul.f32 %v108, %v66
  %v126 = vmul.f32 %v111, %v66
  %v127 = vmul.f32 %v114, %v66
  %v128 = vmul.f32 %v117, %v66
  %v129 = vmul.f32 %v120, %v66
  %v130 = vadd.f32 %v121, 1e-05
  %v131 = vadd.f32 %v122, 1e-05
  %v132 = vadd.f32 %v123, 1e-05
  %v133 = vadd.f32 %v124, 1e-05
  %v134 = vadd.f32 %v125, 1e-05
  %v135 = vadd.f32 %v126, 1e-05
  %v136 = vadd.f32 %v127, 1e-05
  %v137 = vadd.f32 %v128, 1e-05
  %v138 = vadd.f32 %v129, 1e-05
  %v139 = vrsqrt.pop %v130
  %v140 = vrsqrt.pop %v131
  %v141 = vrsqrt.pop %v132
  %v142 = vrsqrt.pop %v133
  %v143 = vrsqrt.pop %v134
  %v144 = vrsqrt.pop %v135
  %v145 = vrsqrt.pop %v136
  %v146 = vrsqrt.pop %v137
  %v147 = vrsqrt.pop %v138
  %v148 = vmul.f32 %v76, %v139
  %v149 = vmul.f32 %v77, %v140
  %v150 = vmul.f32 %v78, %v141
  %v151 = vmul.f32 %v79, %v142
  %v152 = vmul.f32 %v80, %v143
  %v153 = vmul.f32 %v81, %v144
  %v154 = vmul.f32 %v82, %v145
  %v155 = vmul.f32 %v83, %v146
  %v156 = vmul.f32 %v84, %v147
  %v158 = vlaneseq
  %v159 = vshrl.u32 %v158, 7
  %v160 = vsub.s32 0, %v159
  %v161 = vrot.slane %v36, %v160
  %v163 = vmul.f32 %v148, %v161
  %v164 = vmul.f32 %v149, %v161
  %v165 = vmul.f32 %v150, %v161
  %v166 = vmul.f32 %v151, %v161
  %v167 = vmul.f32 %v152, %v161
  %v168 = vmul.f32 %v153, %v161
  %v169 = vmul.f32 %v154, %v161
  %v170 = vmul.f32 %v155, %v161
  %v171 = vmul.f32 %v156, %v161
  %v173 = vlaneseq
  %v174 = vshrl.u32 %v173, 7
  %v175 = vsub.s32 0, %v174
  %v176 = vrot.slane %v37, %v175
  %v178 = vadd.f32 %v163, %v176
  %v179 = vadd.f32 %v164, %v176
  %v180 = vadd.f32 %v165, %v176
  %v181 = vadd.f32 %v166, %v176
  %v182 = vadd.f32 %v167, %v176
  %v183 = vadd.f32 %v168, %v176
  %v184 = vadd.f32 %v169, %v176
  %v185 = vadd.f32 %v170, %v176
  %v186 = vadd.f32 %v171, %v176
  %v187 = vpack.c.bf16 %v179, %v178
  %v188 = vpack.c.bf16 %v181, %v180
  %v189 = vpack.c.bf16 %v183, %v182
  %v190 = vpack.c.bf16 %v185, %v184
  %v191 = vpack.c.bf16 %v186, %v186
  %v192 = vld [vmem:[%s3] sm:$0xf]
  %v193 = vld [vmem:[%s3 + $0x4] sm:$0xf]
  %v194 = vld [vmem:[%s4] sm:$0x1]
  %v196 = vlaneseq
  %v197 = vshrl.u32 %v196, 7
  %v198 = vsub.s32 0, %v197
  %v199 = vrot.slane %v194, %v198
  %v203 = vunpack.c.l.b16 %v192
  %v204 = vunpack.c.l.b16 %v193
  %v205 = vpack.c.b16 %v204, %v203
  %v208 = vsel %vm38, %v187, 0
  %v211 = vsel %vm38, %v188, 0
  %v214 = vsel %vm38, %v189, 0
  %v217 = vsel %vm38, %v190, 0
  %v220 = vsel %vm38, %v191, 0
  %222 = vmatprep.subr.bf16.mxu0 0
  %223 = vmatpush1.bf16.msra.mxu0 0
  %224 = vmatprep.subr.bf16.mxu0 0
  %225 = vmatpush1.bf16.msra.mxu0 0
  %226 = vmatprep.subr.bf16.mxu0 0
  %227 = vmatpush1.bf16.msra.mxu0 0
  %228 = vmatprep.subr.bf16.mxu0 0
  %229 = vmatpush1.bf16.msra.mxu0 0
  %230 = vmatprep.subr.bf16.mxu0 0
  %231 = vmatpush1.bf16.msra.mxu0 0
  %232 = vmatprep.subr.bf16.mxu0 0
  %233 = vmatpush1.bf16.msra.mxu0 0
  %234 = vmatprep.subr.bf16.mxu0 0
  %235 = vmatpush1.bf16.msra.mxu0 0
  %236 = vmatprep.subr.bf16.mxu0 0
  %237 = vmatpush1.bf16.msra.mxu0 %v205
  %238 = vmatprep.subr.bf16.mxu0 0
  %239 = vmatpush2.bf16.msra.mxu0 0
  %240 = vmatprep.subr.bf16.mxu0 0
  %241 = vmatpush2.bf16.msra.mxu0 0
  %242 = vmatprep.subr.bf16.mxu0 0
  %243 = vmatpush2.bf16.msra.mxu0 0
  %244 = vmatprep.subr.bf16.mxu0 0
  %245 = vmatpush2.bf16.msra.mxu0 0
  %246 = vmatprep.subr.bf16.mxu0 0
  %247 = vmatpush2.bf16.msra.mxu0 0
  %248 = vmatprep.subr.bf16.mxu0 0
  %249 = vmatpush2.bf16.msra.mxu0 0
  %250 = vmatprep.subr.bf16.mxu0 0
  %251 = vmatpush2.bf16.msra.mxu0 0
  %252 = vmatprep.subr.bf16.mxu0 0
  %253 = vmatpush2.bf16.msra.mxu0 0
  %254 = vmatprep.mubr.bf16.mxu0 0
  %255 = vmatmul.mubr.bf16.gmra.mxu0 %v208
  %v256 = vpop.f32.mrf.mxu0
  %v257 = vadd.f32 %v199, %v256
  %v258 = vpop.f32.mrf.mxu0
  %v259 = vpop.f32.mrf.mxu0
  %v260 = vadd.f32 %v199, %v259
  %v261 = vpop.f32.mrf.mxu0
  %262 = vmatprep.mubr.bf16.mxu0 0
  %263 = vmatmul.mubr.bf16.gmra.mxu0 %v211
  %v264 = vpop.f32.mrf.mxu0
  %v265 = vadd.f32 %v199, %v264
  %v266 = vpop.f32.mrf.mxu0
  %v267 = vpop.f32.mrf.mxu0
  %v268 = vadd.f32 %v199, %v267
  %v269 = vpop.f32.mrf.mxu0
  %270 = vmatprep.mubr.bf16.mxu0 0
  %271 = vmatmul.mubr.bf16.gmra.mxu0 %v214
  %v272 = vpop.f32.mrf.mxu0
  %v273 = vadd.f32 %v199, %v272
  %v274 = vpop.f32.mrf.mxu0
  %v275 = vpop.f32.mrf.mxu0
  %v276 = vadd.f32 %v199, %v275
  %v277 = vpop.f32.mrf.mxu0
  %278 = vmatprep.mubr.bf16.mxu0 0
  %279 = vmatmul.mubr.bf16.gmra.mxu0 %v217
  %v280 = vpop.f32.mrf.mxu0
  %v281 = vadd.f32 %v199, %v280
  %v282 = vpop.f32.mrf.mxu0
  %v283 = vpop.f32.mrf.mxu0
  %v284 = vadd.f32 %v199, %v283
  %v285 = vpop.f32.mrf.mxu0
  %286 = vmatprep.mubr.bf16.mxu0 0
  %287 = vmatmul.mubr.bf16.gmra.mxu0 %v220
  %v288 = vpop.f32.mrf.mxu0
  %v289 = vadd.f32 %v199, %v288
  %v290 = vpop.f32.mrf.mxu0
  %v291 = vpop.f32.mrf.mxu0
  %v292 = vpop.f32.mrf.mxu0
  %293 = vdwg.mxu0
  %v294 = vmul.f32 %v257, 0.5
  %v295 = vmul.f32 %v260, 0.5
  %v296 = vmul.f32 %v265, 0.5
  %v297 = vmul.f32 %v268, 0.5
  %v298 = vmul.f32 %v273, 0.5
  %v299 = vmul.f32 %v276, 0.5
  %v300 = vmul.f32 %v281, 0.5
  %v301 = vmul.f32 %v284, 0.5
  %v302 = vmul.f32 %v289, 0.5
  %v303 = vmul.f32 %v257, 0.70710677
  %v304 = vmul.f32 %v260, 0.70710677
  %v305 = vmul.f32 %v265, 0.70710677
  %v306 = vmul.f32 %v268, 0.70710677
  %v307 = vmul.f32 %v273, 0.70710677
  %v308 = vmul.f32 %v276, 0.70710677
  %v309 = vmul.f32 %v281, 0.70710677
  %v310 = vmul.f32 %v284, 0.70710677
  %v311 = vmul.f32 %v289, 0.70710677
  %v312 = verf.f32.pop %v303
  %v313 = verf.f32.pop %v304
  %v314 = verf.f32.pop %v305
  %v315 = verf.f32.pop %v306
  %v316 = verf.f32.pop %v307
  %v317 = verf.f32.pop %v308
  %v318 = verf.f32.pop %v309
  %v319 = verf.f32.pop %v310
  %v320 = verf.f32.pop %v311
  %v321 = vadd.f32 %v312, 1.0
  %v322 = vadd.f32 %v313, 1.0
  %v323 = vadd.f32 %v314, 1.0
  %v324 = vadd.f32 %v315, 1.0
  %v325 = vadd.f32 %v316, 1.0
  %v326 = vadd.f32 %v317, 1.0
  %v327 = vadd.f32 %v318, 1.0
  %v328 = vadd.f32 %v319, 1.0
  %v329 = vadd.f32 %v320, 1.0
  %v330 = vmul.f32 %v294, %v321
  %v331 = vmul.f32 %v295, %v322
  %v332 = vmul.f32 %v296, %v323
  %v333 = vmul.f32 %v297, %v324
  %v334 = vmul.f32 %v298, %v325
  %v335 = vmul.f32 %v299, %v326
  %v336 = vmul.f32 %v300, %v327
  %v337 = vmul.f32 %v301, %v328
  %v338 = vmul.f32 %v302, %v329
  %v339 = vpack.c.bf16 %v331, %v330
  %v340 = vpack.c.bf16 %v333, %v332
  %v341 = vpack.c.bf16 %v335, %v334
  %v342 = vpack.c.bf16 %v337, %v336
  %v343 = vpack.c.bf16 %v338, %v338
  %v344 = vld [vmem:[%s5] sm:$0xf]
  %v345 = vld [vmem:[%s5 + $0x4] sm:$0xf]
  %v346 = vld [vmem:[%s5 + $0x8] sm:$0xf]
  %v347 = vld [vmem:[%s5 + $0xc] sm:$0xf]
  %v348 = vld [vmem:[%s5 + $0x10] sm:$0xf]
  %v349 = vld [vmem:[%s5 + $0x14] sm:$0xf]
  %v350 = vld [vmem:[%s5 + $0x18] sm:$0xf]
  %v351 = vld [vmem:[%s5 + $0x1c] sm:$0xf]
  %v352 = vld [vmem:[%s6] sm:$0x1]
  %v354 = vlaneseq
  %v355 = vshrl.u32 %v354, 7
  %v356 = vsub.s32 0, %v355
  %v357 = vrot.slane %v352, %v356
  %v367 = vunpack.c.l.b16 %v344
  %v368 = vunpack.c.l.b16 %v345
  %v369 = vunpack.c.l.b16 %v346
  %v370 = vunpack.c.l.b16 %v347
  %v371 = vunpack.c.l.b16 %v348
  %v372 = vunpack.c.l.b16 %v349
  %v373 = vunpack.c.l.b16 %v350
  %v374 = vunpack.c.l.b16 %v351
  %v375 = vpack.c.b16 %v368, %v367
  %v376 = vpack.c.b16 %v370, %v369
  %v377 = vpack.c.b16 %v372, %v371
  %v378 = vpack.c.b16 %v374, %v373
  %vm383 = vcmask 523264
  %v385 = vsel %vm383, %v339, 0
  %v388 = vsel %vm383, %v340, 0
  %v391 = vsel %vm383, %v341, 0
  %v394 = vsel %vm383, %v342, 0
  %v397 = vsel %vm383, %v343, 0
  %399 = vmatprep.subr.bf16.mxu0 0
  %400 = vmatpush1.bf16.msra.mxu0 0
  %401 = vmatprep.subr.bf16.mxu0 0
  %402 = vmatpush1.bf16.msra.mxu0 0
  %403 = vmatprep.subr.bf16.mxu0 0
  %404 = vmatpush1.bf16.msra.mxu0 0
  %405 = vmatprep.subr.bf16.mxu0 0
  %406 = vmatpush1.bf16.msra.mxu0 0
  %407 = vmatprep.subr.bf16.mxu0 0
  %408 = vmatpush1.bf16.msra.mxu0 %v378
  %409 = vmatprep.subr.bf16.mxu0 0
  %410 = vmatpush1.bf16.msra.mxu0 %v377
  %411 = vmatprep.subr.bf16.mxu0 0
  %412 = vmatpush1.bf16.msra.mxu0 %v376
  %413 = vmatprep.subr.bf16.mxu0 0
  %414 = vmatpush1.bf16.msra.mxu0 %v375
  %415 = vmatprep.subr.bf16.mxu0 0
  %416 = vmatpush2.bf16.msra.mxu0 0
  %417 = vmatprep.subr.bf16.mxu0 0
  %418 = vmatpush2.bf16.msra.mxu0 0
  %419 = vmatprep.subr.bf16.mxu0 0
  %420 = vmatpush2.bf16.msra.mxu0 0
  %421 = vmatprep.subr.bf16.mxu0 0
  %422 = vmatpush2.bf16.msra.mxu0 0
  %423 = vmatprep.subr.bf16.mxu0 0
  %424 = vmatpush2.bf16.msra.mxu0 0
  %425 = vmatprep.subr.bf16.mxu0 0
  %426 = vmatpush2.bf16.msra.mxu0 0
  %427 = vmatprep.subr.bf16.mxu0 0
  %428 = vmatpush2.bf16.msra.mxu0 0
  %429 = vmatprep.subr.bf16.mxu0 0
  %430 = vmatpush2.bf16.msra.mxu0 0
  %431 = vmatprep.mubr.bf16.mxu0 0
  %432 = vmatmul.mubr.bf16.gmra.mxu0 %v385
  %v433 = vpop.f32.mrf.mxu0
  %v434 = vadd.f32 %v357, %v433
  %v435 = vpop.f32.mrf.mxu0
  %v436 = vpop.f32.mrf.mxu0
  %v437 = vadd.f32 %v357, %v436
  %v438 = vpop.f32.mrf.mxu0
  %439 = vmatprep.mubr.bf16.mxu0 0
  %440 = vmatmul.mubr.bf16.gmra.mxu0 %v388
  %v441 = vpop.f32.mrf.mxu0
  %v442 = vadd.f32 %v357, %v441
  %v443 = vpop.f32.mrf.mxu0
  %v444 = vpop.f32.mrf.mxu0
  %v445 = vadd.f32 %v357, %v444
  %v446 = vpop.f32.mrf.mxu0
  %447 = vmatprep.mubr.bf16.mxu0 0
  %448 = vmatmul.mubr.bf16.gmra.mxu0 %v391
  %v449 = vpop.f32.mrf.mxu0
  %v450 = vadd.f32 %v357, %v449
  %v451 = vpop.f32.mrf.mxu0
  %v452 = vpop.f32.mrf.mxu0
  %v453 = vadd.f32 %v357, %v452
  %v454 = vpop.f32.mrf.mxu0
  %455 = vmatprep.mubr.bf16.mxu0 0
  %456 = vmatmul.mubr.bf16.gmra.mxu0 %v394
  %v457 = vpop.f32.mrf.mxu0
  %v458 = vadd.f32 %v357, %v457
  %v459 = vpop.f32.mrf.mxu0
  %v460 = vpop.f32.mrf.mxu0
  %v461 = vadd.f32 %v357, %v460
  %v462 = vpop.f32.mrf.mxu0
  %463 = vmatprep.mubr.bf16.mxu0 0
  %464 = vmatmul.mubr.bf16.gmra.mxu0 %v397
  %v465 = vpop.f32.mrf.mxu0
  %v466 = vadd.f32 %v357, %v465
  %v467 = vpop.f32.mrf.mxu0
  %v468 = vpop.f32.mrf.mxu0
  %v469 = vpop.f32.mrf.mxu0
  %470 = vdwg.mxu0
  %v471 = vadd.f32 %v27, %v434
  %v472 = vadd.f32 %v28, %v437
  %v473 = vadd.f32 %v29, %v442
  %v474 = vadd.f32 %v30, %v445
  %v475 = vadd.f32 %v31, %v450
  %v476 = vadd.f32 %v32, %v453
  %v477 = vadd.f32 %v33, %v458
  %v478 = vadd.f32 %v34, %v461
  %v479 = vadd.f32 %v35, %v466
  %480 = vst.msk [vmem:[%s7] sm:$0xff] %vm38, %v471
  %481 = vst.msk [vmem:[%s7 + $0x8] sm:$0xff] %vm38, %v472
  %482 = vst.msk [vmem:[%s7 + $0x10] sm:$0xff] %vm38, %v473
  %483 = vst.msk [vmem:[%s7 + $0x18] sm:$0xff] %vm38, %v474
  %484 = vst.msk [vmem:[%s7 + $0x20] sm:$0xff] %vm38, %v475
  %485 = vst.msk [vmem:[%s7 + $0x28] sm:$0xff] %vm38, %v476
  %486 = vst.msk [vmem:[%s7 + $0x30] sm:$0xff] %vm38, %v477
  %487 = vst.msk [vmem:[%s7 + $0x38] sm:$0xff] %vm38, %v478
  %488 = vst.msk [vmem:[%s7 + $0x40] sm:$0xff] %vm38, %v479
  // Predicated region
  $region30: #{forward.24} parent=0 // pred_check
    _
  $region31: #{forward.24} parent=0 // pred_check_branch
    %490 = sbr.rel (0) target = $region33
  $region32: #{forward.24} parent=0 // pred_region
    _
  $region33: #{forward.24} parent=0 // pred_fallthru
    _
  // Predicated region
  $region34: #{forward.24} parent=0 // pred_check
    _
  $region35: #{forward.24} parent=0 // pred_check_branch
    %492 = sbr.rel (0) target = $region37
  $region36: #{forward.24} parent=0 // pred_region
    _
  $region37: #{forward.24} parent=0 // pred_fallthru
    _

// kernel: forward.30
$region0: #{forward.30}
  #allocation0 [shape = 'u32[]', space=smem, size = 0x4, offset = 0x4, fixed_abs, tag = 'smem constant byte address 0x4 - core index']
  #allocation1 [shape = 'u32[144,128]{1,0:T(1,128)}', space=vmem, size = 0x12000, scoped, tag = 'internal scratch']
  %s0 = inlined_call_operand.vmem [shape: f32[18,32], index: 0, kind: input, shape index: {}]
  %s1 = inlined_call_operand.vmem [shape: f32[1,32], index: 1, kind: input, shape index: {}]
  %s2 = inlined_call_operand.vmem [shape: f32[1,32], index: 2, kind: input, shape index: {}]
  %s3 = inlined_call_operand.vmem [shape: bf16[32,96], index: 3, kind: input, shape index: {}]
  %s4 = inlined_call_operand.vmem [shape: f32[1,96], index: 4, kind: input, shape index: {}]
  %s5 = inlined_call_operand.vmem [shape: f32[18,96], index: 5, kind: output, shape index: {}]
  %s6 = sld [smem:[#allocation0]]
  $region30: #{forward.30} parent=0
    _
  %s8 = ssub.s32 1, %s6
  %s9 = scalar_select 0, %s8, %s6
  // Predicated region
  $region2: #{forward.30} parent=0 // pred_check
    _
  $region3: #{forward.30} parent=0 // pred_check_branch
    %11 = sbr.rel (0) target = $region5
  $region4: #{forward.30} parent=0 // pred_region
    _
  $region5: #{forward.30} parent=0 // pred_fallthru
    _
  // Predicated region
  $region6: #{forward.30} parent=0 // pred_check
    _
  $region7: #{forward.30} parent=0 // pred_check_branch
    %13 = sbr.rel (0) target = $region9
  $region8: #{forward.30} parent=0 // pred_region
    _
  $region9: #{forward.30} parent=0 // pred_fallthru
    _
  // Predicated region
  $region10: #{forward.30} parent=0 // pred_check
    _
  $region11: #{forward.30} parent=0 // pred_check_branch
    %15 = sbr.rel (0) target = $region13
  $region12: #{forward.30} parent=0 // pred_region
    _
  $region13: #{forward.30} parent=0 // pred_fallthru
    _
  // Predicated region
  $region14: #{forward.30} parent=0 // pred_check
    _
  $region15: #{forward.30} parent=0 // pred_check_branch
    %17 = sbr.rel (0) target = $region17
  $region16: #{forward.30} parent=0 // pred_region
    _
  $region17: #{forward.30} parent=0 // pred_fallthru
    _
  // Predicated region
  $region18: #{forward.30} parent=0 // pred_check
    _
  $region19: #{forward.30} parent=0 // pred_check_branch
    %19 = sbr.rel (0) target = $region21
  $region20: #{forward.30} parent=0 // pred_region
    _
  $region21: #{forward.30} parent=0 // pred_fallthru
    _
  %v21 = vld [vmem:[%s0] sm:$0xff]
  %v22 = vld [vmem:[%s0 + $0x8] sm:$0xff]
  %v23 = vld [vmem:[%s0 + $0x10] sm:$0x3]
  %v24 = vld [vmem:[%s1] sm:$0x1]
  %v25 = vld [vmem:[%s2] sm:$0x1]
  %vm26 = vcmask 261120
  %v27 = vsel %vm26, %v21, 0.0
  %28 = vadd.xlane.f32.xlu0 %v27
  %v29 = vpop.xlane.xlu0 %28
  %v30 = vsel %vm26, %v22, 0.0
  %31 = vadd.xlane.f32.xlu0 %v30
  %v32 = vpop.xlane.xlu0 %31
  %vm33 = vcmask 254976
  %v34 = vsel %vm33, %v23, 0.0
  %35 = vadd.xlane.f32.xlu0 %v34
  %v36 = vpop.xlane.xlu0 %35
  %v37 = vrcp.pop 32.0
  %v38 = vmul.f32 %v29, %v37
  %v39 = vmul.f32 %v32, %v37
  %v40 = vmul.f32 %v36, %v37
  %v41 = vsub.f32 %v21, %v38
  %v42 = vsub.f32 %v22, %v39
  %v43 = vsub.f32 %v23, %v40
  %v44 = vmul.f32 %v41, %v41
  %v45 = vmul.f32 %v42, %v42
  %v46 = vmul.f32 %v43, %v43
  %v47 = vsel %vm26, %v44, 0.0
  %48 = vadd.xlane.f32.xlu0 %v47
  %v49 = vpop.xlane.xlu0 %48
  %v50 = vsel %vm26, %v45, 0.0
  %51 = vadd.xlane.f32.xlu0 %v50
  %v52 = vpop.xlane.xlu0 %51
  %v53 = vsel %vm33, %v46, 0.0
  %54 = vadd.xlane.f32.xlu0 %v53
  %v55 = vpop.xlane.xlu0 %54
  %v56 = vmul.f32 %v49, %v37
  %v57 = vmul.f32 %v52, %v37
  %v58 = vmul.f32 %v55, %v37
  %v59 = vadd.f32 %v56, 1e-05
  %v60 = vadd.f32 %v57, 1e-05
  %v61 = vadd.f32 %v58, 1e-05
  %v62 = vrsqrt.pop %v59
  %v63 = vrsqrt.pop %v60
  %v64 = vrsqrt.pop %v61
  %v65 = vmul.f32 %v41, %v62
  %v66 = vmul.f32 %v42, %v63
  %v67 = vmul.f32 %v43, %v64
  %v69 = vlaneseq
  %v70 = vshrl.u32 %v69, 7
  %v71 = vsub.s32 0, %v70
  %v72 = vrot.slane %v24, %v71
  %v74 = vmul.f32 %v65, %v72
  %v75 = vmul.f32 %v66, %v72
  %v76 = vmul.f32 %v67, %v72
  %v78 = vlaneseq
  %v79 = vshrl.u32 %v78, 7
  %v80 = vsub.s32 0, %v79
  %v81 = vrot.slane %v25, %v80
  %v83 = vadd.f32 %v74, %v81
  %v84 = vadd.f32 %v75, %v81
  %v85 = vadd.f32 %v76, %v81
  %v86 = vpack.c.bf16 %v84, %v83
  %v87 = vpack.c.bf16 %v85, %v85
  %v88 = vld [vmem:[%s3] sm:$0xf]
  %v89 = vld [vmem:[%s3 + $0x4] sm:$0xf]
  %v90 = vld [vmem:[%s3 + $0x8] sm:$0xf]
  %v91 = vld [vmem:[%s3 + $0xc] sm:$0xf]
  %v92 = vld [vmem:[%s4] sm:$0x1]
  %v94 = vlaneseq
  %v95 = vshrl.u32 %v94, 7
  %v96 = vsub.s32 0, %v95
  %v97 = vrot.slane %v92, %v96
  %v103 = vunpack.c.l.b16 %v88
  %v104 = vunpack.c.l.b16 %v89
  %v105 = vunpack.c.l.b16 %v90
  %v106 = vunpack.c.l.b16 %v91
  %v107 = vpack.c.b16 %v104, %v103
  %v108 = vpack.c.b16 %v106, %v105
  %v112 = vsel %vm26, %v86, 0
  %v115 = vsel %vm26, %v87, 0
  %117 = vmatprep.subr.bf16.mxu0 0
  %118 = vmatpush1.bf16.msra.mxu0 0
  %119 = vmatprep.subr.bf16.mxu0 0
  %120 = vmatpush1.bf16.msra.mxu0 0
  %121 = vmatprep.subr.bf16.mxu0 0
  %122 = vmatpush1.bf16.msra.mxu0 0
  %123 = vmatprep.subr.bf16.mxu0 0
  %124 = vmatpush1.bf16.msra.mxu0 0
  %125 = vmatprep.subr.bf16.mxu0 0
  %126 = vmatpush1.bf16.msra.mxu0 0
  %127 = vmatprep.subr.bf16.mxu0 0
  %128 = vmatpush1.bf16.msra.mxu0 0
  %129 = vmatprep.subr.bf16.mxu0 0
  %130 = vmatpush1.bf16.msra.mxu0 %v108
  %131 = vmatprep.subr.bf16.mxu0 0
  %132 = vmatpush1.bf16.msra.mxu0 %v107
  %133 = vmatprep.subr.bf16.mxu0 0
  %134 = vmatpush2.bf16.msra.mxu0 0
  %135 = vmatprep.subr.bf16.mxu0 0
  %136 = vmatpush2.bf16.msra.mxu0 0
  %137 = vmatprep.subr.bf16.mxu0 0
  %138 = vmatpush2.bf16.msra.mxu0 0
  %139 = vmatprep.subr.bf16.mxu0 0
  %140 = vmatpush2.bf16.msra.mxu0 0
  %141 = vmatprep.subr.bf16.mxu0 0
  %142 = vmatpush2.bf16.msra.mxu0 0
  %143 = vmatprep.subr.bf16.mxu0 0
  %144 = vmatpush2.bf16.msra.mxu0 0
  %145 = vmatprep.subr.bf16.mxu0 0
  %146 = vmatpush2.bf16.msra.mxu0 0
  %147 = vmatprep.subr.bf16.mxu0 0
  %148 = vmatpush2.bf16.msra.mxu0 0
  %149 = vmatprep.mubr.bf16.mxu0 0
  %150 = vmatmul.mubr.bf16.gmra.mxu0 %v112
  %v151 = vpop.f32.mrf.mxu0
  %v152 = vadd.f32 %v97, %v151
  %v153 = vpop.f32.mrf.mxu0
  %v154 = vpop.f32.mrf.mxu0
  %v155 = vadd.f32 %v97, %v154
  %v156 = vpop.f32.mrf.mxu0
  %157 = vmatprep.mubr.bf16.mxu0 0
  %158 = vmatmul.mubr.bf16.gmra.mxu0 %v115
  %v159 = vpop.f32.mrf.mxu0
  %v160 = vadd.f32 %v97, %v159
  %v161 = vpop.f32.mrf.mxu0
  %v162 = vpop.f32.mrf.mxu0
  %v163 = vpop.f32.mrf.mxu0
  %164 = vdwg.mxu0
  %vm165 = vcmask 785408
  %166 = vst.msk [vmem:[%s5] sm:$0xff] %vm165, %v152
  %167 = vst.msk [vmem:[%s5 + $0x8] sm:$0xff] %vm165, %v155
  %vm168 = vcmask 779264
  %169 = vst.msk [vmem:[%s5 + $0x10] sm:$0x3] %vm168, %v160
  // Predicated region
  $region22: #{forward.30} parent=0 // pred_check
    _
  $region23: #{forward.30} parent=0 // pred_check_branch
    %171 = sbr.rel (0) target = $region25
  $region24: #{forward.30} parent=0 // pred_region
    _
  $region25: #{forward.30} parent=0 // pred_fallthru
    _
  // Predicated region
  $region26: #{forward.30} parent=0 // pred_check
    _
  $region27: #{forward.30} parent=0 // pred_check_branch
    %173 = sbr.rel (0) target = $region29
  $region28: #{forward.30} parent=0 // pred_region
    _
  $region29: #{forward.30} parent=0 // pred_fallthru
    _

// kernel: forward.29
$region0: #{forward.29}
  #allocation0 [shape = 'u32[]', space=smem, size = 0x4, offset = 0x4, fixed_abs, tag = 'smem constant byte address 0x4 - core index']
  #allocation1 [shape = 'u32[144,128]{1,0:T(1,128)}', space=vmem, size = 0x12000, scoped, tag = 'internal scratch']
  %s0 = inlined_call_operand.vmem [shape: f32[18,64], index: 0, kind: input, shape index: {}]
  %s1 = inlined_call_operand.vmem [shape: f32[1,64], index: 1, kind: input, shape index: {}]
  %s2 = inlined_call_operand.vmem [shape: f32[1,64], index: 2, kind: input, shape index: {}]
  %s3 = inlined_call_operand.vmem [shape: bf16[64,32], index: 3, kind: input, shape index: {}]
  %s4 = inlined_call_operand.vmem [shape: f32[1,32], index: 4, kind: input, shape index: {}]
  %s5 = inlined_call_operand.vmem [shape: f32[18,32], index: 5, kind: output, shape index: {}]
  %s6 = sld [smem:[#allocation0]]
  $region30: #{forward.29} parent=0
    _
  %s8 = ssub.s32 1, %s6
  %s9 = scalar_select 0, %s8, %s6
  // Predicated region
  $region2: #{forward.29} parent=0 // pred_check
    _
  $region3: #{forward.29} parent=0 // pred_check_branch
    %11 = sbr.rel (0) target = $region5
  $region4: #{forward.29} parent=0 // pred_region
    _
  $region5: #{forward.29} parent=0 // pred_fallthru
    _
  // Predicated region
  $region6: #{forward.29} parent=0 // pred_check
    _
  $region7: #{forward.29} parent=0 // pred_check_branch
    %13 = sbr.rel (0) target = $region9
  $region8: #{forward.29} parent=0 // pred_region
    _
  $region9: #{forward.29} parent=0 // pred_fallthru
    _
  // Predicated region
  $region10: #{forward.29} parent=0 // pred_check
    _
  $region11: #{forward.29} parent=0 // pred_check_branch
    %15 = sbr.rel (0) target = $region13
  $region12: #{forward.29} parent=0 // pred_region
    _
  $region13: #{forward.29} parent=0 // pred_fallthru
    _
  // Predicated region
  $region14: #{forward.29} parent=0 // pred_check
    _
  $region15: #{forward.29} parent=0 // pred_check_branch
    %17 = sbr.rel (0) target = $region17
  $region16: #{forward.29} parent=0 // pred_region
    _
  $region17: #{forward.29} parent=0 // pred_fallthru
    _
  // Predicated region
  $region18: #{forward.29} parent=0 // pred_check
    _
  $region19: #{forward.29} parent=0 // pred_check_branch
    %19 = sbr.rel (0) target = $region21
  $region20: #{forward.29} parent=0 // pred_region
    _
  $region21: #{forward.29} parent=0 // pred_fallthru
    _
  %v21 = vld [vmem:[%s0] sm:$0xff]
  %v22 = vld [vmem:[%s0 + $0x8] sm:$0xff]
  %v23 = vld [vmem:[%s0 + $0x10] sm:$0x3]
  %v24 = vld [vmem:[%s1] sm:$0x1]
  %v25 = vld [vmem:[%s2] sm:$0x1]
  %vm26 = vcmask 523264
  %v27 = vsel %vm26, %v21, 0.0
  %28 = vadd.xlane.f32.xlu0 %v27
  %v29 = vpop.xlane.xlu0 %28
  %v30 = vsel %vm26, %v22, 0.0
  %31 = vadd.xlane.f32.xlu0 %v30
  %v32 = vpop.xlane.xlu0 %31
  %vm33 = vcmask 517120
  %v34 = vsel %vm33, %v23, 0.0
  %35 = vadd.xlane.f32.xlu0 %v34
  %v36 = vpop.xlane.xlu0 %35
  %v37 = vrcp.pop 64.0
  %v38 = vmul.f32 %v29, %v37
  %v39 = vmul.f32 %v32, %v37
  %v40 = vmul.f32 %v36, %v37
  %v41 = vsub.f32 %v21, %v38
  %v42 = vsub.f32 %v22, %v39
  %v43 = vsub.f32 %v23, %v40
  %v44 = vmul.f32 %v41, %v41
  %v45 = vmul.f32 %v42, %v42
  %v46 = vmul.f32 %v43, %v43
  %v47 = vsel %vm26, %v44, 0.0
  %48 = vadd.xlane.f32.xlu0 %v47
  %v49 = vpop.xlane.xlu0 %48
  %v50 = vsel %vm26, %v45, 0.0
  %51 = vadd.xlane.f32.xlu0 %v50
  %v52 = vpop.xlane.xlu0 %51
  %v53 = vsel %vm33, %v46, 0.0
  %54 = vadd.xlane.f32.xlu0 %v53
  %v55 = vpop.xlane.xlu0 %54
  %v56 = vmul.f32 %v49, %v37
  %v57 = vmul.f32 %v52, %v37
  %v58 = vmul.f32 %v55, %v37
  %v59 = vadd.f32 %v56, 1e-05
  %v60 = vadd.f32 %v57, 1e-05
  %v61 = vadd.f32 %v58, 1e-05
  %v62 = vrsqrt.pop %v59
  %v63 = vrsqrt.pop %v60
  %v64 = vrsqrt.pop %v61
  %v65 = vmul.f32 %v41, %v62
  %v66 = vmul.f32 %v42, %v63
  %v67 = vmul.f32 %v43, %v64
  %v69 = vlaneseq
  %v70 = vshrl.u32 %v69, 7
  %v71 = vsub.s32 0, %v70
  %v72 = vrot.slane %v24, %v71
  %v74 = vmul.f32 %v65, %v72
  %v75 = vmul.f32 %v66, %v72
  %v76 = vmul.f32 %v67, %v72
  %v78 = vlaneseq
  %v79 = vshrl.u32 %v78, 7
  %v80 = vsub.s32 0, %v79
  %v81 = vrot.slane %v25, %v80
  %v83 = vadd.f32 %v74, %v81
  %v84 = vadd.f32 %v75, %v81
  %v85 = vadd.f32 %v76, %v81
  %v86 = vpack.c.bf16 %v84, %v83
  %v87 = vpack.c.bf16 %v85, %v85
  %v88 = vld [vmem:[%s3] sm:$0xf]
  %v89 = vld [vmem:[%s3 + $0x4] sm:$0xf]
  %v90 = vld [vmem:[%s3 + $0x8] sm:$0xf]
  %v91 = vld [vmem:[%s3 + $0xc] sm:$0xf]
  %v92 = vld [vmem:[%s3 + $0x10] sm:$0xf]
  %v93 = vld [vmem:[%s3 + $0x14] sm:$0xf]
  %v94 = vld [vmem:[%s3 + $0x18] sm:$0xf]
  %v95 = vld [vmem:[%s3 + $0x1c] sm:$0xf]
  %v96 = vld [vmem:[%s4] sm:$0x1]
  %v98 = vlaneseq
  %v99 = vshrl.u32 %v98, 7
  %v100 = vsub.s32 0, %v99
  %v101 = vrot.slane %v96, %v100
  %v111 = vunpack.c.l.b16 %v88
  %v112 = vunpack.c.l.b16 %v89
  %v113 = vunpack.c.l.b16 %v90
  %v114 = vunpack.c.l.b16 %v91
  %v115 = vunpack.c.l.b16 %v92
  %v116 = vunpack.c.l.b16 %v93
  %v117 = vunpack.c.l.b16 %v94
  %v118 = vunpack.c.l.b16 %v95
  %v119 = vpack.c.b16 %v112, %v111
  %v120 = vpack.c.b16 %v114, %v113
  %v121 = vpack.c.b16 %v116, %v115
  %v122 = vpack.c.b16 %v118, %v117
  %v128 = vsel %vm26, %v86, 0
  %v131 = vsel %vm26, %v87, 0
  %133 = vmatprep.subr.bf16.mxu0 0
  %134 = vmatpush1.bf16.msra.mxu0 0
  %135 = vmatprep.subr.bf16.mxu0 0
  %136 = vmatpush1.bf16.msra.mxu0 0
  %137 = vmatprep.subr.bf16.mxu0 0
  %138 = vmatpush1.bf16.msra.mxu0 0
  %139 = vmatprep.subr.bf16.mxu0 0
  %140 = vmatpush1.bf16.msra.mxu0 0
  %141 = vmatprep.subr.bf16.mxu0 0
  %142 = vmatpush1.bf16.msra.mxu0 %v122
  %143 = vmatprep.subr.bf16.mxu0 0
  %144 = vmatpush1.bf16.msra.mxu0 %v121
  %145 = vmatprep.subr.bf16.mxu0 0
  %146 = vmatpush1.bf16.msra.mxu0 %v120
  %147 = vmatprep.subr.bf16.mxu0 0
  %148 = vmatpush1.bf16.msra.mxu0 %v119
  %149 = vmatprep.subr.bf16.mxu0 0
  %150 = vmatpush2.bf16.msra.mxu0 0
  %151 = vmatprep.subr.bf16.mxu0 0
  %152 = vmatpush2.bf16.msra.mxu0 0
  %153 = vmatprep.subr.bf16.mxu0 0
  %154 = vmatpush2.bf16.msra.mxu0 0
  %155 = vmatprep.subr.bf16.mxu0 0
  %156 = vmatpush2.bf16.msra.mxu0 0
  %157 = vmatprep.subr.bf16.mxu0 0
  %158 = vmatpush2.bf16.msra.mxu0 0
  %159 = vmatprep.subr.bf16.mxu0 0
  %160 = vmatpush2.bf16.msra.mxu0 0
  %161 = vmatprep.subr.bf16.mxu0 0
  %162 = vmatpush2.bf16.msra.mxu0 0
  %163 = vmatprep.subr.bf16.mxu0 0
  %164 = vmatpush2.bf16.msra.mxu0 0
  %165 = vmatprep.mubr.bf16.mxu0 0
  %166 = vmatmul.mubr.bf16.gmra.mxu0 %v128
  %v167 = vpop.f32.mrf.mxu0
  %v168 = vadd.f32 %v101, %v167
  %v169 = vpop.f32.mrf.mxu0
  %v170 = vpop.f32.mrf.mxu0
  %v171 = vadd.f32 %v101, %v170
  %v172 = vpop.f32.mrf.mxu0
  %173 = vmatprep.mubr.bf16.mxu0 0
  %174 = vmatmul.mubr.bf16.gmra.mxu0 %v131
  %v175 = vpop.f32.mrf.mxu0
  %v176 = vadd.f32 %v101, %v175
  %v177 = vpop.f32.mrf.mxu0
  %v178 = vpop.f32.mrf.mxu0
  %v179 = vpop.f32.mrf.mxu0
  %180 = vdwg.mxu0
  %vm181 = vcmask 261120
  %182 = vst.msk [vmem:[%s5] sm:$0xff] %vm181, %v168
  %183 = vst.msk [vmem:[%s5 + $0x8] sm:$0xff] %vm181, %v171
  %vm184 = vcmask 254976
  %185 = vst.msk [vmem:[%s5 + $0x10] sm:$0x3] %vm184, %v176
  // Predicated region
  $region22: #{forward.29} parent=0 // pred_check
    _
  $region23: #{forward.29} parent=0 // pred_check_branch
    %187 = sbr.rel (0) target = $region25
  $region24: #{forward.29} parent=0 // pred_region
    _
  $region25: #{forward.29} parent=0 // pred_fallthru
    _
  // Predicated region
  $region26: #{forward.29} parent=0 // pred_check
    _
  $region27: #{forward.29} parent=0 // pred_check_branch
    %189 = sbr.rel (0) target = $region29
  $region28: #{forward.29} parent=0 // pred_region
    _
  $region29: #{forward.29} parent=0 // pred_fallthru
    _

// kernel: forward.32
$region0: #{forward.32}
  #allocation0 [shape = 'u32[]', space=smem, size = 0x4, offset = 0x4, fixed_abs, tag = 'smem constant byte address 0x4 - core index']
  #allocation1 [shape = 'u32[144,128]{1,0:T(1,128)}', space=vmem, size = 0x12000, scoped, tag = 'internal scratch']
  %s0 = inlined_call_operand.vmem [shape: f32[18,32], index: 0, kind: input, shape index: {}]
  %s1 = inlined_call_operand.vmem [shape: bf16[32,32], index: 1, kind: input, shape index: {}]
  %s2 = inlined_call_operand.vmem [shape: f32[1,32], index: 2, kind: input, shape index: {}]
  %s3 = inlined_call_operand.vmem [shape: f32[18,32], index: 3, kind: input, shape index: {}]
  %s4 = inlined_call_operand.vmem [shape: f32[18,32], index: 4, kind: output, shape index: {}]
  %s5 = sld [smem:[#allocation0]]
  $region26: #{forward.32} parent=0
    _
  %s7 = ssub.s32 1, %s5
  %s8 = scalar_select 0, %s7, %s5
  // Predicated region
  $region2: #{forward.32} parent=0 // pred_check
    _
  $region3: #{forward.32} parent=0 // pred_check_branch
    %10 = sbr.rel (0) target = $region5
  $region4: #{forward.32} parent=0 // pred_region
    _
  $region5: #{forward.32} parent=0 // pred_fallthru
    _
  // Predicated region
  $region6: #{forward.32} parent=0 // pred_check
    _
  $region7: #{forward.32} parent=0 // pred_check_branch
    %12 = sbr.rel (0) target = $region9
  $region8: #{forward.32} parent=0 // pred_region
    _
  $region9: #{forward.32} parent=0 // pred_fallthru
    _
  // Predicated region
  $region10: #{forward.32} parent=0 // pred_check
    _
  $region11: #{forward.32} parent=0 // pred_check_branch
    %14 = sbr.rel (0) target = $region13
  $region12: #{forward.32} parent=0 // pred_region
    _
  $region13: #{forward.32} parent=0 // pred_fallthru
    _
  // Predicated region
  $region14: #{forward.32} parent=0 // pred_check
    _
  $region15: #{forward.32} parent=0 // pred_check_branch
    %16 = sbr.rel (0) target = $region17
  $region16: #{forward.32} parent=0 // pred_region
    _
  $region17: #{forward.32} parent=0 // pred_fallthru
    _
  %v18 = vld [vmem:[%s0] sm:$0xff]
  %v19 = vld [vmem:[%s0 + $0x8] sm:$0xff]
  %v20 = vld [vmem:[%s0 + $0x10] sm:$0x3]
  %v21 = vpack.c.bf16 %v19, %v18
  %v22 = vpack.c.bf16 %v20, %v20
  %v23 = vld [vmem:[%s1] sm:$0xf]
  %v24 = vld [vmem:[%s1 + $0x4] sm:$0xf]
  %v25 = vld [vmem:[%s1 + $0x8] sm:$0xf]
  %v26 = vld [vmem:[%s1 + $0xc] sm:$0xf]
  %v27 = vld [vmem:[%s2] sm:$0x1]
  %v29 = vlaneseq
  %v30 = vshrl.u32 %v29, 7
  %v31 = vsub.s32 0, %v30
  %v32 = vrot.slane %v27, %v31
  %v38 = vunpack.c.l.b16 %v23
  %v39 = vunpack.c.l.b16 %v24
  %v40 = vunpack.c.l.b16 %v25
  %v41 = vunpack.c.l.b16 %v26
  %v42 = vpack.c.b16 %v39, %v38
  %v43 = vpack.c.b16 %v41, %v40
  %vm46 = vcmask 261120
  %v48 = vsel %vm46, %v21, 0
  %v51 = vsel %vm46, %v22, 0
  %53 = vmatprep.subr.bf16.mxu0 0
  %54 = vmatpush1.bf16.msra.mxu0 0
  %55 = vmatprep.subr.bf16.mxu0 0
  %56 = vmatpush1.bf16.msra.mxu0 0
  %57 = vmatprep.subr.bf16.mxu0 0
  %58 = vmatpush1.bf16.msra.mxu0 0
  %59 = vmatprep.subr.bf16.mxu0 0
  %60 = vmatpush1.bf16.msra.mxu0 0
  %61 = vmatprep.subr.bf16.mxu0 0
  %62 = vmatpush1.bf16.msra.mxu0 0
  %63 = vmatprep.subr.bf16.mxu0 0
  %64 = vmatpush1.bf16.msra.mxu0 0
  %65 = vmatprep.subr.bf16.mxu0 0
  %66 = vmatpush1.bf16.msra.mxu0 %v43
  %67 = vmatprep.subr.bf16.mxu0 0
  %68 = vmatpush1.bf16.msra.mxu0 %v42
  %69 = vmatprep.subr.bf16.mxu0 0
  %70 = vmatpush2.bf16.msra.mxu0 0
  %71 = vmatprep.subr.bf16.mxu0 0
  %72 = vmatpush2.bf16.msra.mxu0 0
  %73 = vmatprep.subr.bf16.mxu0 0
  %74 = vmatpush2.bf16.msra.mxu0 0
  %75 = vmatprep.subr.bf16.mxu0 0
  %76 = vmatpush2.bf16.msra.mxu0 0
  %77 = vmatprep.subr.bf16.mxu0 0
  %78 = vmatpush2.bf16.msra.mxu0 0
  %79 = vmatprep.subr.bf16.mxu0 0
  %80 = vmatpush2.bf16.msra.mxu0 0
  %81 = vmatprep.subr.bf16.mxu0 0
  %82 = vmatpush2.bf16.msra.mxu0 0
  %83 = vmatprep.subr.bf16.mxu0 0
  %84 = vmatpush2.bf16.msra.mxu0 0
  %85 = vmatprep.mubr.bf16.mxu0 0
  %86 = vmatmul.mubr.bf16.gmra.mxu0 %v48
  %v87 = vpop.f32.mrf.mxu0
  %v88 = vadd.f32 %v32, %v87
  %v89 = vpop.f32.mrf.mxu0
  %v90 = vpop.f32.mrf.mxu0
  %v91 = vadd.f32 %v32, %v90
  %v92 = vpop.f32.mrf.mxu0
  %93 = vmatprep.mubr.bf16.mxu0 0
  %94 = vmatmul.mubr.bf16.gmra.mxu0 %v51
  %v95 = vpop.f32.mrf.mxu0
  %v96 = vadd.f32 %v32, %v95
  %v97 = vpop.f32.mrf.mxu0
  %v98 = vpop.f32.mrf.mxu0
  %v99 = vpop.f32.mrf.mxu0
  %100 = vdwg.mxu0
  %v101 = vld [vmem:[%s3] sm:$0xff]
  %v102 = vld [vmem:[%s3 + $0x8] sm:$0xff]
  %v103 = vld [vmem:[%s3 + $0x10] sm:$0x3]
  %v104 = vadd.f32 %v101, %v88
  %v105 = vadd.f32 %v102, %v91
  %v106 = vadd.f32 %v103, %v96
  %107 = vst.msk [vmem:[%s4] sm:$0xff] %vm46, %v104
  %108 = vst.msk [vmem:[%s4 + $0x8] sm:$0xff] %vm46, %v105
  %vm109 = vcmask 254976
  %110 = vst.msk [vmem:[%s4 + $0x10] sm:$0x3] %vm109, %v106
  // Predicated region
  $region18: #{forward.32} parent=0 // pred_check
    _
  $region19: #{forward.32} parent=0 // pred_check_branch
    %112 = sbr.rel (0) target = $region21
  $region20: #{forward.32} parent=0 // pred_region
    _
  $region21: #{forward.32} parent=0 // pred_fallthru
    _
  // Predicated region
  $region22: #{forward.32} parent=0 // pred_check
    _
  $region23: #{forward.32} parent=0 // pred_check_branch
    %114 = sbr.rel (0) target = $region25
  $region24: #{forward.32} parent=0 // pred_region
    _
  $region25: #{forward.32} parent=0 // pred_fallthru
    _

// kernel: forward.31
$region0: #{forward.31}
  #allocation0 [shape = 'u32[]', space=smem, size = 0x4, offset = 0x4, fixed_abs, tag = 'smem constant byte address 0x4 - core index']
  #allocation1 [shape = 'u32[144,128]{1,0:T(1,128)}', space=vmem, size = 0x12000, scoped, tag = 'internal scratch']
  %s0 = inlined_call_operand.vmem [shape: f32[2,9,96], index: 0, kind: input, shape index: {}]
  %s1 = inlined_call_operand.vmem [shape: f32[4,9,9], index: 1, kind: input, shape index: {}]
  %s2 = inlined_call_operand.vmem [shape: f32[1,9,9], index: 2, kind: input, shape index: {}]
  %s3 = inlined_call_operand.vmem [shape: f32[2,9,32], index: 3, kind: output, shape index: {}]
  %s4 = sld [smem:[#allocation0]]
  $region45: #{forward.31} parent=0
    _
  %s6 = ssub.s32 1, %s4
  %s7 = scalar_select 0, %s6, %s4
  loop: start=0, step=1, limit=4
  $region2: #{forward.31} parent=0 // loop_pre_header
    _
  $region3: #{forward.31} parent=0 // loop_header
    %s9 = sphi 0, %s13
    %p10 = scmp.ge.s32.totalorder %s9, 4
    %s16 = sphi 0, %s28
    %s17 = sphi 0, %s24
    %s18 = sphi 0, %s16
    %s19 = sphi 0, %s17
    %s20 = sphi 0, %s18
    %s21 = sphi 0, %s19
    %s33 = sphi 0, %s35
    %s36 = sphi 0, %s33
    %s37 = sphi 0, %s36
    %s53 = sphi 0, %s37
    %s57 = sphi 0, %s57
    %s59 = sphi 0, %s57
    %s60 = sphi 0, %s59
    %s74 = sphi 0, %s60
    %s80 = sphi 0, %s82
    %s83 = sphi 0, %s80
    %s84 = sphi 0, %s83
    %s100 = sphi 0, %s84
    %s108 = sphi 0, %s110
    %s111 = sphi 0, %s108
    %s112 = sphi 0, %s111
    %s128 = sphi 0, %s112
  $region4: #{forward.31} parent=0 // loop_header_branch
    %12 = sbr.rel (%p10) target = $region8
  $region5: #{forward.31} parent=0 // loop_body
    %s14 = ssub.s32 %s9, 1
    %s15 = ssub.s32 %s9, 2
    %s22 = sadd.s32 1, %s17
    %p23 = scmp.ge.s32.totalorder %s22, 1
    %s24 = scalar_select %p23, 0, %s22
    %s25 = sadd.s32 1, %s16
    %s26 = scalar_select %p23, %s25, %s16
    %p27 = scmp.ge.s32.totalorder %s26, 2
    %s28 = scalar_select %p27, 0, %s26
    %s29 = sadd.s32 %s16, %s17
    %s30 = sadd.s32 %s28, %s24
    %s31 = ssub.s32 %s29, %s30
    %p32 = scmp.eq.s32.totalorder %s31, 0
    %s34 = sadd.s32 %s33, 1
    %s35 = scalar_select %p32, %s33, %s34
    %p38 = pneg %p32
    %p39 = scmp.eq.s32.totalorder %s9, 1
    %p40 = por %p38, %p39
    %p41 = scmp.ne.s32.totalorder %s33, %s36
    %p42 = scmp.eq.s32.totalorder %s9, 0
    %p43 = por %p41, %p42
    %p44 = scmp.ne.s32.totalorder %s33, %s36
    %p45 = scmp.eq.s32.totalorder %s14, 1
    %p46 = por %p44, %p45
    %p47 = scmp.ne.s32.totalorder %s36, %s37
    %p48 = scmp.eq.s32.totalorder %s14, 0
    %p49 = por %p47, %p48
    %p50 = scmp.ne.s32.totalorder %s36, %s37
    %p51 = scmp.eq.s32.totalorder %s15, 1
    %p52 = por %p50, %p51
    %p54 = scmp.ne.s32.totalorder %s37, %s53
    %p55 = scmp.eq.s32.totalorder %s15, 0
    %p56 = por %p54, %p55
    %s58 = sadd.s32 %s57, 1
    %p61 = scmp.eq.s32.totalorder %s9, 1
    %p62 = scmp.ne.s32.totalorder %s57, %s59
    %p63 = scmp.eq.s32.totalorder %s9, 0
    %p64 = por %p62, %p63
    %p65 = scmp.ne.s32.totalorder %s57, %s59
    %p66 = scmp.eq.s32.totalorder %s14, 1
    %p67 = por %p65, %p66
    %p68 = scmp.ne.s32.totalorder %s59, %s60
    %p69 = scmp.eq.s32.totalorder %s14, 0
    %p70 = por %p68, %p69
    %p71 = scmp.ne.s32.totalorder %s59, %s60
    %p72 = scmp.eq.s32.totalorder %s15, 1
    %p73 = por %p71, %p72
    %p75 = scmp.ne.s32.totalorder %s60, %s74
    %p76 = scmp.eq.s32.totalorder %s15, 0
    %p77 = por %p75, %p76
    %s78 = ssub.s32 %s17, %s24
    %p79 = scmp.eq.s32.totalorder %s78, 0
    %s81 = sadd.s32 %s80, 1
    %s82 = scalar_select %p79, %s80, %s81
    %p85 = pneg %p79
    %p86 = scmp.eq.s32.totalorder %s9, 1
    %p87 = por %p85, %p86
    %p88 = scmp.ne.s32.totalorder %s80, %s83
    %p89 = scmp.eq.s32.totalorder %s9, 0
    %p90 = por %p88, %p89
    %p91 = scmp.ne.s32.totalorder %s80, %s83
    %p92 = scmp.eq.s32.totalorder %s14, 1
    %p93 = por %p91, %p92
    %p94 = scmp.ne.s32.totalorder %s83, %s84
    %p95 = scmp.eq.s32.totalorder %s14, 0
    %p96 = por %p94, %p95
    %p97 = scmp.ne.s32.totalorder %s83, %s84
    %p98 = scmp.eq.s32.totalorder %s15, 1
    %p99 = por %p97, %p98
    %p101 = scmp.ne.s32.totalorder %s84, %s100
    %p102 = scmp.eq.s32.totalorder %s15, 0
    %p103 = por %p101, %p102
    %s104 = sadd.s32 %s16, %s17
    %s105 = sadd.s32 %s28, %s24
    %s106 = ssub.s32 %s104, %s105
    %p107 = scmp.eq.s32.totalorder %s106, 0
    %s109 = sadd.s32 %s108, 1
    %s110 = scalar_select %p107, %s108, %s109
    %p113 = pneg %p107
    %p114 = scmp.eq.s32.totalorder %s9, 1
    %p115 = por %p113, %p114
    %p116 = scmp.ne.s32.totalorder %s108, %s111
    %p117 = scmp.eq.s32.totalorder %s9, 0
    %p118 = por %p116, %p117
    %p119 = scmp.ne.s32.totalorder %s108, %s111
    %p120 = scmp.eq.s32.totalorder %s14, 1
    %p121 = por %p119, %p120
    %p122 = scmp.ne.s32.totalorder %s111, %s112
    %p123 = scmp.eq.s32.totalorder %s14, 0
    %p124 = por %p122, %p123
    %p125 = scmp.ne.s32.totalorder %s111, %s112
    %p126 = scmp.eq.s32.totalorder %s15, 1
    %p127 = por %p125, %p126
    %p129 = scmp.ne.s32.totalorder %s112, %s128
    %p130 = scmp.eq.s32.totalorder %s15, 0
    %p131 = por %p129, %p130
    %p132 = scmp.le.s32.totalorder 1, %s9
    %p133 = scmp.lt.s32.totalorder %s9, 3
    %p134 = pnand %p132, %p133
    %p135 = pneg %p134
    // Predicated region
    $region9: #{forward.31} parent=5 // pred_check
      _
    $region10: #{forward.31} parent=5 // pred_check_branch
      %137 = sbr.rel (%p134) target = $region12
    $region11: #{forward.31} parent=5 // pred_region
      %s138 = ssub.s32 %s9, 1
      // Predicated region
      $region13: #{forward.31} parent=11 // pred_check
        %p139 = pneg %p70
      $region14: #{forward.31} parent=11 // pred_check_branch
        %141 = sbr.rel (%p139) target = $region16
      $region15: #{forward.31} parent=11 // pred_region
        _
      $region16: #{forward.31} parent=11 // pred_fallthru
        _
      // Predicated region
      $region17: #{forward.31} parent=11 // pred_check
        %p142 = pneg %p96
      $region18: #{forward.31} parent=11 // pred_check_branch
        %144 = sbr.rel (%p142) target = $region20
      $region19: #{forward.31} parent=11 // pred_region
        %p145 = scmp.lt.s32.totalorder %s19, 0
        %s146 = scalar_select %p145, %s19, 0
        %s147 = smul.addr %s146, 2
        %s148 = smul.addr %s147, 8
        %s149 = scalar_lea.vmem %s2, %s148
      $region20: #{forward.31} parent=11 // pred_fallthru
        _
    $region12: #{forward.31} parent=5 // pred_fallthru
      _
    %p150 = scmp.lt.s32.totalorder %s9, 2
    // Predicated region
    $region21: #{forward.31} parent=5 // pred_check
      %p151 = pneg %p150
    $region22: #{forward.31} parent=5 // pred_check_branch
      %153 = sbr.rel (%p151) target = $region24
    $region23: #{forward.31} parent=5 // pred_region
      // Predicated region
      $region25: #{forward.31} parent=23 // pred_check
        %p154 = pneg %p43
      $region26: #{forward.31} parent=23 // pred_check_branch
        %156 = sbr.rel (%p154) target = $region28
      $region27: #{forward.31} parent=23 // pred_region
        %s157 = sadd.s32 %s16, %s17
        %p158 = scmp.lt.s32.totalorder %s157, 1
        %s159 = scalar_select %p158, %s157, 1
        %s160 = smul.addr %s159, 2
        %s161 = smul.addr %s160, 8
        %s162 = scalar_lea.vmem %s0, %s161
        %s163 = sadd.s32 %s16, %s17
      $region28: #{forward.31} parent=23 // pred_fallthru
        _
    $region24: #{forward.31} parent=5 // pred_fallthru
      _
    %p164 = scmp.le.s32.totalorder 1, %s9
    %p165 = scmp.lt.s32.totalorder %s9, 3
    %p166 = pnand %p164, %p165
    %p167 = pneg %p166
    // Predicated region
    $region29: #{forward.31} parent=5 // pred_check
      _
    $region30: #{forward.31} parent=5 // pred_check_branch
      %169 = sbr.rel (%p166) target = $region32
    $region31: #{forward.31} parent=5 // pred_region
      %s170 = ssub.s32 %s9, 1
      %s171 = sadd.s32 %s18, %s19
      %p172 = scmp.lt.s32.totalorder %s171, 1
      %s173 = scalar_select %p172, %s171, 1
      %s174 = smul.addr %s173, 2
      %s175 = smul.addr %s174, 8
      %s176 = scalar_lea.vmem %s0, %s175
      %p177 = pneg %p49
      %p178 = pneg %p46
      %p179 = pneg %p70
      %p180 = pneg %p67
      %p181 = scmp.lt.s32.totalorder %s19, 0
      %s182 = scalar_select %p181, %s19, 0
      %s183 = smul.addr %s182, 2
      %s184 = smul.addr %s183, 8
      %s185 = scalar_lea.vmem %s2, %s184
      %p186 = pneg %p96
      %p187 = pneg %p93
      %p188 = pneg %p124
      %p189 = pneg %p121
      %s190 = sadd.s32 %s18, %s19
      %p191 = scmp.lt.s32.totalorder %s190, 1
      %s192 = scalar_select %p191, %s190, 1
      %s193 = smul.addr %s192, 2
      %s194 = smul.addr %s193, 8
      %s195 = scalar_lea.vmem %s3, %s194
      %s196 = sadd.s32 %s18, %s19
      %p197 = scmp.lt.s32.totalorder %s196, 1
      %s198 = scalar_select %p197, %s196, 1
      %s199 = smul.addr %s198, 2
      %s200 = smul.addr %s199, 8
      %s201 = scalar_lea.vmem %s0, %s200
      %s202 = sadd.s32 %s18, %s19
      %p203 = scmp.lt.s32.totalorder %s19, 0
      %s204 = scalar_select %p203, %s19, 0
      %s205 = smul.addr %s204, 2
      %s206 = smul.addr %s205, 8
      %s207 = scalar_lea.vmem %s2, %s206
      %s208 = sadd.s32 %s18, %s19
      %p209 = scmp.lt.s32.totalorder %s208, 1
      %s210 = scalar_select %p209, %s208, 1
      %s211 = smul.addr %s210, 2
      %s212 = smul.addr %s211, 8
      %s213 = scalar_lea.vmem %s3, %s212
      %s214 = sadd.s32 %s18, %s19
      %v216 = vld [vmem:[%s207] sm:$0xff]
      %v217 = vld [vmem:[%s207 + $0x8] sm:$0x1]
      %v218 = vld [vmem:[%s201] sm:$0xff]
      %v219 = vld [vmem:[%s201 + $0x8] sm:$0x1]
      %v220 = vmul.f32 %v218, 0.35355338
      %v221 = vmul.f32 %v219, 0.35355338
      %v222 = vpack.c.bf16 %v221, %v220
      %v223 = vpack.c.bf16 %v219, %v218
      %v224 = vld [vmem:[%s1] sm:$0xff]
      %v225 = vld [vmem:[%s1 + $0x8] sm:$0x1]
      %227 = vrot.lane.b32.xlu0 %v223, 96
      %v228 = vpop.permute.xlu0 %227
      %vm229 = vcmask 64512
      %v231 = vsel %vm229, %v222, 0
      %v234 = vsel %vm229, %v228, 0
      %236 = vmatprep.subr.bf16.mxu0 0
      %237 = vmatpush1.bf16.xpose.msra.mxu0 0
      %238 = vmatprep.subr.bf16.mxu0 0
      %239 = vmatpush1.bf16.xpose.msra.mxu0 0
      %240 = vmatprep.subr.bf16.mxu0 0
      %241 = vmatpush1.bf16.xpose.msra.mxu0 0
      %242 = vmatprep.subr.bf16.mxu0 0
      %243 = vmatpush1.bf16.xpose.msra.mxu0 0
      %244 = vmatprep.subr.bf16.mxu0 0
      %245 = vmatpush1.bf16.xpose.msra.mxu0 0
      %246 = vmatprep.subr.bf16.mxu0 0
      %247 = vmatpush1.bf16.xpose.msra.mxu0 0
      %248 = vmatprep.subr.bf16.mxu0 0
      %249 = vmatpush1.bf16.xpose.msra.mxu0 0
      %250 = vmatprep.subr.bf16.mxu0 0
      %251 = vmatpush1.bf16.xpose.msra.mxu0 %v234
      %252 = vmatprep.subr.bf16.mxu0 0
      %253 = vmatpush2.bf16.xpose.msra.mxu0 0
      %254 = vmatprep.subr.bf16.mxu0 0
      %255 = vmatpush2.bf16.xpose.msra.mxu0 0
      %256 = vmatprep.subr.bf16.mxu0 0
      %257 = vmatpush2.bf16.xpose.msra.mxu0 0
      %258 = vmatprep.subr.bf16.mxu0 0
      %259 = vmatpush2.bf16.xpose.msra.mxu0 0
      %260 = vmatprep.subr.bf16.mxu0 0
      %261 = vmatpush2.bf16.xpose.msra.mxu0 0
      %262 = vmatprep.subr.bf16.mxu0 0
      %263 = vmatpush2.bf16.xpose.msra.mxu0 0
      %264 = vmatprep.subr.bf16.mxu0 0
      %265 = vmatpush2.bf16.xpose.msra.mxu0 0
      %266 = vmatprep.subr.bf16.mxu0 0
      %267 = vmatpush2.bf16.xpose.msra.mxu0 0
      %268 = vmatprep.mubr.bf16.mxu0 0
      %269 = vmatmul.mubr.bf16.gmra.mxu0 %v231
      %v270 = vpop.f32.mrf.mxu0
      %v271 = vadd.f32 %v224, %v270
      %v272 = vpop.f32.mrf.mxu0
      %v273 = vpop.f32.mrf.mxu0
      %v274 = vadd.f32 %v225, %v273
      %v275 = vpop.f32.mrf.mxu0
      %276 = vdwg.mxu0
      %v277 = vadd.f32 %v271, %v216
      %v278 = vadd.f32 %v274, %v217
      %vm279 = vcmask 72704
      %v280 = vsel %vm279, %v277, -inf
      %281 = vmax.xlane.f32.xlu0 %v280
      %v282 = vpop.xlane.xlu0 %281
      %vm283 = vcmask 65536
      %v284 = vsel %vm283, %v278, -inf
      %285 = vmax.xlane.f32.xlu0 %v284
      %v286 = vpop.xlane.xlu0 %285
      %v287 = vsub.f32 %v277, %v282
      %v288 = vsub.f32 %v278, %v286
      %v289 = vmul.f32 %v287, 1.442695
      %v290 = vpow.pop %v289
      %v291 = vmul.f32 %v288, 1.442695
      %v292 = vpow.pop %v291
      %v293 = vsel %vm279, %v290, 0.0
      %294 = vadd.xlane.f32.xlu0 %v293
      %v295 = vpop.xlane.xlu0 %294
      %v296 = vsel %vm283, %v292, 0.0
      %297 = vadd.xlane.f32.xlu0 %v296
      %v298 = vpop.xlane.xlu0 %297
      %v299 = vrcp.pop %v295
      %v300 = vrcp.pop %v298
      %v301 = vmul.f32 %v290, %v299
      %v302 = vmul.f32 %v292, %v300
      %v303 = vpack.c.bf16 %v302, %v301
      %304 = vrot.lane.b32.xlu0 %v223, 64
      %v305 = vpop.permute.xlu0 %304
      %v307 = vsel %vm279, %v303, 0
      %vm309 = vcmask 1043456
      %vm310 = vcmask 1044480
      %v311 = vsel %vm309, 4294967295, 65535
      %v312 = vsel %vm310, %v311, 0
      %v314 = vand.u32 %v305, %v312
      %316 = vmatprep.subr.bf16.mxu0 0
      %317 = vmatpush1.bf16.msra.mxu0 0
      %318 = vmatprep.subr.bf16.mxu0 0
      %319 = vmatpush1.bf16.msra.mxu0 0
      %320 = vmatprep.subr.bf16.mxu0 0
      %321 = vmatpush1.bf16.msra.mxu0 0
      %322 = vmatprep.subr.bf16.mxu0 0
      %323 = vmatpush1.bf16.msra.mxu0 0
      %324 = vmatprep.subr.bf16.mxu0 0
      %325 = vmatpush1.bf16.msra.mxu0 0
      %326 = vmatprep.subr.bf16.mxu0 0
      %327 = vmatpush1.bf16.msra.mxu0 0
      %328 = vmatprep.subr.bf16.mxu0 0
      %329 = vmatpush1.bf16.msra.mxu0 0
      %330 = vmatprep.subr.bf16.mxu0 0
      %331 = vmatpush1.bf16.msra.mxu0 %v314
      %332 = vmatprep.subr.bf16.mxu0 0
      %333 = vmatpush2.bf16.msra.mxu0 0
      %334 = vmatprep.subr.bf16.mxu0 0
      %335 = vmatpush2.bf16.msra.mxu0 0
      %336 = vmatprep.subr.bf16.mxu0 0
      %337 = vmatpush2.bf16.msra.mxu0 0
      %338 = vmatprep.subr.bf16.mxu0 0
      %339 = vmatpush2.bf16.msra.mxu0 0
      %340 = vmatprep.subr.bf16.mxu0 0
      %341 = vmatpush2.bf16.msra.mxu0 0
      %342 = vmatprep.subr.bf16.mxu0 0
      %343 = vmatpush2.bf16.msra.mxu0 0
      %344 = vmatprep.subr.bf16.mxu0 0
      %345 = vmatpush2.bf16.msra.mxu0 0
      %346 = vmatprep.subr.bf16.mxu0 0
      %347 = vmatpush2.bf16.msra.mxu0 0
      %348 = vmatprep.mubr.bf16.mxu0 0
      %349 = vmatmul.mubr.bf16.gmra.mxu0 %v307
      %v350 = vpop.f32.mrf.mxu0
      %v351 = vadd.f32 0.0, %v350
      %v352 = vpop.f32.mrf.mxu0
      %v353 = vpop.f32.mrf.mxu0
      %v354 = vadd.f32 0.0, %v353
      %v355 = vpop.f32.mrf.mxu0
      %356 = vdwg.mxu0
      %v357 = vld [vmem:[%s201] sm:$0xff]
      %v358 = vld [vmem:[%s201 + $0x8] sm:$0x1]
      %v359 = vmul.f32 %v357, 0.35355338
      %v360 = vmul.f32 %v358, 0.35355338
      %v361 = vpack.c.bf16 %v360, %v359
      %v362 = vpack.c.bf16 %v358, %v357
      %s363 = scalar_lea.vmem %s1, 16
      %v364 = vld [vmem:[%s363] sm:$0xff]
      %v365 = vld [vmem:[%s363 + $0x8] sm:$0x1]
      %367 = vrot.lane.b32.xlu0 %v361, 120
      %v368 = vpop.permute.xlu0 %367
      %370 = vrot.lane.b32.xlu0 %v362, 88
      %v371 = vpop.permute.xlu0 %370
      %v373 = vsel %vm229, %v368, 0
      %v376 = vsel %vm229, %v371, 0
      %378 = vmatprep.subr.bf16.mxu0 0
      %379 = vmatpush1.bf16.xpose.msra.mxu0 0
      %380 = vmatprep.subr.bf16.mxu0 0
      %381 = vmatpush1.bf16.xpose.msra.mxu0 0
      %382 = vmatprep.subr.bf16.mxu0 0
      %383 = vmatpush1.bf16.xpose.msra.mxu0 0
      %384 = vmatprep.subr.bf16.mxu0 0
      %385 = vmatpush1.bf16.xpose.msra.mxu0 0
      %386 = vmatprep.subr.bf16.mxu0 0
      %387 = vmatpush1.bf16.xpose.msra.mxu0 0
      %388 = vmatprep.subr.bf16.mxu0 0
      %389 = vmatpush1.bf16.xpose.msra.mxu0 0
      %390 = vmatprep.subr.bf16.mxu0 0
      %391 = vmatpush1.bf16.xpose.msra.mxu0 0
      %392 = vmatprep.subr.bf16.mxu0 0
      %393 = vmatpush1.bf16.xpose.msra.mxu0 %v376
      %394 = vmatprep.subr.bf16.mxu0 0
      %395 = vmatpush2.bf16.xpose.msra.mxu0 0
      %396 = vmatprep.subr.bf16.mxu0 0
      %397 = vmatpush2.bf16.xpose.msra.mxu0 0
      %398 = vmatprep.subr.bf16.mxu0 0
      %399 = vmatpush2.bf16.xpose.msra.mxu0 0
      %400 = vmatprep.subr.bf16.mxu0 0
      %401 = vmatpush2.bf16.xpose.msra.mxu0 0
      %402 = vmatprep.subr.bf16.mxu0 0
      %403 = vmatpush2.bf16.xpose.msra.mxu0 0
      %404 = vmatprep.subr.bf16.mxu0 0
      %405 = vmatpush2.bf16.xpose.msra.mxu0 0
      %406 = vmatprep.subr.bf16.mxu0 0
      %407 = vmatpush2.bf16.xpose.msra.mxu0 0
      %408 = vmatprep.subr.bf16.mxu0 0
      %409 = vmatpush2.bf16.xpose.msra.mxu0 0
      %410 = vmatprep.mubr.bf16.mxu0 0
      %411 = vmatmul.mubr.bf16.gmra.mxu0 %v373
      %v412 = vpop.f32.mrf.mxu0
      %v413 = vadd.f32 %v364, %v412
      %v414 = vpop.f32.mrf.mxu0
      %v415 = vpop.f32.mrf.mxu0
      %v416 = vadd.f32 %v365, %v415
      %v417 = vpop.f32.mrf.mxu0
      %418 = vdwg.mxu0
      %v419 = vadd.f32 %v413, %v216
      %v420 = vadd.f32 %v416, %v217
      %v421 = vsel %vm279, %v419, -inf
      %422 = vmax.xlane.f32.xlu0 %v421
      %v423 = vpop.xlane.xlu0 %422
      %v424 = vsel %vm283, %v420, -inf
      %425 = vmax.xlane.f32.xlu0 %v424
      %v426 = vpop.xlane.xlu0 %425
      %v427 = vsub.f32 %v419, %v423
      %v428 = vsub.f32 %v420, %v426
      %v429 = vmul.f32 %v427, 1.442695
      %v430 = vpow.pop %v429
      %v431 = vmul.f32 %v428, 1.442695
      %v432 = vpow.pop %v431
      %v433 = vsel %vm279, %v430, 0.0
      %434 = vadd.xlane.f32.xlu0 %v433
      %v435 = vpop.xlane.xlu0 %434
      %v436 = vsel %vm283, %v432, 0.0
      %437 = vadd.xlane.f32.xlu0 %v436
      %v438 = vpop.xlane.xlu0 %437
      %v439 = vrcp.pop %v435
      %v440 = vrcp.pop %v438
      %v441 = vmul.f32 %v430, %v439
      %v442 = vmul.f32 %v432, %v440
      %v443 = vpack.c.bf16 %v442, %v441
      %444 = vrot.lane.b32.xlu0 %v362, 56
      %v445 = vpop.permute.xlu0 %444
      %v447 = vsel %vm279, %v443, 0
      %v450 = vand.u32 %v445, %v312
      %452 = vmatprep.subr.bf16.mxu0 0
      %453 = vmatpush1.bf16.msra.mxu0 0
      %454 = vmatprep.subr.bf16.mxu0 0
      %455 = vmatpush1.bf16.msra.mxu0 0
      %456 = vmatprep.subr.bf16.mxu0 0
      %457 = vmatpush1.bf16.msra.mxu0 0
      %458 = vmatprep.subr.bf16.mxu0 0
      %459 = vmatpush1.bf16.msra.mxu0 0
      %460 = vmatprep.subr.bf16.mxu0 0
      %461 = vmatpush1.bf16.msra.mxu0 0
      %462 = vmatprep.subr.bf16.mxu0 0
      %463 = vmatpush1.bf16.msra.mxu0 0
      %464 = vmatprep.subr.bf16.mxu0 0
      %465 = vmatpush1.bf16.msra.mxu0 0
      %466 = vmatprep.subr.bf16.mxu0 0
      %467 = vmatpush1.bf16.msra.mxu0 %v450
      %468 = vmatprep.subr.bf16.mxu0 0
      %469 = vmatpush2.bf16.msra.mxu0 0
      %470 = vmatprep.subr.bf16.mxu0 0
      %471 = vmatpush2.bf16.msra.mxu0 0
      %472 = vmatprep.subr.bf16.mxu0 0
      %473 = vmatpush2.bf16.msra.mxu0 0
      %474 = vmatprep.subr.bf16.mxu0 0
      %475 = vmatpush2.bf16.msra.mxu0 0
      %476 = vmatprep.subr.bf16.mxu0 0
      %477 = vmatpush2.bf16.msra.mxu0 0
      %478 = vmatprep.subr.bf16.mxu0 0
      %479 = vmatpush2.bf16.msra.mxu0 0
      %480 = vmatprep.subr.bf16.mxu0 0
      %481 = vmatpush2.bf16.msra.mxu0 0
      %482 = vmatprep.subr.bf16.mxu0 0
      %483 = vmatpush2.bf16.msra.mxu0 0
      %484 = vmatprep.mubr.bf16.mxu0 0
      %485 = vmatmul.mubr.bf16.gmra.mxu0 %v447
      %v486 = vpop.f32.mrf.mxu0
      %v487 = vadd.f32 0.0, %v486
      %v488 = vpop.f32.mrf.mxu0
      %v489 = vpop.f32.mrf.mxu0
      %v490 = vadd.f32 0.0, %v489
      %v491 = vpop.f32.mrf.mxu0
      %492 = vdwg.mxu0
      %v493 = vld [vmem:[%s201] sm:$0xff]
      %v494 = vld [vmem:[%s201 + $0x8] sm:$0x1]
      %v495 = vmul.f32 %v493, 0.35355338
      %v496 = vmul.f32 %v494, 0.35355338
      %v497 = vpack.c.bf16 %v496, %v495
      %v498 = vpack.c.bf16 %v494, %v493
      %s499 = scalar_lea.vmem %s1, 32
      %v500 = vld [vmem:[%s499] sm:$0xff]
      %v501 = vld [vmem:[%s499 + $0x8] sm:$0x1]
      %503 = vrot.lane.b32.xlu0 %v497, 112
      %v504 = vpop.permute.xlu0 %503
      %506 = vrot.lane.b32.xlu0 %v498, 80
      %v507 = vpop.permute.xlu0 %506
      %v509 = vsel %vm229, %v504, 0
      %v512 = vsel %vm229, %v507, 0
      %514 = vmatprep.subr.bf16.mxu0 0
      %515 = vmatpush1.bf16.xpose.msra.mxu0 0
      %516 = vmatprep.subr.bf16.mxu0 0
      %517 = vmatpush1.bf16.xpose.msra.mxu0 0
      %518 = vmatprep.subr.bf16.mxu0 0
      %519 = vmatpush1.bf16.xpose.msra.mxu0 0
      %520 = vmatprep.subr.bf16.mxu0 0
      %521 = vmatpush1.bf16.xpose.msra.mxu0 0
      %522 = vmatprep.subr.bf16.mxu0 0
      %523 = vmatpush1.bf16.xpose.msra.mxu0 0
      %524 = vmatprep.subr.bf16.mxu0 0
      %525 = vmatpush1.bf16.xpose.msra.mxu0 0
      %526 = vmatprep.subr.bf16.mxu0 0
      %527 = vmatpush1.bf16.xpose.msra.mxu0 0
      %528 = vmatprep.subr.bf16.mxu0 0
      %529 = vmatpush1.bf16.xpose.msra.mxu0 %v512
      %530 = vmatprep.subr.bf16.mxu0 0
      %531 = vmatpush2.bf16.xpose.msra.mxu0 0
      %532 = vmatprep.subr.bf16.mxu0 0
      %533 = vmatpush2.bf16.xpose.msra.mxu0 0
      %534 = vmatprep.subr.bf16.mxu0 0
      %535 = vmatpush2.bf16.xpose.msra.mxu0 0
      %536 = vmatprep.subr.bf16.mxu0 0
      %537 = vmatpush2.bf16.xpose.msra.mxu0 0
      %538 = vmatprep.subr.bf16.mxu0 0
      %539 = vmatpush2.bf16.xpose.msra.mxu0 0
      %540 = vmatprep.subr.bf16.mxu0 0
      %541 = vmatpush2.bf16.xpose.msra.mxu0 0
      %542 = vmatprep.subr.bf16.mxu0 0
      %543 = vmatpush2.bf16.xpose.msra.mxu0 0
      %544 = vmatprep.subr.bf16.mxu0 0
      %545 = vmatpush2.bf16.xpose.msra.mxu0 0
      %546 = vmatprep.mubr.bf16.mxu0 0
      %547 = vmatmul.mubr.bf16.gmra.mxu0 %v509
      %v548 = vpop.f32.mrf.mxu0
      %v549 = vadd.f32 %v500, %v548
      %v550 = vpop.f32.mrf.mxu0
      %v551 = vpop.f32.mrf.mxu0
      %v552 = vadd.f32 %v501, %v551
      %v553 = vpop.f32.mrf.mxu0
      %554 = vdwg.mxu0
      %v555 = vadd.f32 %v549, %v216
      %v556 = vadd.f32 %v552, %v217
      %v557 = vsel %vm279, %v555, -inf
      %558 = vmax.xlane.f32.xlu0 %v557
      %v559 = vpop.xlane.xlu0 %558
      %v560 = vsel %vm283, %v556, -inf
      %561 = vmax.xlane.f32.xlu0 %v560
      %v562 = vpop.xlane.xlu0 %561
      %v563 = vsub.f32 %v555, %v559
      %v564 = vsub.f32 %v556, %v562
      %v565 = vmul.f32 %v563, 1.442695
      %v566 = vpow.pop %v565
      %v567 = vmul.f32 %v564, 1.442695
      %v568 = vpow.pop %v567
      %v569 = vsel %vm279, %v566, 0.0
      %570 = vadd.xlane.f32.xlu0 %v569
      %v571 = vpop.xlane.xlu0 %570
      %v572 = vsel %vm283, %v568, 0.0
      %573 = vadd.xlane.f32.xlu0 %v572
      %v574 = vpop.xlane.xlu0 %573
      %v575 = vrcp.pop %v571
      %v576 = vrcp.pop %v574
      %v577 = vmul.f32 %v566, %v575
      %v578 = vmul.f32 %v568, %v576
      %v579 = vpack.c.bf16 %v578, %v577
      %580 = vrot.lane.b32.xlu0 %v498, 48
      %v581 = vpop.permute.xlu0 %580
      %v583 = vsel %vm279, %v579, 0
      %v586 = vand.u32 %v581, %v312
      %588 = vmatprep.subr.bf16.mxu0 0
      %589 = vmatpush1.bf16.msra.mxu0 0
      %590 = vmatprep.subr.bf16.mxu0 0
      %591 = vmatpush1.bf16.msra.mxu0 0
      %592 = vmatprep.subr.bf16.mxu0 0
      %593 = vmatpush1.bf16.msra.mxu0 0
      %594 = vmatprep.subr.bf16.mxu0 0
      %595 = vmatpush1.bf16.msra.mxu0 0
      %596 = vmatprep.subr.bf16.mxu0 0
      %597 = vmatpush1.bf16.msra.mxu0 0
      %598 = vmatprep.subr.bf16.mxu0 0
      %599 = vmatpush1.bf16.msra.mxu0 0
      %600 = vmatprep.subr.bf16.mxu0 0
      %601 = vmatpush1.bf16.msra.mxu0 0
      %602 = vmatprep.subr.bf16.mxu0 0
      %603 = vmatpush1.bf16.msra.mxu0 %v586
      %604 = vmatprep.subr.bf16.mxu0 0
      %605 = vmatpush2.bf16.msra.mxu0 0
      %606 = vmatprep.subr.bf16.mxu0 0
      %607 = vmatpush2.bf16.msra.mxu0 0
      %608 = vmatprep.subr.bf16.mxu0 0
      %609 = vmatpush2.bf16.msra.mxu0 0
      %610 = vmatprep.subr.bf16.mxu0 0
      %611 = vmatpush2.bf16.msra.mxu0 0
      %612 = vmatprep.subr.bf16.mxu0 0
      %613 = vmatpush2.bf16.msra.mxu0 0
      %614 = vmatprep.subr.bf16.mxu0 0
      %615 = vmatpush2.bf16.msra.mxu0 0
      %616 = vmatprep.subr.bf16.mxu0 0
      %617 = vmatpush2.bf16.msra.mxu0 0
      %618 = vmatprep.subr.bf16.mxu0 0
      %619 = vmatpush2.bf16.msra.mxu0 0
      %620 = vmatprep.mubr.bf16.mxu0 0
      %621 = vmatmul.mubr.bf16.gmra.mxu0 %v583
      %v622 = vpop.f32.mrf.mxu0
      %v623 = vadd.f32 0.0, %v622
      %v624 = vpop.f32.mrf.mxu0
      %v625 = vpop.f32.mrf.mxu0
      %v626 = vadd.f32 0.0, %v625
      %v627 = vpop.f32.mrf.mxu0
      %628 = vdwg.mxu0
      %v629 = vld [vmem:[%s201] sm:$0xff]
      %v630 = vld [vmem:[%s201 + $0x8] sm:$0x1]
      %v631 = vmul.f32 %v629, 0.35355338
      %v632 = vmul.f32 %v630, 0.35355338
      %v633 = vpack.c.bf16 %v632, %v631
      %v634 = vpack.c.bf16 %v630, %v629
      %s635 = scalar_lea.vmem %s1, 48
      %v636 = vld [vmem:[%s635] sm:$0xff]
      %v637 = vld [vmem:[%s635 + $0x8] sm:$0x1]
      %639 = vrot.lane.b32.xlu0 %v633, 104
      %v640 = vpop.permute.xlu0 %639
      %642 = vrot.lane.b32.xlu0 %v634, 72
      %v643 = vpop.permute.xlu0 %642
      %v645 = vsel %vm229, %v640, 0
      %v648 = vsel %vm229, %v643, 0
      %650 = vmatprep.subr.bf16.mxu0 0
      %651 = vmatpush1.bf16.xpose.msra.mxu0 0
      %652 = vmatprep.subr.bf16.mxu0 0
      %653 = vmatpush1.bf16.xpose.msra.mxu0 0
      %654 = vmatprep.subr.bf16.mxu0 0
      %655 = vmatpush1.bf16.xpose.msra.mxu0 0
      %656 = vmatprep.subr.bf16.mxu0 0
      %657 = vmatpush1.bf16.xpose.msra.mxu0 0
      %658 = vmatprep.subr.bf16.mxu0 0
      %659 = vmatpush1.bf16.xpose.msra.mxu0 0
      %660 = vmatprep.subr.bf16.mxu0 0
      %661 = vmatpush1.bf16.xpose.msra.mxu0 0
      %662 = vmatprep.subr.bf16.mxu0 0
      %663 = vmatpush1.bf16.xpose.msra.mxu0 0
      %664 = vmatprep.subr.bf16.mxu0 0
      %665 = vmatpush1.bf16.xpose.msra.mxu0 %v648
      %666 = vmatprep.subr.bf16.mxu0 0
      %667 = vmatpush2.bf16.xpose.msra.mxu0 0
      %668 = vmatprep.subr.bf16.mxu0 0
      %669 = vmatpush2.bf16.xpose.msra.mxu0 0
      %670 = vmatprep.subr.bf16.mxu0 0
      %671 = vmatpush2.bf16.xpose.msra.mxu0 0
      %672 = vmatprep.subr.bf16.mxu0 0
      %673 = vmatpush2.bf16.xpose.msra.mxu0 0
      %674 = vmatprep.subr.bf16.mxu0 0
      %675 = vmatpush2.bf16.xpose.msra.mxu0 0
      %676 = vmatprep.subr.bf16.mxu0 0
      %677 = vmatpush2.bf16.xpose.msra.mxu0 0
      %678 = vmatprep.subr.bf16.mxu0 0
      %679 = vmatpush2.bf16.xpose.msra.mxu0 0
      %680 = vmatprep.subr.bf16.mxu0 0
      %681 = vmatpush2.bf16.xpose.msra.mxu0 0
      %682 = vmatprep.mubr.bf16.mxu0 0
      %683 = vmatmul.mubr.bf16.gmra.mxu0 %v645
      %v684 = vpop.f32.mrf.mxu0
      %v685 = vadd.f32 %v636, %v684
      %v686 = vpop.f32.mrf.mxu0
      %v687 = vpop.f32.mrf.mxu0
      %v688 = vadd.f32 %v637, %v687
      %v689 = vpop.f32.mrf.mxu0
      %690 = vdwg.mxu0
      %v691 = vadd.f32 %v685, %v216
      %v692 = vadd.f32 %v688, %v217
      %v693 = vsel %vm279, %v691, -inf
      %694 = vmax.xlane.f32.xlu0 %v693
      %v695 = vpop.xlane.xlu0 %694
      %v696 = vsel %vm283, %v692, -inf
      %697 = vmax.xlane.f32.xlu0 %v696
      %v698 = vpop.xlane.xlu0 %697
      %v699 = vsub.f32 %v691, %v695
      %v700 = vsub.f32 %v692, %v698
      %v701 = vmul.f32 %v699, 1.442695
      %v702 = vpow.pop %v701
      %v703 = vmul.f32 %v700, 1.442695
      %v704 = vpow.pop %v703
      %v705 = vsel %vm279, %v702, 0.0
      %706 = vadd.xlane.f32.xlu0 %v705
      %v707 = vpop.xlane.xlu0 %706
      %v708 = vsel %vm283, %v704, 0.0
      %709 = vadd.xlane.f32.xlu0 %v708
      %v710 = vpop.xlane.xlu0 %709
      %v711 = vrcp.pop %v707
      %v712 = vrcp.pop %v710
      %v713 = vmul.f32 %v702, %v711
      %v714 = vmul.f32 %v704, %v712
      %v715 = vpack.c.bf16 %v714, %v713
      %716 = vrot.lane.b32.xlu0 %v634, 40
      %v717 = vpop.permute.xlu0 %716
      %v719 = vsel %vm279, %v715, 0
      %v722 = vand.u32 %v717, %v312
      %724 = vmatprep.subr.bf16.mxu0 0
      %725 = vmatpush1.bf16.msra.mxu0 0
      %726 = vmatprep.subr.bf16.mxu0 0
      %727 = vmatpush1.bf16.msra.mxu0 0
      %728 = vmatprep.subr.bf16.mxu0 0
      %729 = vmatpush1.bf16.msra.mxu0 0
      %730 = vmatprep.subr.bf16.mxu0 0
      %731 = vmatpush1.bf16.msra.mxu0 0
      %732 = vmatprep.subr.bf16.mxu0 0
      %733 = vmatpush1.bf16.msra.mxu0 0
      %734 = vmatprep.subr.bf16.mxu0 0
      %735 = vmatpush1.bf16.msra.mxu0 0
      %736 = vmatprep.subr.bf16.mxu0 0
      %737 = vmatpush1.bf16.msra.mxu0 0
      %738 = vmatprep.subr.bf16.mxu0 0
      %739 = vmatpush1.bf16.msra.mxu0 %v722
      %740 = vmatprep.subr.bf16.mxu0 0
      %741 = vmatpush2.bf16.msra.mxu0 0
      %742 = vmatprep.subr.bf16.mxu0 0
      %743 = vmatpush2.bf16.msra.mxu0 0
      %744 = vmatprep.subr.bf16.mxu0 0
      %745 = vmatpush2.bf16.msra.mxu0 0
      %746 = vmatprep.subr.bf16.mxu0 0
      %747 = vmatpush2.bf16.msra.mxu0 0
      %748 = vmatprep.subr.bf16.mxu0 0
      %749 = vmatpush2.bf16.msra.mxu0 0
      %750 = vmatprep.subr.bf16.mxu0 0
      %751 = vmatpush2.bf16.msra.mxu0 0
      %752 = vmatprep.subr.bf16.mxu0 0
      %753 = vmatpush2.bf16.msra.mxu0 0
      %754 = vmatprep.subr.bf16.mxu0 0
      %755 = vmatpush2.bf16.msra.mxu0 0
      %756 = vmatprep.mubr.bf16.mxu0 0
      %757 = vmatmul.mubr.bf16.gmra.mxu0 %v719
      %v758 = vpop.f32.mrf.mxu0
      %v759 = vadd.f32 0.0, %v758
      %v760 = vpop.f32.mrf.mxu0
      %v761 = vpop.f32.mrf.mxu0
      %v762 = vadd.f32 0.0, %v761
      %v763 = vpop.f32.mrf.mxu0
      %764 = vdwg.mxu0
      %767 = vrot.lane.b32.xlu0 %v487, 8
      %v768 = vpop.permute.xlu0 %767
      %769 = vrot.lane.b32.xlu0 %v490, 8
      %v770 = vpop.permute.xlu0 %769
      %775 = vrot.lane.b32.xlu0 %v623, 16
      %v776 = vpop.permute.xlu0 %775
      %777 = vrot.lane.b32.xlu0 %v626, 16
      %v778 = vpop.permute.xlu0 %777
      %783 = vrot.lane.b32.xlu0 %v759, 24
      %v784 = vpop.permute.xlu0 %783
      %785 = vrot.lane.b32.xlu0 %v762, 24
      %v786 = vpop.permute.xlu0 %785
      %v789 = vsel %vm229, %v351, %v768
      %v790 = vsel %vm229, %v354, %v770
      %vm791 = vcmask 130048
      %v792 = vsel %vm791, %v789, %v776
      %v793 = vsel %vm791, %v790, %v778
      %vm794 = vcmask 195584
      %v795 = vsel %vm794, %v792, %v784
      %v796 = vsel %vm794, %v793, %v786
      %vm797 = vcmask 261120
      %798 = vst.msk [vmem:[%s213] sm:$0xff] %vm797, %v795
      %vm799 = vcmask 253952
      %800 = vst.msk [vmem:[%s213 + $0x8] sm:$0x1] %vm799, %v796
      %s801 = sadd.s32 %s18, %s19
      %p802 = scmp.lt.s32.totalorder %s801, 1
      %s803 = scalar_select %p802, %s801, 1
      %s804 = smul.addr %s803, 2
      %s805 = smul.addr %s804, 8
      %s806 = scalar_lea.vmem %s3, %s805
      // Predicated region
      $region33: #{forward.31} parent=31 // pred_check
        %p807 = pneg %p121
      $region34: #{forward.31} parent=31 // pred_check_branch
        %809 = sbr.rel (%p807) target = $region36
      $region35: #{forward.31} parent=31 // pred_region
        %s810 = sadd.s32 %s18, %s19
      $region36: #{forward.31} parent=31 // pred_fallthru
        _
    $region32: #{forward.31} parent=5 // pred_fallthru
      _
    %p811 = scmp.le.s32.totalorder 2, %s9
    // Predicated region
    $region37: #{forward.31} parent=5 // pred_check
      %p812 = pneg %p811
    $region38: #{forward.31} parent=5 // pred_check_branch
      %814 = sbr.rel (%p812) target = $region40
    $region39: #{forward.31} parent=5 // pred_region
      %s815 = ssub.s32 %s9, 2
      // Predicated region
      $region41: #{forward.31} parent=39 // pred_check
        %p816 = pneg %p127
      $region42: #{forward.31} parent=39 // pred_check_branch
        %818 = sbr.rel (%p816) target = $region44
      $region43: #{forward.31} parent=39 // pred_region
        %s819 = sadd.s32 %s20, %s21
        %p820 = scmp.lt.s32.totalorder %s819, 1
        %s821 = scalar_select %p820, %s819, 1
        %s822 = smul.addr %s821, 2
        %s823 = smul.addr %s822, 8
        %s824 = scalar_lea.vmem %s3, %s823
      $region44: #{forward.31} parent=39 // pred_fallthru
        _
    $region40: #{forward.31} parent=5 // pred_fallthru
      _
  $region6: #{forward.31} parent=0 // loop_footer
    %s13 = sadd.s32 1, %s9
  $region7: #{forward.31} parent=0 // loop_footer_branch
    %8 = sbr.rel target = $region3
  $region8: #{forward.31} parent=0 // loop_exit
    _

// kernel: forward.38
$region0: #{forward.38}
  #allocation0 [shape = 'u32[]', space=smem, size = 0x4, offset = 0x4, fixed_abs, tag = 'smem constant byte address 0x4 - core index']
  #allocation1 [shape = 'u32[144,128]{1,0:T(1,128)}', space=vmem, size = 0x12000, scoped, tag = 'internal scratch']
  %s0 = inlined_call_operand.vmem [shape: f32[18,32], index: 0, kind: input, shape index: {}]
  %s1 = inlined_call_operand.vmem [shape: f32[1,32], index: 1, kind: input, shape index: {}]
  %s2 = inlined_call_operand.vmem [shape: f32[1,32], index: 2, kind: input, shape index: {}]
  %s3 = inlined_call_operand.vmem [shape: f32[18,32], index: 3, kind: output, shape index: {}]
  %s4 = sld [smem:[#allocation0]]
  $region22: #{forward.38} parent=0
    _
  %s6 = ssub.s32 1, %s4
  %s7 = scalar_select 0, %s6, %s4
  // Predicated region
  $region2: #{forward.38} parent=0 // pred_check
    _
  $region3: #{forward.38} parent=0 // pred_check_branch
    %9 = sbr.rel (0) target = $region5
  $region4: #{forward.38} parent=0 // pred_region
    _
  $region5: #{forward.38} parent=0 // pred_fallthru
    _
  // Predicated region
  $region6: #{forward.38} parent=0 // pred_check
    _
  $region7: #{forward.38} parent=0 // pred_check_branch
    %11 = sbr.rel (0) target = $region9
  $region8: #{forward.38} parent=0 // pred_region
    _
  $region9: #{forward.38} parent=0 // pred_fallthru
    _
  // Predicated region
  $region10: #{forward.38} parent=0 // pred_check
    _
  $region11: #{forward.38} parent=0 // pred_check_branch
    %13 = sbr.rel (0) target = $region13
  $region12: #{forward.38} parent=0 // pred_region
    _
  $region13: #{forward.38} parent=0 // pred_fallthru
    _
  %v14 = vld [vmem:[%s0] sm:$0xff]
  %v15 = vld [vmem:[%s0 + $0x8] sm:$0xff]
  %v16 = vld [vmem:[%s0 + $0x10] sm:$0x3]
  %v17 = vld [vmem:[%s1] sm:$0x1]
  %v18 = vld [vmem:[%s2] sm:$0x1]
  %vm19 = vcmask 261120
  %v20 = vsel %vm19, %v14, 0.0
  %21 = vadd.xlane.f32.xlu0 %v20
  %v22 = vpop.xlane.xlu0 %21
  %v23 = vsel %vm19, %v15, 0.0
  %24 = vadd.xlane.f32.xlu0 %v23
  %v25 = vpop.xlane.xlu0 %24
  %vm26 = vcmask 254976
  %v27 = vsel %vm26, %v16, 0.0
  %28 = vadd.xlane.f32.xlu0 %v27
  %v29 = vpop.xlane.xlu0 %28
  %v30 = vrcp.pop 32.0
  %v31 = vmul.f32 %v22, %v30
  %v32 = vmul.f32 %v25, %v30
  %v33 = vmul.f32 %v29, %v30
  %v34 = vsub.f32 %v14, %v31
  %v35 = vsub.f32 %v15, %v32
  %v36 = vsub.f32 %v16, %v33
  %v37 = vmul.f32 %v34, %v34
  %v38 = vmul.f32 %v35, %v35
  %v39 = vmul.f32 %v36, %v36
  %v40 = vsel %vm19, %v37, 0.0
  %41 = vadd.xlane.f32.xlu0 %v40
  %v42 = vpop.xlane.xlu0 %41
  %v43 = vsel %vm19, %v38, 0.0
  %44 = vadd.xlane.f32.xlu0 %v43
  %v45 = vpop.xlane.xlu0 %44
  %v46 = vsel %vm26, %v39, 0.0
  %47 = vadd.xlane.f32.xlu0 %v46
  %v48 = vpop.xlane.xlu0 %47
  %v49 = vmul.f32 %v42, %v30
  %v50 = vmul.f32 %v45, %v30
  %v51 = vmul.f32 %v48, %v30
  %v52 = vadd.f32 %v49, 1e-05
  %v53 = vadd.f32 %v50, 1e-05
  %v54 = vadd.f32 %v51, 1e-05
  %v55 = vrsqrt.pop %v52
  %v56 = vrsqrt.pop %v53
  %v57 = vrsqrt.pop %v54
  %v58 = vmul.f32 %v34, %v55
  %v59 = vmul.f32 %v35, %v56
  %v60 = vmul.f32 %v36, %v57
  %v62 = vlaneseq
  %v63 = vshrl.u32 %v62, 7
  %v64 = vsub.s32 0, %v63
  %v65 = vrot.slane %v17, %v64
  %v67 = vmul.f32 %v58, %v65
  %v68 = vmul.f32 %v59, %v65
  %v69 = vmul.f32 %v60, %v65
  %v71 = vlaneseq
  %v72 = vshrl.u32 %v71, 7
  %v73 = vsub.s32 0, %v72
  %v74 = vrot.slane %v18, %v73
  %v76 = vadd.f32 %v67, %v74
  %v77 = vadd.f32 %v68, %v74
  %v78 = vadd.f32 %v69, %v74
  %79 = vst.msk [vmem:[%s3] sm:$0xff] %vm19, %v76
  %80 = vst.msk [vmem:[%s3 + $0x8] sm:$0xff] %vm19, %v77
  %81 = vst.msk [vmem:[%s3 + $0x10] sm:$0x3] %vm26, %v78
  // Predicated region
  $region14: #{forward.38} parent=0 // pred_check
    _
  $region15: #{forward.38} parent=0 // pred_check_branch
    %83 = sbr.rel (0) target = $region17
  $region16: #{forward.38} parent=0 // pred_region
    _
  $region17: #{forward.38} parent=0 // pred_fallthru
    _
  // Predicated region
  $region18: #{forward.38} parent=0 // pred_check
    _
  $region19: #{forward.38} parent=0 // pred_check_branch
    %85 = sbr.rel (0) target = $region21
  $region20: #{forward.38} parent=0 // pred_region
    _
  $region21: #{forward.38} parent=0 // pred_fallthru
    _

// kernel: forward.33
$region0: #{forward.33}
  #allocation0 [shape = 'u32[]', space=smem, size = 0x4, offset = 0x4, fixed_abs, tag = 'smem constant byte address 0x4 - core index']
  #allocation1 [shape = 'u32[144,128]{1,0:T(1,128)}', space=vmem, size = 0x12000, scoped, tag = 'internal scratch']
  %s0 = inlined_call_operand.vmem [shape: f32[18,32], index: 0, kind: input, shape index: {}]
  %s1 = inlined_call_operand.vmem [shape: f32[1,32], index: 1, kind: input, shape index: {}]
  %s2 = inlined_call_operand.vmem [shape: f32[1,32], index: 2, kind: input, shape index: {}]
  %s3 = inlined_call_operand.vmem [shape: bf16[32,128], index: 3, kind: input, shape index: {}]
  %s4 = inlined_call_operand.vmem [shape: f32[1,128], index: 4, kind: input, shape index: {}]
  %s5 = inlined_call_operand.vmem [shape: bf16[128,32], index: 5, kind: input, shape index: {}]
  %s6 = inlined_call_operand.vmem [shape: f32[1,32], index: 6, kind: input, shape index: {}]
  %s7 = inlined_call_operand.vmem [shape: f32[18,32], index: 7, kind: output, shape index: {}]
  %s8 = sld [smem:[#allocation0]]
  $region38: #{forward.33} parent=0
    _
  %s10 = ssub.s32 1, %s8
  %s11 = scalar_select 0, %s10, %s8
  // Predicated region
  $region2: #{forward.33} parent=0 // pred_check
    _
  $region3: #{forward.33} parent=0 // pred_check_branch
    %13 = sbr.rel (0) target = $region5
  $region4: #{forward.33} parent=0 // pred_region
    _
  $region5: #{forward.33} parent=0 // pred_fallthru
    _
  // Predicated region
  $region6: #{forward.33} parent=0 // pred_check
    _
  $region7: #{forward.33} parent=0 // pred_check_branch
    %15 = sbr.rel (0) target = $region9
  $region8: #{forward.33} parent=0 // pred_region
    _
  $region9: #{forward.33} parent=0 // pred_fallthru
    _
  // Predicated region
  $region10: #{forward.33} parent=0 // pred_check
    _
  $region11: #{forward.33} parent=0 // pred_check_branch
    %17 = sbr.rel (0) target = $region13
  $region12: #{forward.33} parent=0 // pred_region
    _
  $region13: #{forward.33} parent=0 // pred_fallthru
    _
  // Predicated region
  $region14: #{forward.33} parent=0 // pred_check
    _
  $region15: #{forward.33} parent=0 // pred_check_branch
    %19 = sbr.rel (0) target = $region17
  $region16: #{forward.33} parent=0 // pred_region
    _
  $region17: #{forward.33} parent=0 // pred_fallthru
    _
  // Predicated region
  $region18: #{forward.33} parent=0 // pred_check
    _
  $region19: #{forward.33} parent=0 // pred_check_branch
    %21 = sbr.rel (0) target = $region21
  $region20: #{forward.33} parent=0 // pred_region
    _
  $region21: #{forward.33} parent=0 // pred_fallthru
    _
  // Predicated region
  $region22: #{forward.33} parent=0 // pred_check
    _
  $region23: #{forward.33} parent=0 // pred_check_branch
    %23 = sbr.rel (0) target = $region25
  $region24: #{forward.33} parent=0 // pred_region
    _
  $region25: #{forward.33} parent=0 // pred_fallthru
    _
  // Predicated region
  $region26: #{forward.33} parent=0 // pred_check
    _
  $region27: #{forward.33} parent=0 // pred_check_branch
    %25 = sbr.rel (0) target = $region29
  $region28: #{forward.33} parent=0 // pred_region
    _
  $region29: #{forward.33} parent=0 // pred_fallthru
    _
  %v27 = vld [vmem:[%s0] sm:$0xff]
  %v28 = vld [vmem:[%s0 + $0x8] sm:$0xff]
  %v29 = vld [vmem:[%s0 + $0x10] sm:$0x3]
  %v30 = vld [vmem:[%s1] sm:$0x1]
  %v31 = vld [vmem:[%s2] sm:$0x1]
  %vm32 = vcmask 261120
  %v33 = vsel %vm32, %v27, 0.0
  %34 = vadd.xlane.f32.xlu0 %v33
  %v35 = vpop.xlane.xlu0 %34
  %v36 = vsel %vm32, %v28, 0.0
  %37 = vadd.xlane.f32.xlu0 %v36
  %v38 = vpop.xlane.xlu0 %37
  %vm39 = vcmask 254976
  %v40 = vsel %vm39, %v29, 0.0
  %41 = vadd.xlane.f32.xlu0 %v40
  %v42 = vpop.xlane.xlu0 %41
  %v43 = vrcp.pop 32.0
  %v44 = vmul.f32 %v35, %v43
  %v45 = vmul.f32 %v38, %v43
  %v46 = vmul.f32 %v42, %v43
  %v47 = vsub.f32 %v27, %v44
  %v48 = vsub.f32 %v28, %v45
  %v49 = vsub.f32 %v29, %v46
  %v50 = vmul.f32 %v47, %v47
  %v51 = vmul.f32 %v48, %v48
  %v52 = vmul.f32 %v49, %v49
  %v53 = vsel %vm32, %v50, 0.0
  %54 = vadd.xlane.f32.xlu0 %v53
  %v55 = vpop.xlane.xlu0 %54
  %v56 = vsel %vm32, %v51, 0.0
  %57 = vadd.xlane.f32.xlu0 %v56
  %v58 = vpop.xlane.xlu0 %57
  %v59 = vsel %vm39, %v52, 0.0
  %60 = vadd.xlane.f32.xlu0 %v59
  %v61 = vpop.xlane.xlu0 %60
  %v62 = vmul.f32 %v55, %v43
  %v63 = vmul.f32 %v58, %v43
  %v64 = vmul.f32 %v61, %v43
  %v65 = vadd.f32 %v62, 1e-05
  %v66 = vadd.f32 %v63, 1e-05
  %v67 = vadd.f32 %v64, 1e-05
  %v68 = vrsqrt.pop %v65
  %v69 = vrsqrt.pop %v66
  %v70 = vrsqrt.pop %v67
  %v71 = vmul.f32 %v47, %v68
  %v72 = vmul.f32 %v48, %v69
  %v73 = vmul.f32 %v49, %v70
  %v75 = vlaneseq
  %v76 = vshrl.u32 %v75, 7
  %v77 = vsub.s32 0, %v76
  %v78 = vrot.slane %v30, %v77
  %v80 = vmul.f32 %v71, %v78
  %v81 = vmul.f32 %v72, %v78
  %v82 = vmul.f32 %v73, %v78
  %v84 = vlaneseq
  %v85 = vshrl.u32 %v84, 7
  %v86 = vsub.s32 0, %v85
  %v87 = vrot.slane %v31, %v86
  %v89 = vadd.f32 %v80, %v87
  %v90 = vadd.f32 %v81, %v87
  %v91 = vadd.f32 %v82, %v87
  %v92 = vpack.c.bf16 %v90, %v89
  %v93 = vpack.c.bf16 %v91, %v91
  %v94 = vld [vmem:[%s3] sm:$0xf]
  %v95 = vld [vmem:[%s3 + $0x4] sm:$0xf]
  %v96 = vld [vmem:[%s3 + $0x8] sm:$0xf]
  %v97 = vld [vmem:[%s3 + $0xc] sm:$0xf]
  %v98 = vld [vmem:[%s4] sm:$0x1]
  %v100 = vlaneseq
  %v101 = vshrl.u32 %v100, 7
  %v102 = vsub.s32 0, %v101
  %v103 = vrot.slane %v98, %v102
  %v109 = vunpack.c.l.b16 %v94
  %v110 = vunpack.c.l.b16 %v95
  %v111 = vunpack.c.l.b16 %v96
  %v112 = vunpack.c.l.b16 %v97
  %v113 = vpack.c.b16 %v110, %v109
  %v114 = vpack.c.b16 %v112, %v111
  %v118 = vsel %vm32, %v92, 0
  %v121 = vsel %vm32, %v93, 0
  %123 = vmatprep.subr.bf16.mxu0 0
  %124 = vmatpush1.bf16.msra.mxu0 0
  %125 = vmatprep.subr.bf16.mxu0 0
  %126 = vmatpush1.bf16.msra.mxu0 0
  %127 = vmatprep.subr.bf16.mxu0 0
  %128 = vmatpush1.bf16.msra.mxu0 0
  %129 = vmatprep.subr.bf16.mxu0 0
  %130 = vmatpush1.bf16.msra.mxu0 0
  %131 = vmatprep.subr.bf16.mxu0 0
  %132 = vmatpush1.bf16.msra.mxu0 0
  %133 = vmatprep.subr.bf16.mxu0 0
  %134 = vmatpush1.bf16.msra.mxu0 0
  %135 = vmatprep.subr.bf16.mxu0 0
  %136 = vmatpush1.bf16.msra.mxu0 %v114
  %137 = vmatprep.subr.bf16.mxu0 0
  %138 = vmatpush1.bf16.msra.mxu0 %v113
  %139 = vmatprep.subr.bf16.mxu0 0
  %140 = vmatpush2.bf16.msra.mxu0 0
  %141 = vmatprep.subr.bf16.mxu0 0
  %142 = vmatpush2.bf16.msra.mxu0 0
  %143 = vmatprep.subr.bf16.mxu0 0
  %144 = vmatpush2.bf16.msra.mxu0 0
  %145 = vmatprep.subr.bf16.mxu0 0
  %146 = vmatpush2.bf16.msra.mxu0 0
  %147 = vmatprep.subr.bf16.mxu0 0
  %148 = vmatpush2.bf16.msra.mxu0 0
  %149 = vmatprep.subr.bf16.mxu0 0
  %150 = vmatpush2.bf16.msra.mxu0 0
  %151 = vmatprep.subr.bf16.mxu0 0
  %152 = vmatpush2.bf16.msra.mxu0 0
  %153 = vmatprep.subr.bf16.mxu0 0
  %154 = vmatpush2.bf16.msra.mxu0 0
  %155 = vmatprep.mubr.bf16.mxu0 0
  %156 = vmatmul.mubr.bf16.gmra.mxu0 %v118
  %v157 = vpop.f32.mrf.mxu0
  %v158 = vadd.f32 %v103, %v157
  %v159 = vpop.f32.mrf.mxu0
  %v160 = vpop.f32.mrf.mxu0
  %v161 = vadd.f32 %v103, %v160
  %v162 = vpop.f32.mrf.mxu0
  %163 = vmatprep.mubr.bf16.mxu0 0
  %164 = vmatmul.mubr.bf16.gmra.mxu0 %v121
  %v165 = vpop.f32.mrf.mxu0
  %v166 = vadd.f32 %v103, %v165
  %v167 = vpop.f32.mrf.mxu0
  %v168 = vpop.f32.mrf.mxu0
  %v169 = vpop.f32.mrf.mxu0
  %170 = vdwg.mxu0
  %v171 = vmul.f32 %v158, 0.5
  %v172 = vmul.f32 %v161, 0.5
  %v173 = vmul.f32 %v166, 0.5
  %v174 = vmul.f32 %v158, 0.70710677
  %v175 = vmul.f32 %v161, 0.70710677
  %v176 = vmul.f32 %v166, 0.70710677
  %v177 = verf.f32.pop %v174
  %v178 = verf.f32.pop %v175
  %v179 = verf.f32.pop %v176
  %v180 = vadd.f32 %v177, 1.0
  %v181 = vadd.f32 %v178, 1.0
  %v182 = vadd.f32 %v179, 1.0
  %v183 = vmul.f32 %v171, %v180
  %v184 = vmul.f32 %v172, %v181
  %v185 = vmul.f32 %v173, %v182
  %v186 = vpack.c.bf16 %v184, %v183
  %v187 = vpack.c.bf16 %v185, %v185
  %v188 = vld [vmem:[%s5] sm:$0xf]
  %v189 = vld [vmem:[%s5 + $0x4] sm:$0xf]
  %v190 = vld [vmem:[%s5 + $0x8] sm:$0xf]
  %v191 = vld [vmem:[%s5 + $0xc] sm:$0xf]
  %v192 = vld [vmem:[%s5 + $0x10] sm:$0xf]
  %v193 = vld [vmem:[%s5 + $0x14] sm:$0xf]
  %v194 = vld [vmem:[%s5 + $0x18] sm:$0xf]
  %v195 = vld [vmem:[%s5 + $0x1c] sm:$0xf]
  %v196 = vld [vmem:[%s5 + $0x20] sm:$0xf]
  %v197 = vld [vmem:[%s5 + $0x24] sm:$0xf]
  %v198 = vld [vmem:[%s5 + $0x28] sm:$0xf]
  %v199 = vld [vmem:[%s5 + $0x2c] sm:$0xf]
  %v200 = vld [vmem:[%s5 + $0x30] sm:$0xf]
  %v201 = vld [vmem:[%s5 + $0x34] sm:$0xf]
  %v202 = vld [vmem:[%s5 + $0x38] sm:$0xf]
  %v203 = vld [vmem:[%s5 + $0x3c] sm:$0xf]
  %v204 = vld [vmem:[%s6] sm:$0x1]
  %v206 = vlaneseq
  %v207 = vshrl.u32 %v206, 7
  %v208 = vsub.s32 0, %v207
  %v209 = vrot.slane %v204, %v208
  %v227 = vunpack.c.l.b16 %v188
  %v228 = vunpack.c.l.b16 %v189
  %v229 = vunpack.c.l.b16 %v190
  %v230 = vunpack.c.l.b16 %v191
  %v231 = vunpack.c.l.b16 %v192
  %v232 = vunpack.c.l.b16 %v193
  %v233 = vunpack.c.l.b16 %v194
  %v234 = vunpack.c.l.b16 %v195
  %v235 = vunpack.c.l.b16 %v196
  %v236 = vunpack.c.l.b16 %v197
  %v237 = vunpack.c.l.b16 %v198
  %v238 = vunpack.c.l.b16 %v199
  %v239 = vunpack.c.l.b16 %v200
  %v240 = vunpack.c.l.b16 %v201
  %v241 = vunpack.c.l.b16 %v202
  %v242 = vunpack.c.l.b16 %v203
  %v243 = vpack.c.b16 %v228, %v227
  %v244 = vpack.c.b16 %v230, %v229
  %v245 = vpack.c.b16 %v232, %v231
  %v246 = vpack.c.b16 %v234, %v233
  %v247 = vpack.c.b16 %v236, %v235
  %v248 = vpack.c.b16 %v238, %v237
  %v249 = vpack.c.b16 %v240, %v239
  %v250 = vpack.c.b16 %v242, %v241
  %259 = vmatprep.subr.bf16.mxu0 0
  %260 = vmatpush1.bf16.msra.mxu0 %v250
  %261 = vmatprep.subr.bf16.mxu0 0
  %262 = vmatpush1.bf16.msra.mxu0 %v249
  %263 = vmatprep.subr.bf16.mxu0 0
  %264 = vmatpush1.bf16.msra.mxu0 %v248
  %265 = vmatprep.subr.bf16.mxu0 0
  %266 = vmatpush1.bf16.msra.mxu0 %v247
  %267 = vmatprep.subr.bf16.mxu0 0
  %268 = vmatpush1.bf16.msra.mxu0 %v246
  %269 = vmatprep.subr.bf16.mxu0 0
  %270 = vmatpush1.bf16.msra.mxu0 %v245
  %271 = vmatprep.subr.bf16.mxu0 0
  %272 = vmatpush1.bf16.msra.mxu0 %v244
  %273 = vmatprep.subr.bf16.mxu0 0
  %274 = vmatpush1.bf16.msra.mxu0 %v243
  %275 = vmatprep.subr.bf16.mxu0 0
  %276 = vmatpush2.bf16.msra.mxu0 0
  %277 = vmatprep.subr.bf16.mxu0 0
  %278 = vmatpush2.bf16.msra.mxu0 0
  %279 = vmatprep.subr.bf16.mxu0 0
  %280 = vmatpush2.bf16.msra.mxu0 0
  %281 = vmatprep.subr.bf16.mxu0 0
  %282 = vmatpush2.bf16.msra.mxu0 0
  %283 = vmatprep.subr.bf16.mxu0 0
  %284 = vmatpush2.bf16.msra.mxu0 0
  %285 = vmatprep.subr.bf16.mxu0 0
  %286 = vmatpush2.bf16.msra.mxu0 0
  %287 = vmatprep.subr.bf16.mxu0 0
  %288 = vmatpush2.bf16.msra.mxu0 0
  %289 = vmatprep.subr.bf16.mxu0 0
  %290 = vmatpush2.bf16.msra.mxu0 0
  %291 = vmatprep.mubr.bf16.mxu0 0
  %292 = vmatmul.mubr.bf16.gmra.mxu0 %v186
  %v293 = vpop.f32.mrf.mxu0
  %v294 = vadd.f32 %v209, %v293
  %v295 = vpop.f32.mrf.mxu0
  %v296 = vpop.f32.mrf.mxu0
  %v297 = vadd.f32 %v209, %v296
  %v298 = vpop.f32.mrf.mxu0
  %299 = vmatprep.mubr.bf16.mxu0 0
  %300 = vmatmul.mubr.bf16.gmra.mxu0 %v187
  %v301 = vpop.f32.mrf.mxu0
  %v302 = vadd.f32 %v209, %v301
  %v303 = vpop.f32.mrf.mxu0
  %v304 = vpop.f32.mrf.mxu0
  %v305 = vpop.f32.mrf.mxu0
  %306 = vdwg.mxu0
  %v307 = vadd.f32 %v27, %v294
  %v308 = vadd.f32 %v28, %v297
  %v309 = vadd.f32 %v29, %v302
  %310 = vst.msk [vmem:[%s7] sm:$0xff] %vm32, %v307
  %311 = vst.msk [vmem:[%s7 + $0x8] sm:$0xff] %vm32, %v308
  %312 = vst.msk [vmem:[%s7 + $0x10] sm:$0x3] %vm39, %v309
  // Predicated region
  $region30: #{forward.33} parent=0 // pred_check
    _
  $region31: #{forward.33} parent=0 // pred_check_branch
    %314 = sbr.rel (0) target = $region33
  $region32: #{forward.33} parent=0 // pred_region
    _
  $region33: #{forward.33} parent=0 // pred_fallthru
    _
  // Predicated region
  $region34: #{forward.33} parent=0 // pred_check
    _
  $region35: #{forward.33} parent=0 // pred_check_branch
    %316 = sbr.rel (0) target = $region37
  $region36: #{forward.33} parent=0 // pred_region
    _
  $region37: #{forward.33} parent=0 // pred_fallthru
    _

// kernel: forward.39
$region0: #{forward.39}
  #allocation0 [shape = 'u32[]', space=smem, size = 0x4, offset = 0x4, fixed_abs, tag = 'smem constant byte address 0x4 - core index']
  #allocation1 [shape = 'u32[144,128]{1,0:T(1,128)}', space=vmem, size = 0x12000, scoped, tag = 'internal scratch']
  %s0 = inlined_call_operand.vmem [shape: f32[2,32], index: 0, kind: input, shape index: {}]
  %s1 = inlined_call_operand.vmem [shape: bf16[32,18], index: 1, kind: input, shape index: {}]
  %s2 = inlined_call_operand.vmem [shape: f32[1,18], index: 2, kind: input, shape index: {}]
  %s3 = inlined_call_operand.hbm [shape: f32[2,18], index: 3, kind: output, shape index: {}]
  %s4 = sld [smem:[#allocation0]]
  $region22: #{forward.39} parent=0
    _
  %s6 = ssub.s32 1, %s4
  %s7 = scalar_select 0, %s6, %s4
  $region1: #{forward.39} parent=0
    #allocation2 [shape = 'u8[1024]{0}', space=vmem, size = 0x400, scoped, tag = 'output window, operand 0, single buffered']
    #allocation3 [shape = 's32[1]{0}', space=sflag, size = 0x4, scoped, tag = 'scoped memory for forward.39']
    %8 = vsyncpa [#allocation3], 0
    // Predicated region
    $region2: #{forward.39} parent=1 // pred_check
      _
    $region3: #{forward.39} parent=1 // pred_check_branch
      %10 = sbr.rel (0) target = $region5
    $region4: #{forward.39} parent=1 // pred_region
      _
    $region5: #{forward.39} parent=1 // pred_fallthru
      _
    // Predicated region
    $region6: #{forward.39} parent=1 // pred_check
      _
    $region7: #{forward.39} parent=1 // pred_check_branch
      %12 = sbr.rel (0) target = $region9
    $region8: #{forward.39} parent=1 // pred_region
      _
    $region9: #{forward.39} parent=1 // pred_fallthru
      _
    // Predicated region
    $region10: #{forward.39} parent=1 // pred_check
      _
    $region11: #{forward.39} parent=1 // pred_check_branch
      %14 = sbr.rel (0) target = $region13
    $region12: #{forward.39} parent=1 // pred_region
      _
    $region13: #{forward.39} parent=1 // pred_fallthru
      _
    %v16 = vld [vmem:[%s0] sm:$0x3]
    %v17 = vpack.c.bf16 %v16, %v16
    %v18 = vld [vmem:[%s1] sm:$0xf]
    %v19 = vld [vmem:[%s1 + $0x4] sm:$0xf]
    %v20 = vld [vmem:[%s1 + $0x8] sm:$0xf]
    %v21 = vld [vmem:[%s1 + $0xc] sm:$0xf]
    %v22 = vld [vmem:[%s2] sm:$0x1]
    %v24 = vlaneseq
    %v25 = vshrl.u32 %v24, 7
    %v26 = vsub.s32 0, %v25
    %v27 = vrot.slane %v22, %v26
    %v33 = vunpack.c.l.b16 %v18
    %v34 = vunpack.c.l.b16 %v19
    %v35 = vunpack.c.l.b16 %v20
    %v36 = vunpack.c.l.b16 %v21
    %v37 = vpack.c.b16 %v34, %v33
    %v38 = vpack.c.b16 %v36, %v35
    %vm41 = vcmask 261120
    %v43 = vsel %vm41, %v17, 0
    %45 = vmatprep.subr.bf16.mxu0 0
    %46 = vmatpush1.bf16.msra.mxu0 0
    %47 = vmatprep.subr.bf16.mxu0 0
    %48 = vmatpush1.bf16.msra.mxu0 0
    %49 = vmatprep.subr.bf16.mxu0 0
    %50 = vmatpush1.bf16.msra.mxu0 0
    %51 = vmatprep.subr.bf16.mxu0 0
    %52 = vmatpush1.bf16.msra.mxu0 0
    %53 = vmatprep.subr.bf16.mxu0 0
    %54 = vmatpush1.bf16.msra.mxu0 0
    %55 = vmatprep.subr.bf16.mxu0 0
    %56 = vmatpush1.bf16.msra.mxu0 0
    %57 = vmatprep.subr.bf16.mxu0 0
    %58 = vmatpush1.bf16.msra.mxu0 %v38
    %59 = vmatprep.subr.bf16.mxu0 0
    %60 = vmatpush1.bf16.msra.mxu0 %v37
    %61 = vmatprep.subr.bf16.mxu0 0
    %62 = vmatpush2.bf16.msra.mxu0 0
    %63 = vmatprep.subr.bf16.mxu0 0
    %64 = vmatpush2.bf16.msra.mxu0 0
    %65 = vmatprep.subr.bf16.mxu0 0
    %66 = vmatpush2.bf16.msra.mxu0 0
    %67 = vmatprep.subr.bf16.mxu0 0
    %68 = vmatpush2.bf16.msra.mxu0 0
    %69 = vmatprep.subr.bf16.mxu0 0
    %70 = vmatpush2.bf16.msra.mxu0 0
    %71 = vmatprep.subr.bf16.mxu0 0
    %72 = vmatpush2.bf16.msra.mxu0 0
    %73 = vmatprep.subr.bf16.mxu0 0
    %74 = vmatpush2.bf16.msra.mxu0 0
    %75 = vmatprep.subr.bf16.mxu0 0
    %76 = vmatpush2.bf16.msra.mxu0 0
    %77 = vmatprep.mubr.bf16.mxu0 0
    %78 = vmatmul.mubr.bf16.gmra.mxu0 %v43
    %v79 = vpop.f32.mrf.mxu0
    %v80 = vadd.f32 %v27, %v79
    %v81 = vpop.f32.mrf.mxu0
    %v82 = vpop.f32.mrf.mxu0
    %v83 = vpop.f32.mrf.mxu0
    %84 = vdwg.mxu0
    %vm85 = vcmask 140288
    %86 = vst.msk [vmem:[#allocation2] sm:$0x3] %vm85, %v80
    // Predicated region
    $region14: #{forward.39} parent=1 // pred_check
      _
    $region15: #{forward.39} parent=1 // pred_check_branch
      %88 = sbr.rel (0) target = $region17
    $region16: #{forward.39} parent=1 // pred_region
      %s90 = ssub.s32 32, 32
      %91 = vsyncadd [#allocation3], %s90
      %s93 = sshll.u32 [#allocation2], 4
      %s94 = int_to_ptr.vmem [resolvable:$true] %s93
      %96 = dma.vmem_to_hbm [thread:$0]  %s94, 32, %s3, [#allocation3]
    $region17: #{forward.39} parent=1 // pred_fallthru
      _
    // Predicated region
    $region18: #{forward.39} parent=1 // pred_check
      _
    $region19: #{forward.39} parent=1 // pred_check_branch
      %98 = sbr.rel (0) target = $region21
    $region20: #{forward.39} parent=1 // pred_region
      %99 = dma.done [#allocation3], 32
    $region21: #{forward.39} parent=1 // pred_fallthru
      _
    %100 = vsyncpa [#allocation3], 1

</llo_original>
